<compile_context>
chip_gen: v6e
topology: v6e:2x2x1
jax: 0.10.0
libtpu: 0.0.40
codegen_flags: <defaults>
</compile_context>

<pallas_src>
import functools
import math

import jax
import jax.numpy as jnp
from jax.experimental import pallas as pl
from jax.experimental.pallas import tpu as pltpu

# ---------------- small T5-like config ----------------
VOCAB = 128
D_MODEL = 32
N_HEADS = 4
D_KV = 8
INNER = N_HEADS * D_KV
D_FF = 64
N_LAYERS = 2
NUM_BUCKETS = 32
MAX_DISTANCE = 128
LN_EPS = 1e-6
NEG_MASK = -1e9  # finite large negative (finfo.min + bias can overflow / NaN a masked row)


# ---------------- fused Pallas kernel (one grid step = B_BLK batch elements) ----------------

def _t5_fused_kernel(h_ref, mask_ref, bias_ref,
                     ln1_ref, wqkv_ref, wo_ref, ln2_ref, wi_ref, woff_ref,
                     fln_ref, clsw_ref, clsb_ref, y_ref,
                     logits_ref, loss_ref,
                     *, b_blk, seq, inv_batch, compute_loss):
    f32 = jnp.float32
    bf16 = jnp.bfloat16
    m_rows = b_blk * seq

    x = h_ref[...].astype(f32)                       # (M, D) rows = examples x tokens

    # Layer-invariant additive attention term (position bias + padding mask): hoisted,
    # computed exactly once per kernel invocation.  g-batch ordering: g = head*B_BLK + ex.
    bias = bias_ref[...]                             # (H, S, S) f32
    addm = mask_ref[...]                             # (B_BLK, S) f32, 0 or NEG_MASK
    bpm = (bias[:, None, :, :] + addm[None, :, None, :]
           ).reshape(N_HEADS * b_blk, seq, seq)      # (H*B_BLK, S, S)

    def rmsnorm(v, w_row):
        # T5LayerNorm: no mean subtraction, no bias; stays f32 on the VPU
        var = jnp.mean(v * v, axis=-1, keepdims=True)
        return v * jax.lax.rsqrt(var + LN_EPS) * w_row

    def to_batched_heads(t2d):
        # (M, INNER) -> (H*B_BLK, S, D_KV): 8-lane head slices, sublane-split reshapes on
        # an 8-row tile boundary, concat along the untiled leading dim.  Done once per
        # q/k/v per layer (the relayout is not repeated inside per-head loops).
        parts = [t2d[:, hd * D_KV:(hd + 1) * D_KV].reshape(b_blk, seq, D_KV)
                 for hd in range(N_HEADS)]
        return jnp.concatenate(parts, axis=0)

    for l in range(N_LAYERS):
        # ---- self-attention: RMSNorm -> fused QKV matmul -> batched attention -> out-proj -> residual
        normed = rmsnorm(x, ln1_ref[l])                                     # (M, D)
        qkv = jnp.dot(normed.astype(bf16), wqkv_ref[l],
                      preferred_element_type=f32)                           # (M, 3*INNER)

        q_g = to_batched_heads(qkv[:, 0:INNER]).astype(bf16)
        k_g = to_batched_heads(qkv[:, INNER:2 * INNER]).astype(bf16)
        v_g = to_batched_heads(qkv[:, 2 * INNER:3 * INNER]).astype(bf16)

        # NOTE: T5 attention does NOT scale scores by 1/sqrt(d_head)
        scores = jnp.einsum('gqd,gkd->gqk', q_g, k_g,
                            preferred_element_type=f32)                     # (H*B_BLK, S, S)
        scores = scores + bpm
        scores = scores - jnp.max(scores, axis=-1, keepdims=True)
        p = jnp.exp(scores)
        p = p * pl.reciprocal(jnp.sum(p, axis=-1, keepdims=True), approx=True)   # EUP
        ctx = jnp.einsum('gqk,gkd->gqd', p.astype(bf16), v_g,
                         preferred_element_type=f32)                        # (H*B_BLK, S, Dkv)

        # merge heads back onto lanes, then ONE (M,INNER)@(INNER,D) out-projection matmul
        ctx2d = jnp.concatenate(
            [ctx[hd * b_blk:(hd + 1) * b_blk].reshape(m_rows, D_KV)
             for hd in range(N_HEADS)], axis=-1)                            # (M, INNER)
        attn = jnp.dot(ctx2d.astype(bf16), wo_ref[l], preferred_element_type=f32)
        x = x + attn

        # ---- feed-forward block: RMSNorm -> wi -> ReLU -> wo -> residual
        normed2 = rmsnorm(x, ln2_ref[l])
        mid = jnp.dot(normed2.astype(bf16), wi_ref[l], preferred_element_type=f32)
        mid = jnp.maximum(mid, 0.0)
        ff = jnp.dot(mid.astype(bf16), woff_ref[l], preferred_element_type=f32)
        x = x + ff

    # final encoder RMSNorm
    x = rmsnorm(x, fln_ref[...])

    # classifier on token 0 of every example in the block: VPU reduction, no N=1 MXU pass
    cls_h = x.reshape(b_blk, seq, D_MODEL)[:, 0, :]                          # (B_BLK, D)
    logit = jnp.sum(cls_h * clsw_ref[...], axis=-1, keepdims=True) + clsb_ref[...]  # (B_BLK, 1)
    logits_ref[...] = logit

    if compute_loss:
        # BCEWithLogitsLoss (mean reduction) — per-example contribution, stable form
        y = y_ref[...]                                                       # (B_BLK, 1)
        per = jnp.maximum(logit, 0.0) - logit * y + jnp.log1p(jnp.exp(-jnp.abs(logit)))
        loss_ref[...] = per * inv_batch
    else:
        loss_ref[...] = jnp.zeros_like(logit)


# ---------------- glue: relative position bias, params, forward ----------------

def _relative_position_bucket(relative_position, num_buckets=NUM_BUCKETS,
                              max_distance=MAX_DISTANCE):
    # bidirectional (encoder) bucketing, matching HF T5Attention._relative_position_bucket
    num_buckets = num_buckets // 2
    relative_buckets = (relative_position > 0).astype(jnp.int32) * num_buckets
    relative_position = jnp.abs(relative_position)
    max_exact = num_buckets // 2
    is_small = relative_position < max_exact
    rp = jnp.maximum(relative_position, 1).astype(jnp.float32)
    rel_if_large = max_exact + (
        jnp.log(rp / max_exact) / math.log(max_distance / max_exact)
        * (num_buckets - max_exact)
    ).astype(jnp.int32)
    rel_if_large = jnp.minimum(rel_if_large, num_buckets - 1)
    relative_buckets = relative_buckets + jnp.where(is_small, relative_position, rel_if_large)
    return relative_buckets


def compute_position_bias(rel_bias_table, seq_len):
    ctx = jnp.arange(seq_len)[:, None]
    mem = jnp.arange(seq_len)[None, :]
    buckets = _relative_position_bucket(mem - ctx)          # (S, S)
    values = jnp.take(rel_bias_table, buckets, axis=0)      # (S, S, H)
    return jnp.transpose(values, (2, 0, 1))                 # (H, S, S)


def init_params(key):
    keys = jax.random.split(key, 4 + N_LAYERS)

    def nrm(k, shape, std=0.02):
        return jax.random.normal(k, shape, jnp.float32) * std

    params = {
        'shared_embedding': nrm(keys[0], (VOCAB, D_MODEL)),
        'rel_attn_bias': nrm(keys[1], (NUM_BUCKETS, N_HEADS)),
        'final_ln': jnp.ones((D_MODEL,), jnp.float32),
        'cls_w': nrm(keys[2], (D_MODEL, 1)),
        'cls_b': jnp.zeros((1,), jnp.float32),
        'layers': [],
    }
    for l in range(N_LAYERS):
        lk = jax.random.split(keys[3 + l], 6)
        params['layers'].append({
            'ln1': jnp.ones((D_MODEL,), jnp.float32),
            'wq': nrm(lk[0], (D_MODEL, INNER)),
            'wk': nrm(lk[1], (D_MODEL, INNER)),
            'wv': nrm(lk[2], (D_MODEL, INNER)),
            'wo': nrm(lk[3], (INNER, D_MODEL)),
            'ln2': jnp.ones((D_MODEL,), jnp.float32),
            'wi': nrm(lk[4], (D_MODEL, D_FF)),
            'wo_ff': nrm(lk[5], (D_FF, D_MODEL)),
        })
    return params


def t5_binary_classification_forward(params, input_ids, attention_mask=None, labels=None):
    B, S = input_ids.shape
    if attention_mask is None:
        attention_mask = jnp.ones((B, S), jnp.float32)

    # --- batch blocking: fold examples into the matmul M dimension (target ~128 rows),
    #     clipped to a divisor of B so the grid tiles exactly.
    b_blk = min(B, max(1, 128 // S))
    while B % b_blk:
        b_blk -= 1
    num_blocks = B // b_blk

    # glue that stays in JAX: embedding gather, bucket-table build, weight packing
    h = jnp.take(params['shared_embedding'], input_ids, axis=0).reshape(B * S, D_MODEL)
    addmask = (1.0 - attention_mask.astype(jnp.float32)) * NEG_MASK        # (B, S)
    pos_bias = compute_position_bias(params['rel_attn_bias'], S)           # (H, S, S)

    layers = params['layers']
    ln1_s = jnp.stack([l['ln1'] for l in layers]).reshape(N_LAYERS, 1, D_MODEL)
    ln2_s = jnp.stack([l['ln2'] for l in layers]).reshape(N_LAYERS, 1, D_MODEL)
    wqkv_s = jnp.stack([jnp.concatenate([l['wq'], l['wk'], l['wv']], axis=1)
                        for l in layers]).astype(jnp.bfloat16)             # (L, D, 3*INNER)
    wo_s = jnp.stack([l['wo'] for l in layers]).astype(jnp.bfloat16)       # (L, INNER, D) bf16 (pre-cast)
    wi_s = jnp.stack([l['wi'] for l in layers]).astype(jnp.bfloat16)       # (L, D, F)
    woff_s = jnp.stack([l['wo_ff'] for l in layers]).astype(jnp.bfloat16)  # (L, F, D)
    fln = params['final_ln'].reshape(1, D_MODEL)
    clsw = params['cls_w'].T                                               # (1, D)
    clsb = params['cls_b'].reshape(1, 1)
    compute_loss = labels is not None
    y = (labels.astype(jnp.float32).reshape(B, 1) if compute_loss
         else jnp.zeros((B, 1), jnp.float32))

    def full_spec(shape):
        n = len(shape)
        return pl.BlockSpec(shape, lambda b, _n=n: (0,) * _n)

    logits_out, loss_parts = pl.pallas_call(
        functools.partial(_t5_fused_kernel, b_blk=b_blk, seq=S,
                          inv_batch=1.0 / B, compute_loss=compute_loss),
        out_shape=(jax.ShapeDtypeStruct((B, 1), jnp.float32),
                   jax.ShapeDtypeStruct((B, 1), jnp.float32)),
        grid=(num_blocks,),
        in_specs=[
            pl.BlockSpec((b_blk * S, D_MODEL), lambda b: (b, 0)),   # embedded tokens (row-batched)
            pl.BlockSpec((b_blk, S), lambda b: (b, 0)),             # additive attention mask
            full_spec((N_HEADS, S, S)),                             # relative position bias
            full_spec((N_LAYERS, 1, D_MODEL)),                      # ln1 (stacked)
            full_spec((N_LAYERS, D_MODEL, 3 * INNER)),              # fused QKV weights (bf16)
            full_spec((N_LAYERS, INNER, D_MODEL)),                  # attention out-proj (bf16)
            full_spec((N_LAYERS, 1, D_MODEL)),                      # ln2 (stacked)
            full_spec((N_LAYERS, D_MODEL, D_FF)),                   # FFN wi (bf16)
            full_spec((N_LAYERS, D_FF, D_MODEL)),                   # FFN wo (bf16)
            full_spec((1, D_MODEL)),                                # final layer norm
            full_spec((1, D_MODEL)),                                # classifier weight (row)
            full_spec((1, 1)),                                      # classifier bias
            pl.BlockSpec((b_blk, 1), lambda b: (b, 0)),             # labels
        ],
        out_specs=(pl.BlockSpec((b_blk, 1), lambda b: (b, 0)),      # logits
                   pl.BlockSpec((b_blk, 1), lambda b: (b, 0))),     # per-example loss part
        compiler_params=pltpu.CompilerParams(
            dimension_semantics=("parallel",)),                     # split blocks over TCs
    )(h, addmask, pos_bias, ln1_s, wqkv_s, wo_s, ln2_s, wi_s, woff_s,
      fln, clsw, clsb, y)

    logits = logits_out.reshape(B)
    loss = jnp.sum(loss_parts) if compute_loss else None
    return {'logits': logits, 'loss': loss}


if __name__ == "__main__":
    key = jax.random.PRNGKey(0)
    pkey, ikey = jax.random.split(key)
    params = init_params(pkey)

    B, S = 2, 8
    input_ids = jax.random.randint(ikey, (B, S), 0, VOCAB, dtype=jnp.int32)
    attention_mask = jnp.ones((B, S), jnp.float32).at[1, 6:].set(0.0)  # second seq padded
    labels = jnp.array([0.0, 1.0], jnp.float32)

    out = t5_binary_classification_forward(params, input_ids, attention_mask, labels)
    logits = jax.block_until_ready(out['logits'])
    loss = jax.block_until_ready(out['loss'])
    assert logits.shape == (B,) and loss.shape == ()
    assert bool(jnp.all(jnp.isfinite(logits))) and bool(jnp.isfinite(loss))
    print("KERNEL_OK")
</pallas_src>

<mosaic_0001>
module attributes {stable_mosaic.version = 11 : i64} {
  func.func @_t5_fused_kernel(%arg0: i32, %arg1: memref<16x32xf32, #tpu.memory_space<vmem>>, %arg2: memref<2x8xf32, #tpu.memory_space<vmem>>, %arg3: memref<4x8x8xf32, #tpu.memory_space<vmem>>, %arg4: memref<2x1x32xf32, #tpu.memory_space<vmem>>, %arg5: memref<2x32x96xbf16, #tpu.memory_space<vmem>>, %arg6: memref<2x32x32xbf16, #tpu.memory_space<vmem>>, %arg7: memref<2x1x32xf32, #tpu.memory_space<vmem>>, %arg8: memref<2x32x64xbf16, #tpu.memory_space<vmem>>, %arg9: memref<2x64x32xbf16, #tpu.memory_space<vmem>>, %arg10: memref<1x32xf32, #tpu.memory_space<vmem>>, %arg11: memref<1x32xf32, #tpu.memory_space<vmem>>, %arg12: memref<1x1xf32, #tpu.memory_space<vmem>>, %arg13: memref<2x1xf32, #tpu.memory_space<vmem>>, %arg14: memref<2x1xf32, #tpu.memory_space<vmem>>, %arg15: memref<2x1xf32, #tpu.memory_space<vmem>>) attributes {dimension_semantics = [#tpu.dimension_semantics<parallel>], iteration_bounds = array<i64: 1>, scalar_prefetch = 0 : i64, scratch_operands = 0 : i64, tpu.core_type = #tpu.core_type<tc>, window_params = [{transform_indices = @transform_0, window_bounds = array<i64: 16, 32>}, {transform_indices = @transform_1, window_bounds = array<i64: 2, 8>}, {pipeline_mode = #tpu.pipeline_mode<synchronous>, transform_indices = @transform_2, window_bounds = array<i64: 4, 8, 8>}, {pipeline_mode = #tpu.pipeline_mode<synchronous>, transform_indices = @transform_3, window_bounds = array<i64: 2, 1, 32>}, {pipeline_mode = #tpu.pipeline_mode<synchronous>, transform_indices = @transform_4, window_bounds = array<i64: 2, 32, 96>}, {pipeline_mode = #tpu.pipeline_mode<synchronous>, transform_indices = @transform_5, window_bounds = array<i64: 2, 32, 32>}, {pipeline_mode = #tpu.pipeline_mode<synchronous>, transform_indices = @transform_6, window_bounds = array<i64: 2, 1, 32>}, {pipeline_mode = #tpu.pipeline_mode<synchronous>, transform_indices = @transform_7, window_bounds = array<i64: 2, 32, 64>}, {pipeline_mode = #tpu.pipeline_mode<synchronous>, transform_indices = @transform_8, window_bounds = array<i64: 2, 64, 32>}, {pipeline_mode = #tpu.pipeline_mode<synchronous>, transform_indices = @transform_9, window_bounds = array<i64: 1, 32>}, {pipeline_mode = #tpu.pipeline_mode<synchronous>, transform_indices = @transform_10, window_bounds = array<i64: 1, 32>}, {pipeline_mode = #tpu.pipeline_mode<synchronous>, transform_indices = @transform_11, window_bounds = array<i64: 1, 1>}, {transform_indices = @transform_12, window_bounds = array<i64: 2, 1>}, {transform_indices = @transform_13, window_bounds = array<i64: 2, 1>}, {transform_indices = @transform_14, window_bounds = array<i64: 2, 1>}]} {
    %c0 = arith.constant 0 : index
    %c0_0 = arith.constant 0 : index
    %0 = vector.load %arg1[%c0, %c0_0] : memref<16x32xf32, #tpu.memory_space<vmem>>, vector<16x32xf32>
    %c0_1 = arith.constant 0 : index
    %c0_2 = arith.constant 0 : index
    %c0_3 = arith.constant 0 : index
    %1 = vector.load %arg3[%c0_1, %c0_2, %c0_3] : memref<4x8x8xf32, #tpu.memory_space<vmem>>, vector<4x8x8xf32>
    %c0_4 = arith.constant 0 : index
    %c0_5 = arith.constant 0 : index
    %2 = vector.load %arg2[%c0_4, %c0_5] : memref<2x8xf32, #tpu.memory_space<vmem>>, vector<2x8xf32>
    %3 = vector.shape_cast %1 : vector<4x8x8xf32> to vector<4x1x8x8xf32>
    %4 = vector.shape_cast %2 : vector<2x8xf32> to vector<1x2x1x8xf32>
    %5 = vector.broadcast %3 : vector<4x1x8x8xf32> to vector<4x2x8x8xf32>
    %6 = vector.broadcast %4 : vector<1x2x1x8xf32> to vector<4x2x8x8xf32>
    %7 = arith.addf %5, %6 : vector<4x2x8x8xf32>
    %8 = vector.shape_cast %7 : vector<4x2x8x8xf32> to vector<8x8x8xf32>
    %c0_6 = arith.constant 0 : index
    %c0_7 = arith.constant 0 : index
    %c0_8 = arith.constant 0 : index
    %9 = vector.load %arg4[%c0_6, %c0_7, %c0_8] : memref<2x1x32xf32, #tpu.memory_space<vmem>>, vector<1x1x32xf32>
    %10 = vector.shape_cast %9 : vector<1x1x32xf32> to vector<1x32xf32>
    %11 = arith.mulf %0, %0 : vector<16x32xf32>
    %cst = arith.constant dense<0.000000e+00> : vector<16xf32>
    %12 = vector.multi_reduction <add>, %11, %cst [1] : vector<16x32xf32> to vector<16xf32>
    %13 = vector.shape_cast %12 : vector<16xf32> to vector<16x1xf32>
    %cst_9 = arith.constant 3.200000e+01 : f32
    %14 = vector.broadcast %cst_9 : f32 to vector<16x1xf32>
    %15 = arith.divf %13, %14 : vector<16x1xf32>
    %cst_10 = arith.constant 9.99999997E-7 : f32
    %16 = vector.broadcast %cst_10 : f32 to vector<16x1xf32>
    %17 = arith.addf %15, %16 : vector<16x1xf32>
    %18 = math.rsqrt %17 : vector<16x1xf32>
    %19 = vector.broadcast %18 : vector<16x1xf32> to vector<16x32xf32>
    %20 = arith.mulf %0, %19 : vector<16x32xf32>
    %21 = vector.broadcast %10 : vector<1x32xf32> to vector<16x32xf32>
    %22 = arith.mulf %20, %21 : vector<16x32xf32>
    %23 = arith.truncf %22 : vector<16x32xf32> to vector<16x32xbf16>
    %c0_11 = arith.constant 0 : index
    %c0_12 = arith.constant 0 : index
    %c0_13 = arith.constant 0 : index
    %24 = vector.load %arg5[%c0_11, %c0_12, %c0_13] : memref<2x32x96xbf16, #tpu.memory_space<vmem>>, vector<1x32x96xbf16>
    %25 = vector.shape_cast %24 : vector<1x32x96xbf16> to vector<32x96xbf16>
    %cst_14 = arith.constant dense<0.000000e+00> : vector<16x96xf32>
    %26 = tpu.matmul %23, %25, %cst_14 {dimension_numbers = #tpu.dot_dimension_numbers<[1], [0], [0], [1], [0, 0, 1, 1], [], []>} : vector<16x32xbf16>, vector<32x96xbf16>, vector<16x96xf32> -> vector<16x96xf32>
    %27 = vector.extract_strided_slice %26 {offsets = [0, 0], sizes = [16, 32], strides = [1, 1]} : vector<16x96xf32> to vector<16x32xf32>
    %28 = vector.extract_strided_slice %27 {offsets = [0, 0], sizes = [16, 8], strides = [1, 1]} : vector<16x32xf32> to vector<16x8xf32>
    %29 = vector.shape_cast %28 : vector<16x8xf32> to vector<2x8x8xf32>
    %30 = vector.extract_strided_slice %27 {offsets = [0, 8], sizes = [16, 8], strides = [1, 1]} : vector<16x32xf32> to vector<16x8xf32>
    %31 = vector.shape_cast %30 : vector<16x8xf32> to vector<2x8x8xf32>
    %32 = vector.extract_strided_slice %27 {offsets = [0, 16], sizes = [16, 8], strides = [1, 1]} : vector<16x32xf32> to vector<16x8xf32>
    %33 = vector.shape_cast %32 : vector<16x8xf32> to vector<2x8x8xf32>
    %34 = vector.extract_strided_slice %27 {offsets = [0, 24], sizes = [16, 8], strides = [1, 1]} : vector<16x32xf32> to vector<16x8xf32>
    %35 = vector.shape_cast %34 : vector<16x8xf32> to vector<2x8x8xf32>
    %36 = tpu.concatenate %29, %31, %33, %35 in 0 : vector<2x8x8xf32>, vector<2x8x8xf32>, vector<2x8x8xf32>, vector<2x8x8xf32> -> vector<8x8x8xf32>
    %37 = arith.truncf %36 : vector<8x8x8xf32> to vector<8x8x8xbf16>
    %38 = vector.extract_strided_slice %26 {offsets = [0, 32], sizes = [16, 32], strides = [1, 1]} : vector<16x96xf32> to vector<16x32xf32>
    %39 = vector.extract_strided_slice %38 {offsets = [0, 0], sizes = [16, 8], strides = [1, 1]} : vector<16x32xf32> to vector<16x8xf32>
    %40 = vector.shape_cast %39 : vector<16x8xf32> to vector<2x8x8xf32>
    %41 = vector.extract_strided_slice %38 {offsets = [0, 8], sizes = [16, 8], strides = [1, 1]} : vector<16x32xf32> to vector<16x8xf32>
    %42 = vector.shape_cast %41 : vector<16x8xf32> to vector<2x8x8xf32>
    %43 = vector.extract_strided_slice %38 {offsets = [0, 16], sizes = [16, 8], strides = [1, 1]} : vector<16x32xf32> to vector<16x8xf32>
    %44 = vector.shape_cast %43 : vector<16x8xf32> to vector<2x8x8xf32>
    %45 = vector.extract_strided_slice %38 {offsets = [0, 24], sizes = [16, 8], strides = [1, 1]} : vector<16x32xf32> to vector<16x8xf32>
    %46 = vector.shape_cast %45 : vector<16x8xf32> to vector<2x8x8xf32>
    %47 = tpu.concatenate %40, %42, %44, %46 in 0 : vector<2x8x8xf32>, vector<2x8x8xf32>, vector<2x8x8xf32>, vector<2x8x8xf32> -> vector<8x8x8xf32>
    %48 = arith.truncf %47 : vector<8x8x8xf32> to vector<8x8x8xbf16>
    %49 = vector.extract_strided_slice %26 {offsets = [0, 64], sizes = [16, 32], strides = [1, 1]} : vector<16x96xf32> to vector<16x32xf32>
    %50 = vector.extract_strided_slice %49 {offsets = [0, 0], sizes = [16, 8], strides = [1, 1]} : vector<16x32xf32> to vector<16x8xf32>
    %51 = vector.shape_cast %50 : vector<16x8xf32> to vector<2x8x8xf32>
    %52 = vector.extract_strided_slice %49 {offsets = [0, 8], sizes = [16, 8], strides = [1, 1]} : vector<16x32xf32> to vector<16x8xf32>
    %53 = vector.shape_cast %52 : vector<16x8xf32> to vector<2x8x8xf32>
    %54 = vector.extract_strided_slice %49 {offsets = [0, 16], sizes = [16, 8], strides = [1, 1]} : vector<16x32xf32> to vector<16x8xf32>
    %55 = vector.shape_cast %54 : vector<16x8xf32> to vector<2x8x8xf32>
    %56 = vector.extract_strided_slice %49 {offsets = [0, 24], sizes = [16, 8], strides = [1, 1]} : vector<16x32xf32> to vector<16x8xf32>
    %57 = vector.shape_cast %56 : vector<16x8xf32> to vector<2x8x8xf32>
    %58 = tpu.concatenate %51, %53, %55, %57 in 0 : vector<2x8x8xf32>, vector<2x8x8xf32>, vector<2x8x8xf32>, vector<2x8x8xf32> -> vector<8x8x8xf32>
    %59 = arith.truncf %58 : vector<8x8x8xf32> to vector<8x8x8xbf16>
    "tpu.trace_start"() <{level = 10 : i32, message = "gqd,gkd->gqk"}> : () -> ()
    %cst_15 = arith.constant dense<0.000000e+00> : vector<8x8x8xf32>
    %60 = tpu.matmul %37, %48, %cst_15 {dimension_numbers = #tpu.dot_dimension_numbers<[2], [2], [1], [1], [0, 0, 0, 1, 1, 1], [0], [0]>} : vector<8x8x8xbf16>, vector<8x8x8xbf16>, vector<8x8x8xf32> -> vector<8x8x8xf32>
    "tpu.trace_stop"() : () -> ()
    %61 = arith.addf %60, %8 : vector<8x8x8xf32>
    %cst_16 = arith.constant dense<0xFF800000> : vector<8x8xf32>
    %62 = vector.multi_reduction <maximumf>, %61, %cst_16 [2] : vector<8x8x8xf32> to vector<8x8xf32>
    %63 = vector.shape_cast %62 : vector<8x8xf32> to vector<8x8x1xf32>
    %64 = vector.broadcast %63 : vector<8x8x1xf32> to vector<8x8x8xf32>
    %65 = arith.subf %61, %64 : vector<8x8x8xf32>
    %66 = math.exp %65 : vector<8x8x8xf32>
    %cst_17 = arith.constant dense<0.000000e+00> : vector<8x8xf32>
    %67 = vector.multi_reduction <add>, %66, %cst_17 [2] : vector<8x8x8xf32> to vector<8x8xf32>
    %68 = vector.shape_cast %67 : vector<8x8xf32> to vector<8x8x1xf32>
    %69 = tpu.reciprocal %68 {approx = true} : vector<8x8x1xf32> -> vector<8x8x1xf32>
    %70 = vector.broadcast %69 : vector<8x8x1xf32> to vector<8x8x8xf32>
    %71 = arith.mulf %66, %70 : vector<8x8x8xf32>
    %72 = arith.truncf %71 : vector<8x8x8xf32> to vector<8x8x8xbf16>
    "tpu.trace_start"() <{level = 10 : i32, message = "gqk,gkd->gqd"}> : () -> ()
    %cst_18 = arith.constant dense<0.000000e+00> : vector<8x8x8xf32>
    %73 = tpu.matmul %72, %59, %cst_18 {dimension_numbers = #tpu.dot_dimension_numbers<[2], [1], [1], [2], [0, 0, 0, 1, 1, 2], [0], [0]>} : vector<8x8x8xbf16>, vector<8x8x8xbf16>, vector<8x8x8xf32> -> vector<8x8x8xf32>
    "tpu.trace_stop"() : () -> ()
    %74 = vector.extract_strided_slice %73 {offsets = [0, 0, 0], sizes = [2, 8, 8], strides = [1, 1, 1]} : vector<8x8x8xf32> to vector<2x8x8xf32>
    %75 = vector.shape_cast %74 : vector<2x8x8xf32> to vector<16x8xf32>
    %76 = vector.extract_strided_slice %73 {offsets = [2, 0, 0], sizes = [2, 8, 8], strides = [1, 1, 1]} : vector<8x8x8xf32> to vector<2x8x8xf32>
    %77 = vector.shape_cast %76 : vector<2x8x8xf32> to vector<16x8xf32>
    %78 = vector.extract_strided_slice %73 {offsets = [4, 0, 0], sizes = [2, 8, 8], strides = [1, 1, 1]} : vector<8x8x8xf32> to vector<2x8x8xf32>
    %79 = vector.shape_cast %78 : vector<2x8x8xf32> to vector<16x8xf32>
    %80 = vector.extract_strided_slice %73 {offsets = [6, 0, 0], sizes = [2, 8, 8], strides = [1, 1, 1]} : vector<8x8x8xf32> to vector<2x8x8xf32>
    %81 = vector.shape_cast %80 : vector<2x8x8xf32> to vector<16x8xf32>
    %82 = tpu.concatenate %75, %77, %79, %81 in 1 : vector<16x8xf32>, vector<16x8xf32>, vector<16x8xf32>, vector<16x8xf32> -> vector<16x32xf32>
    %83 = arith.truncf %82 : vector<16x32xf32> to vector<16x32xbf16>
    %c0_19 = arith.constant 0 : index
    %c0_20 = arith.constant 0 : index
    %c0_21 = arith.constant 0 : index
    %84 = vector.load %arg6[%c0_19, %c0_20, %c0_21] : memref<2x32x32xbf16, #tpu.memory_space<vmem>>, vector<1x32x32xbf16>
    %85 = vector.shape_cast %84 : vector<1x32x32xbf16> to vector<32x32xbf16>
    %cst_22 = arith.constant dense<0.000000e+00> : vector<16x32xf32>
    %86 = tpu.matmul %83, %85, %cst_22 {dimension_numbers = #tpu.dot_dimension_numbers<[1], [0], [0], [1], [0, 0, 1, 1], [], []>} : vector<16x32xbf16>, vector<32x32xbf16>, vector<16x32xf32> -> vector<16x32xf32>
    %87 = arith.addf %0, %86 : vector<16x32xf32>
    %c0_23 = arith.constant 0 : index
    %c0_24 = arith.constant 0 : index
    %c0_25 = arith.constant 0 : index
    %88 = vector.load %arg7[%c0_23, %c0_24, %c0_25] : memref<2x1x32xf32, #tpu.memory_space<vmem>>, vector<1x1x32xf32>
    %89 = vector.shape_cast %88 : vector<1x1x32xf32> to vector<1x32xf32>
    %90 = arith.mulf %87, %87 : vector<16x32xf32>
    %cst_26 = arith.constant dense<0.000000e+00> : vector<16xf32>
    %91 = vector.multi_reduction <add>, %90, %cst_26 [1] : vector<16x32xf32> to vector<16xf32>
    %92 = vector.shape_cast %91 : vector<16xf32> to vector<16x1xf32>
    %cst_27 = arith.constant 3.200000e+01 : f32
    %93 = vector.broadcast %cst_27 : f32 to vector<16x1xf32>
    %94 = arith.divf %92, %93 : vector<16x1xf32>
    %cst_28 = arith.constant 9.99999997E-7 : f32
    %95 = vector.broadcast %cst_28 : f32 to vector<16x1xf32>
    %96 = arith.addf %94, %95 : vector<16x1xf32>
    %97 = math.rsqrt %96 : vector<16x1xf32>
    %98 = vector.broadcast %97 : vector<16x1xf32> to vector<16x32xf32>
    %99 = arith.mulf %87, %98 : vector<16x32xf32>
    %100 = vector.broadcast %89 : vector<1x32xf32> to vector<16x32xf32>
    %101 = arith.mulf %99, %100 : vector<16x32xf32>
    %102 = arith.truncf %101 : vector<16x32xf32> to vector<16x32xbf16>
    %c0_29 = arith.constant 0 : index
    %c0_30 = arith.constant 0 : index
    %c0_31 = arith.constant 0 : index
    %103 = vector.load %arg8[%c0_29, %c0_30, %c0_31] : memref<2x32x64xbf16, #tpu.memory_space<vmem>>, vector<1x32x64xbf16>
    %104 = vector.shape_cast %103 : vector<1x32x64xbf16> to vector<32x64xbf16>
    %cst_32 = arith.constant dense<0.000000e+00> : vector<16x64xf32>
    %105 = tpu.matmul %102, %104, %cst_32 {dimension_numbers = #tpu.dot_dimension_numbers<[1], [0], [0], [1], [0, 0, 1, 1], [], []>} : vector<16x32xbf16>, vector<32x64xbf16>, vector<16x64xf32> -> vector<16x64xf32>
    %cst_33 = arith.constant 0.000000e+00 : f32
    %106 = vector.broadcast %cst_33 : f32 to vector<16x64xf32>
    %107 = arith.maximumf %105, %106 : vector<16x64xf32>
    %108 = arith.truncf %107 : vector<16x64xf32> to vector<16x64xbf16>
    %c0_34 = arith.constant 0 : index
    %c0_35 = arith.constant 0 : index
    %c0_36 = arith.constant 0 : index
    %109 = vector.load %arg9[%c0_34, %c0_35, %c0_36] : memref<2x64x32xbf16, #tpu.memory_space<vmem>>, vector<1x64x32xbf16>
    %110 = vector.shape_cast %109 : vector<1x64x32xbf16> to vector<64x32xbf16>
    %cst_37 = arith.constant dense<0.000000e+00> : vector<16x32xf32>
    %111 = tpu.matmul %108, %110, %cst_37 {dimension_numbers = #tpu.dot_dimension_numbers<[1], [0], [0], [1], [0, 0, 1, 1], [], []>} : vector<16x64xbf16>, vector<64x32xbf16>, vector<16x32xf32> -> vector<16x32xf32>
    %112 = arith.addf %87, %111 : vector<16x32xf32>
    %c1 = arith.constant 1 : index
    %c0_38 = arith.constant 0 : index
    %c0_39 = arith.constant 0 : index
    %113 = vector.load %arg4[%c1, %c0_38, %c0_39] : memref<2x1x32xf32, #tpu.memory_space<vmem>>, vector<1x1x32xf32>
    %114 = vector.shape_cast %113 : vector<1x1x32xf32> to vector<1x32xf32>
    %115 = arith.mulf %112, %112 : vector<16x32xf32>
    %cst_40 = arith.constant dense<0.000000e+00> : vector<16xf32>
    %116 = vector.multi_reduction <add>, %115, %cst_40 [1] : vector<16x32xf32> to vector<16xf32>
    %117 = vector.shape_cast %116 : vector<16xf32> to vector<16x1xf32>
    %cst_41 = arith.constant 3.200000e+01 : f32
    %118 = vector.broadcast %cst_41 : f32 to vector<16x1xf32>
    %119 = arith.divf %117, %118 : vector<16x1xf32>
    %cst_42 = arith.constant 9.99999997E-7 : f32
    %120 = vector.broadcast %cst_42 : f32 to vector<16x1xf32>
    %121 = arith.addf %119, %120 : vector<16x1xf32>
    %122 = math.rsqrt %121 : vector<16x1xf32>
    %123 = vector.broadcast %122 : vector<16x1xf32> to vector<16x32xf32>
    %124 = arith.mulf %112, %123 : vector<16x32xf32>
    %125 = vector.broadcast %114 : vector<1x32xf32> to vector<16x32xf32>
    %126 = arith.mulf %124, %125 : vector<16x32xf32>
    %127 = arith.truncf %126 : vector<16x32xf32> to vector<16x32xbf16>
    %c1_43 = arith.constant 1 : index
    %c0_44 = arith.constant 0 : index
    %c0_45 = arith.constant 0 : index
    %128 = vector.load %arg5[%c1_43, %c0_44, %c0_45] : memref<2x32x96xbf16, #tpu.memory_space<vmem>>, vector<1x32x96xbf16>
    %129 = vector.shape_cast %128 : vector<1x32x96xbf16> to vector<32x96xbf16>
    %cst_46 = arith.constant dense<0.000000e+00> : vector<16x96xf32>
    %130 = tpu.matmul %127, %129, %cst_46 {dimension_numbers = #tpu.dot_dimension_numbers<[1], [0], [0], [1], [0, 0, 1, 1], [], []>} : vector<16x32xbf16>, vector<32x96xbf16>, vector<16x96xf32> -> vector<16x96xf32>
    %131 = vector.extract_strided_slice %130 {offsets = [0, 0], sizes = [16, 32], strides = [1, 1]} : vector<16x96xf32> to vector<16x32xf32>
    %132 = vector.extract_strided_slice %131 {offsets = [0, 0], sizes = [16, 8], strides = [1, 1]} : vector<16x32xf32> to vector<16x8xf32>
    %133 = vector.shape_cast %132 : vector<16x8xf32> to vector<2x8x8xf32>
    %134 = vector.extract_strided_slice %131 {offsets = [0, 8], sizes = [16, 8], strides = [1, 1]} : vector<16x32xf32> to vector<16x8xf32>
    %135 = vector.shape_cast %134 : vector<16x8xf32> to vector<2x8x8xf32>
    %136 = vector.extract_strided_slice %131 {offsets = [0, 16], sizes = [16, 8], strides = [1, 1]} : vector<16x32xf32> to vector<16x8xf32>
    %137 = vector.shape_cast %136 : vector<16x8xf32> to vector<2x8x8xf32>
    %138 = vector.extract_strided_slice %131 {offsets = [0, 24], sizes = [16, 8], strides = [1, 1]} : vector<16x32xf32> to vector<16x8xf32>
    %139 = vector.shape_cast %138 : vector<16x8xf32> to vector<2x8x8xf32>
    %140 = tpu.concatenate %133, %135, %137, %139 in 0 : vector<2x8x8xf32>, vector<2x8x8xf32>, vector<2x8x8xf32>, vector<2x8x8xf32> -> vector<8x8x8xf32>
    %141 = arith.truncf %140 : vector<8x8x8xf32> to vector<8x8x8xbf16>
    %142 = vector.extract_strided_slice %130 {offsets = [0, 32], sizes = [16, 32], strides = [1, 1]} : vector<16x96xf32> to vector<16x32xf32>
    %143 = vector.extract_strided_slice %142 {offsets = [0, 0], sizes = [16, 8], strides = [1, 1]} : vector<16x32xf32> to vector<16x8xf32>
    %144 = vector.shape_cast %143 : vector<16x8xf32> to vector<2x8x8xf32>
    %145 = vector.extract_strided_slice %142 {offsets = [0, 8], sizes = [16, 8], strides = [1, 1]} : vector<16x32xf32> to vector<16x8xf32>
    %146 = vector.shape_cast %145 : vector<16x8xf32> to vector<2x8x8xf32>
    %147 = vector.extract_strided_slice %142 {offsets = [0, 16], sizes = [16, 8], strides = [1, 1]} : vector<16x32xf32> to vector<16x8xf32>
    %148 = vector.shape_cast %147 : vector<16x8xf32> to vector<2x8x8xf32>
    %149 = vector.extract_strided_slice %142 {offsets = [0, 24], sizes = [16, 8], strides = [1, 1]} : vector<16x32xf32> to vector<16x8xf32>
    %150 = vector.shape_cast %149 : vector<16x8xf32> to vector<2x8x8xf32>
    %151 = tpu.concatenate %144, %146, %148, %150 in 0 : vector<2x8x8xf32>, vector<2x8x8xf32>, vector<2x8x8xf32>, vector<2x8x8xf32> -> vector<8x8x8xf32>
    %152 = arith.truncf %151 : vector<8x8x8xf32> to vector<8x8x8xbf16>
    %153 = vector.extract_strided_slice %130 {offsets = [0, 64], sizes = [16, 32], strides = [1, 1]} : vector<16x96xf32> to vector<16x32xf32>
    %154 = vector.extract_strided_slice %153 {offsets = [0, 0], sizes = [16, 8], strides = [1, 1]} : vector<16x32xf32> to vector<16x8xf32>
    %155 = vector.shape_cast %154 : vector<16x8xf32> to vector<2x8x8xf32>
    %156 = vector.extract_strided_slice %153 {offsets = [0, 8], sizes = [16, 8], strides = [1, 1]} : vector<16x32xf32> to vector<16x8xf32>
    %157 = vector.shape_cast %156 : vector<16x8xf32> to vector<2x8x8xf32>
    %158 = vector.extract_strided_slice %153 {offsets = [0, 16], sizes = [16, 8], strides = [1, 1]} : vector<16x32xf32> to vector<16x8xf32>
    %159 = vector.shape_cast %158 : vector<16x8xf32> to vector<2x8x8xf32>
    %160 = vector.extract_strided_slice %153 {offsets = [0, 24], sizes = [16, 8], strides = [1, 1]} : vector<16x32xf32> to vector<16x8xf32>
    %161 = vector.shape_cast %160 : vector<16x8xf32> to vector<2x8x8xf32>
    %162 = tpu.concatenate %155, %157, %159, %161 in 0 : vector<2x8x8xf32>, vector<2x8x8xf32>, vector<2x8x8xf32>, vector<2x8x8xf32> -> vector<8x8x8xf32>
    %163 = arith.truncf %162 : vector<8x8x8xf32> to vector<8x8x8xbf16>
    "tpu.trace_start"() <{level = 10 : i32, message = "gqd,gkd->gqk"}> : () -> ()
    %cst_47 = arith.constant dense<0.000000e+00> : vector<8x8x8xf32>
    %164 = tpu.matmul %141, %152, %cst_47 {dimension_numbers = #tpu.dot_dimension_numbers<[2], [2], [1], [1], [0, 0, 0, 1, 1, 1], [0], [0]>} : vector<8x8x8xbf16>, vector<8x8x8xbf16>, vector<8x8x8xf32> -> vector<8x8x8xf32>
    "tpu.trace_stop"() : () -> ()
    %165 = arith.addf %164, %8 : vector<8x8x8xf32>
    %cst_48 = arith.constant dense<0xFF800000> : vector<8x8xf32>
    %166 = vector.multi_reduction <maximumf>, %165, %cst_48 [2] : vector<8x8x8xf32> to vector<8x8xf32>
    %167 = vector.shape_cast %166 : vector<8x8xf32> to vector<8x8x1xf32>
    %168 = vector.broadcast %167 : vector<8x8x1xf32> to vector<8x8x8xf32>
    %169 = arith.subf %165, %168 : vector<8x8x8xf32>
    %170 = math.exp %169 : vector<8x8x8xf32>
    %cst_49 = arith.constant dense<0.000000e+00> : vector<8x8xf32>
    %171 = vector.multi_reduction <add>, %170, %cst_49 [2] : vector<8x8x8xf32> to vector<8x8xf32>
    %172 = vector.shape_cast %171 : vector<8x8xf32> to vector<8x8x1xf32>
    %173 = tpu.reciprocal %172 {approx = true} : vector<8x8x1xf32> -> vector<8x8x1xf32>
    %174 = vector.broadcast %173 : vector<8x8x1xf32> to vector<8x8x8xf32>
    %175 = arith.mulf %170, %174 : vector<8x8x8xf32>
    %176 = arith.truncf %175 : vector<8x8x8xf32> to vector<8x8x8xbf16>
    "tpu.trace_start"() <{level = 10 : i32, message = "gqk,gkd->gqd"}> : () -> ()
    %cst_50 = arith.constant dense<0.000000e+00> : vector<8x8x8xf32>
    %177 = tpu.matmul %176, %163, %cst_50 {dimension_numbers = #tpu.dot_dimension_numbers<[2], [1], [1], [2], [0, 0, 0, 1, 1, 2], [0], [0]>} : vector<8x8x8xbf16>, vector<8x8x8xbf16>, vector<8x8x8xf32> -> vector<8x8x8xf32>
    "tpu.trace_stop"() : () -> ()
    %178 = vector.extract_strided_slice %177 {offsets = [0, 0, 0], sizes = [2, 8, 8], strides = [1, 1, 1]} : vector<8x8x8xf32> to vector<2x8x8xf32>
    %179 = vector.shape_cast %178 : vector<2x8x8xf32> to vector<16x8xf32>
    %180 = vector.extract_strided_slice %177 {offsets = [2, 0, 0], sizes = [2, 8, 8], strides = [1, 1, 1]} : vector<8x8x8xf32> to vector<2x8x8xf32>
    %181 = vector.shape_cast %180 : vector<2x8x8xf32> to vector<16x8xf32>
    %182 = vector.extract_strided_slice %177 {offsets = [4, 0, 0], sizes = [2, 8, 8], strides = [1, 1, 1]} : vector<8x8x8xf32> to vector<2x8x8xf32>
    %183 = vector.shape_cast %182 : vector<2x8x8xf32> to vector<16x8xf32>
    %184 = vector.extract_strided_slice %177 {offsets = [6, 0, 0], sizes = [2, 8, 8], strides = [1, 1, 1]} : vector<8x8x8xf32> to vector<2x8x8xf32>
    %185 = vector.shape_cast %184 : vector<2x8x8xf32> to vector<16x8xf32>
    %186 = tpu.concatenate %179, %181, %183, %185 in 1 : vector<16x8xf32>, vector<16x8xf32>, vector<16x8xf32>, vector<16x8xf32> -> vector<16x32xf32>
    %187 = arith.truncf %186 : vector<16x32xf32> to vector<16x32xbf16>
    %c1_51 = arith.constant 1 : index
    %c0_52 = arith.constant 0 : index
    %c0_53 = arith.constant 0 : index
    %188 = vector.load %arg6[%c1_51, %c0_52, %c0_53] : memref<2x32x32xbf16, #tpu.memory_space<vmem>>, vector<1x32x32xbf16>
    %189 = vector.shape_cast %188 : vector<1x32x32xbf16> to vector<32x32xbf16>
    %cst_54 = arith.constant dense<0.000000e+00> : vector<16x32xf32>
    %190 = tpu.matmul %187, %189, %cst_54 {dimension_numbers = #tpu.dot_dimension_numbers<[1], [0], [0], [1], [0, 0, 1, 1], [], []>} : vector<16x32xbf16>, vector<32x32xbf16>, vector<16x32xf32> -> vector<16x32xf32>
    %191 = arith.addf %112, %190 : vector<16x32xf32>
    %c1_55 = arith.constant 1 : index
    %c0_56 = arith.constant 0 : index
    %c0_57 = arith.constant 0 : index
    %192 = vector.load %arg7[%c1_55, %c0_56, %c0_57] : memref<2x1x32xf32, #tpu.memory_space<vmem>>, vector<1x1x32xf32>
    %193 = vector.shape_cast %192 : vector<1x1x32xf32> to vector<1x32xf32>
    %194 = arith.mulf %191, %191 : vector<16x32xf32>
    %cst_58 = arith.constant dense<0.000000e+00> : vector<16xf32>
    %195 = vector.multi_reduction <add>, %194, %cst_58 [1] : vector<16x32xf32> to vector<16xf32>
    %196 = vector.shape_cast %195 : vector<16xf32> to vector<16x1xf32>
    %cst_59 = arith.constant 3.200000e+01 : f32
    %197 = vector.broadcast %cst_59 : f32 to vector<16x1xf32>
    %198 = arith.divf %196, %197 : vector<16x1xf32>
    %cst_60 = arith.constant 9.99999997E-7 : f32
    %199 = vector.broadcast %cst_60 : f32 to vector<16x1xf32>
    %200 = arith.addf %198, %199 : vector<16x1xf32>
    %201 = math.rsqrt %200 : vector<16x1xf32>
    %202 = vector.broadcast %201 : vector<16x1xf32> to vector<16x32xf32>
    %203 = arith.mulf %191, %202 : vector<16x32xf32>
    %204 = vector.broadcast %193 : vector<1x32xf32> to vector<16x32xf32>
    %205 = arith.mulf %203, %204 : vector<16x32xf32>
    %206 = arith.truncf %205 : vector<16x32xf32> to vector<16x32xbf16>
    %c1_61 = arith.constant 1 : index
    %c0_62 = arith.constant 0 : index
    %c0_63 = arith.constant 0 : index
    %207 = vector.load %arg8[%c1_61, %c0_62, %c0_63] : memref<2x32x64xbf16, #tpu.memory_space<vmem>>, vector<1x32x64xbf16>
    %208 = vector.shape_cast %207 : vector<1x32x64xbf16> to vector<32x64xbf16>
    %cst_64 = arith.constant dense<0.000000e+00> : vector<16x64xf32>
    %209 = tpu.matmul %206, %208, %cst_64 {dimension_numbers = #tpu.dot_dimension_numbers<[1], [0], [0], [1], [0, 0, 1, 1], [], []>} : vector<16x32xbf16>, vector<32x64xbf16>, vector<16x64xf32> -> vector<16x64xf32>
    %cst_65 = arith.constant 0.000000e+00 : f32
    %210 = vector.broadcast %cst_65 : f32 to vector<16x64xf32>
    %211 = arith.maximumf %209, %210 : vector<16x64xf32>
    %212 = arith.truncf %211 : vector<16x64xf32> to vector<16x64xbf16>
    %c1_66 = arith.constant 1 : index
    %c0_67 = arith.constant 0 : index
    %c0_68 = arith.constant 0 : index
    %213 = vector.load %arg9[%c1_66, %c0_67, %c0_68] : memref<2x64x32xbf16, #tpu.memory_space<vmem>>, vector<1x64x32xbf16>
    %214 = vector.shape_cast %213 : vector<1x64x32xbf16> to vector<64x32xbf16>
    %cst_69 = arith.constant dense<0.000000e+00> : vector<16x32xf32>
    %215 = tpu.matmul %212, %214, %cst_69 {dimension_numbers = #tpu.dot_dimension_numbers<[1], [0], [0], [1], [0, 0, 1, 1], [], []>} : vector<16x64xbf16>, vector<64x32xbf16>, vector<16x32xf32> -> vector<16x32xf32>
    %216 = arith.addf %191, %215 : vector<16x32xf32>
    %c0_70 = arith.constant 0 : index
    %c0_71 = arith.constant 0 : index
    %217 = vector.load %arg10[%c0_70, %c0_71] : memref<1x32xf32, #tpu.memory_space<vmem>>, vector<1x32xf32>
    %218 = arith.mulf %216, %216 : vector<16x32xf32>
    %cst_72 = arith.constant dense<0.000000e+00> : vector<16xf32>
    %219 = vector.multi_reduction <add>, %218, %cst_72 [1] : vector<16x32xf32> to vector<16xf32>
    %220 = vector.shape_cast %219 : vector<16xf32> to vector<16x1xf32>
    %cst_73 = arith.constant 3.200000e+01 : f32
    %221 = vector.broadcast %cst_73 : f32 to vector<16x1xf32>
    %222 = arith.divf %220, %221 : vector<16x1xf32>
    %cst_74 = arith.constant 9.99999997E-7 : f32
    %223 = vector.broadcast %cst_74 : f32 to vector<16x1xf32>
    %224 = arith.addf %222, %223 : vector<16x1xf32>
    %225 = math.rsqrt %224 : vector<16x1xf32>
    %226 = vector.broadcast %225 : vector<16x1xf32> to vector<16x32xf32>
    %227 = arith.mulf %216, %226 : vector<16x32xf32>
    %228 = vector.broadcast %217 : vector<1x32xf32> to vector<16x32xf32>
    %229 = arith.mulf %227, %228 : vector<16x32xf32>
    %230 = vector.shape_cast %229 : vector<16x32xf32> to vector<2x8x32xf32>
    %231 = vector.extract_strided_slice %230 {offsets = [0, 0, 0], sizes = [2, 1, 32], strides = [1, 1, 1]} : vector<2x8x32xf32> to vector<2x1x32xf32>
    %232 = vector.shape_cast %231 : vector<2x1x32xf32> to vector<2x32xf32>
    %c0_75 = arith.constant 0 : index
    %c0_76 = arith.constant 0 : index
    %233 = vector.load %arg11[%c0_75, %c0_76] : memref<1x32xf32, #tpu.memory_space<vmem>>, vector<1x32xf32>
    %234 = vector.broadcast %233 : vector<1x32xf32> to vector<2x32xf32>
    %235 = arith.mulf %232, %234 : vector<2x32xf32>
    %cst_77 = arith.constant dense<0.000000e+00> : vector<2xf32>
    %236 = vector.multi_reduction <add>, %235, %cst_77 [1] : vector<2x32xf32> to vector<2xf32>
    %237 = vector.shape_cast %236 : vector<2xf32> to vector<2x1xf32>
    %c0_78 = arith.constant 0 : index
    %c0_79 = arith.constant 0 : index
    %238 = vector.load %arg12[%c0_78, %c0_79] : memref<1x1xf32, #tpu.memory_space<vmem>>, vector<1x1xf32>
    %239 = vector.broadcast %238 : vector<1x1xf32> to vector<2x1xf32>
    %240 = arith.addf %237, %239 : vector<2x1xf32>
    %c0_80 = arith.constant 0 : index
    %c0_81 = arith.constant 0 : index
    %241 = vector.load %arg14[%c0_80, %c0_81] : memref<2x1xf32, #tpu.memory_space<vmem>>, vector<2x1xf32>
    tpu.vector_store %arg14[%c0_80, %c0_81], %240 {strides = array<i32>} : memref<2x1xf32, #tpu.memory_space<vmem>>, vector<2x1xf32>,
    %c0_82 = arith.constant 0 : index
    %c0_83 = arith.constant 0 : index
    %242 = vector.load %arg13[%c0_82, %c0_83] : memref<2x1xf32, #tpu.memory_space<vmem>>, vector<2x1xf32>
    %cst_84 = arith.constant 0.000000e+00 : f32
    %243 = vector.broadcast %cst_84 : f32 to vector<2x1xf32>
    %244 = arith.maximumf %240, %243 : vector<2x1xf32>
    %245 = arith.mulf %240, %242 : vector<2x1xf32>
    %246 = arith.subf %244, %245 : vector<2x1xf32>
    %247 = math.absf %240 : vector<2x1xf32>
    %cst_85 = arith.constant 0.000000e+00 : f32
    %248 = vector.broadcast %cst_85 : f32 to vector<2x1xf32>
    %249 = arith.subf %248, %247 : vector<2x1xf32>
    %250 = math.exp %249 : vector<2x1xf32>
    %251 = math.log1p %250 : vector<2x1xf32>
    %252 = arith.addf %246, %251 : vector<2x1xf32>
    %cst_86 = arith.constant 5.000000e-01 : f32
    %253 = vector.broadcast %cst_86 : f32 to vector<2x1xf32>
    %254 = arith.mulf %252, %253 : vector<2x1xf32>
    %c0_87 = arith.constant 0 : index
    %c0_88 = arith.constant 0 : index
    %255 = vector.load %arg15[%c0_87, %c0_88] : memref<2x1xf32, #tpu.memory_space<vmem>>, vector<2x1xf32>
    tpu.vector_store %arg15[%c0_87, %c0_88], %254 {strides = array<i32>} : memref<2x1xf32, #tpu.memory_space<vmem>>, vector<2x1xf32>,
    return
  }
  func.func @transform_0(%arg0: i32) -> (i32, i32) {
    %c0_i32 = arith.constant 0 : i32
    %c0_i32_0 = arith.constant 0 : i32
    return %arg0, %c0_i32 : i32, i32
  }
  func.func @transform_1(%arg0: i32) -> (i32, i32) {
    %c0_i32 = arith.constant 0 : i32
    %c0_i32_0 = arith.constant 0 : i32
    return %arg0, %c0_i32 : i32, i32
  }
  func.func @transform_2(%arg0: i32) -> (i32, i32, i32) {
    %c0_i32 = arith.constant 0 : i32
    %c0_i32_0 = arith.constant 0 : i32
    %c0_i32_1 = arith.constant 0 : i32
    %c0_i32_2 = arith.constant 0 : i32
    return %c0_i32, %c0_i32_0, %c0_i32_1 : i32, i32, i32
  }
  func.func @transform_3(%arg0: i32) -> (i32, i32, i32) {
    %c0_i32 = arith.constant 0 : i32
    %c0_i32_0 = arith.constant 0 : i32
    %c0_i32_1 = arith.constant 0 : i32
    %c0_i32_2 = arith.constant 0 : i32
    return %c0_i32, %c0_i32_0, %c0_i32_1 : i32, i32, i32
  }
  func.func @transform_4(%arg0: i32) -> (i32, i32, i32) {
    %c0_i32 = arith.constant 0 : i32
    %c0_i32_0 = arith.constant 0 : i32
    %c0_i32_1 = arith.constant 0 : i32
    %c0_i32_2 = arith.constant 0 : i32
    return %c0_i32, %c0_i32_0, %c0_i32_1 : i32, i32, i32
  }
  func.func @transform_5(%arg0: i32) -> (i32, i32, i32) {
    %c0_i32 = arith.constant 0 : i32
    %c0_i32_0 = arith.constant 0 : i32
    %c0_i32_1 = arith.constant 0 : i32
    %c0_i32_2 = arith.constant 0 : i32
    return %c0_i32, %c0_i32_0, %c0_i32_1 : i32, i32, i32
  }
  func.func @transform_6(%arg0: i32) -> (i32, i32, i32) {
    %c0_i32 = arith.constant 0 : i32
    %c0_i32_0 = arith.constant 0 : i32
    %c0_i32_1 = arith.constant 0 : i32
    %c0_i32_2 = arith.constant 0 : i32
    return %c0_i32, %c0_i32_0, %c0_i32_1 : i32, i32, i32
  }
  func.func @transform_7(%arg0: i32) -> (i32, i32, i32) {
    %c0_i32 = arith.constant 0 : i32
    %c0_i32_0 = arith.constant 0 : i32
    %c0_i32_1 = arith.constant 0 : i32
    %c0_i32_2 = arith.constant 0 : i32
    return %c0_i32, %c0_i32_0, %c0_i32_1 : i32, i32, i32
  }
  func.func @transform_8(%arg0: i32) -> (i32, i32, i32) {
    %c0_i32 = arith.constant 0 : i32
    %c0_i32_0 = arith.constant 0 : i32
    %c0_i32_1 = arith.constant 0 : i32
    %c0_i32_2 = arith.constant 0 : i32
    return %c0_i32, %c0_i32_0, %c0_i32_1 : i32, i32, i32
  }
  func.func @transform_9(%arg0: i32) -> (i32, i32) {
    %c0_i32 = arith.constant 0 : i32
    %c0_i32_0 = arith.constant 0 : i32
    %c0_i32_1 = arith.constant 0 : i32
    return %c0_i32, %c0_i32_0 : i32, i32
  }
  func.func @transform_10(%arg0: i32) -> (i32, i32) {
    %c0_i32 = arith.constant 0 : i32
    %c0_i32_0 = arith.constant 0 : i32
    %c0_i32_1 = arith.constant 0 : i32
    return %c0_i32, %c0_i32_0 : i32, i32
  }
  func.func @transform_11(%arg0: i32) -> (i32, i32) {
    %c0_i32 = arith.constant 0 : i32
    %c0_i32_0 = arith.constant 0 : i32
    %c0_i32_1 = arith.constant 0 : i32
    return %c0_i32, %c0_i32_0 : i32, i32
  }
  func.func @transform_12(%arg0: i32) -> (i32, i32) {
    %c0_i32 = arith.constant 0 : i32
    %c0_i32_0 = arith.constant 0 : i32
    return %arg0, %c0_i32 : i32, i32
  }
  func.func @transform_13(%arg0: i32) -> (i32, i32) {
    %c0_i32 = arith.constant 0 : i32
    %c0_i32_0 = arith.constant 0 : i32
    return %arg0, %c0_i32 : i32, i32
  }
  func.func @transform_14(%arg0: i32) -> (i32, i32) {
    %c0_i32 = arith.constant 0 : i32
    %c0_i32_0 = arith.constant 0 : i32
    return %arg0, %c0_i32 : i32, i32
  }
}

</mosaic_0001>

<llo_original>
// kernel: tpu_custom_call.1
$region0: #{tpu_custom_call.1}
  #allocation0 [shape = 'u32[]', space=smem, size = 0x4, offset = 0x4, fixed_abs, tag = 'smem constant byte address 0x4 - core index']
  #allocation1 [shape = 'u32[144,128]{1,0:T(1,128)}', space=vmem, size = 0x12000, scoped, tag = 'internal scratch']
  #allocation2 [shape = 'f32[1,1]{1,0:T(1,128)S(1)}', space=vmem, size = 0x200, scoped, tag = 'scoped memory for tpu_custom_call.1']
  %s0 = inlined_call_operand.hbm [shape: f32[16,32], index: 0, kind: input, shape index: {}]
  %s1 = inlined_call_operand.vmem [shape: f32[2,8], index: 1, kind: input, shape index: {}]
  %s2 = inlined_call_operand.vmem [shape: f32[4,8,8], index: 2, kind: input, shape index: {}]
  %s3 = inlined_call_operand.vmem [shape: f32[2,1,32], index: 3, kind: input, shape index: {}]
  %s4 = inlined_call_operand.vmem [shape: bf16[2,32,96], index: 4, kind: input, shape index: {}]
  %s5 = inlined_call_operand.vmem [shape: bf16[2,32,32], index: 5, kind: input, shape index: {}]
  %s6 = inlined_call_operand.vmem [shape: f32[2,1,32], index: 6, kind: input, shape index: {}]
  %s7 = inlined_call_operand.hbm [shape: bf16[2,32,64], index: 7, kind: input, shape index: {}]
  %s8 = inlined_call_operand.vmem [shape: bf16[2,64,32], index: 8, kind: input, shape index: {}]
  %s9 = inlined_call_operand.vmem [shape: f32[1,32], index: 9, kind: input, shape index: {}]
  %s10 = inlined_call_operand.vmem [shape: f32[1,32], index: 10, kind: input, shape index: {}]
  %s11 = inlined_call_operand.<no memory space> [shape: f32[1,1], index: 11, kind: input, shape index: {}]
  %s12 = inlined_call_operand.vmem [shape: f32[2,1], index: 12, kind: input, shape index: {}]
  %s13 = inlined_call_operand.vmem [shape: f32[2,1], index: 13, kind: output, shape index: {0}]
  %s14 = inlined_call_operand.vmem [shape: f32[2,1], index: 14, kind: output, shape index: {1}]
  %15 = xla_tuple %s13, %s14
  %s16 = sld [smem:[#allocation0]]
  $region78: #{tpu_custom_call.1} parent=0
    _
  %s18 = ssub.s32 1, %s16
  %s19 = scalar_select 0, %s18, %s16
  %v20 = vstv %s11
  %21 = vst [vmem:[#allocation2] sm:$0x1] %v20
  $region1: #{tpu_custom_call.1} parent=0
    #allocation3 [shape = 'u8[8192]{0}', space=vmem, size = 0x2000, scoped, tag = 'input window, operand 0, single buffered']
    #allocation4 [shape = 's32[1]{0}', space=sflag, size = 0x4, scoped, tag = 'scoped memory for tpu_custom_call.1']
    #allocation5 [shape = 'u8[16384]{0}', space=vmem, size = 0x4000, scoped, tag = 'input window, operand 7, single buffered']
    #allocation6 [shape = 's32[1]{0}', space=sflag, size = 0x4, scoped, tag = 'scoped memory for tpu_custom_call.1']
    %22 = vsyncpa [#allocation4], 0
    %23 = vsyncpa [#allocation6], 0
    // Predicated region
    $region2: #{tpu_custom_call.1} parent=1 // pred_check
      _
    $region3: #{tpu_custom_call.1} parent=1 // pred_check_branch
      %25 = sbr.rel (0) target = $region5
    $region4: #{tpu_custom_call.1} parent=1 // pred_region
      %s27 = ssub.s32 256, 256
      %28 = vsyncadd [#allocation4], %s27
      %s29 = sshll.u32 [#allocation3], 4
      %s30 = int_to_ptr.vmem [resolvable:$true] %s29
      %35 = dma.hbm_to_vmem [thread:$0]  %s0, 256, %s30, [#allocation4], 128, 128, 8
    $region5: #{tpu_custom_call.1} parent=1 // pred_fallthru
      _
    // Predicated region
    $region6: #{tpu_custom_call.1} parent=1 // pred_check
      _
    $region7: #{tpu_custom_call.1} parent=1 // pred_check_branch
      %37 = sbr.rel (0) target = $region9
    $region8: #{tpu_custom_call.1} parent=1 // pred_region
      _
    $region9: #{tpu_custom_call.1} parent=1 // pred_fallthru
      _
    // Predicated region
    $region10: #{tpu_custom_call.1} parent=1 // pred_check
      _
    $region11: #{tpu_custom_call.1} parent=1 // pred_check_branch
      %39 = sbr.rel (0) target = $region13
    $region12: #{tpu_custom_call.1} parent=1 // pred_region
      _
    $region13: #{tpu_custom_call.1} parent=1 // pred_fallthru
      _
    // Predicated region
    $region14: #{tpu_custom_call.1} parent=1 // pred_check
      _
    $region15: #{tpu_custom_call.1} parent=1 // pred_check_branch
      %41 = sbr.rel (0) target = $region17
    $region16: #{tpu_custom_call.1} parent=1 // pred_region
      _
    $region17: #{tpu_custom_call.1} parent=1 // pred_fallthru
      _
    // Predicated region
    $region18: #{tpu_custom_call.1} parent=1 // pred_check
      _
    $region19: #{tpu_custom_call.1} parent=1 // pred_check_branch
      %43 = sbr.rel (0) target = $region21
    $region20: #{tpu_custom_call.1} parent=1 // pred_region
      _
    $region21: #{tpu_custom_call.1} parent=1 // pred_fallthru
      _
    // Predicated region
    $region22: #{tpu_custom_call.1} parent=1 // pred_check
      _
    $region23: #{tpu_custom_call.1} parent=1 // pred_check_branch
      %45 = sbr.rel (0) target = $region25
    $region24: #{tpu_custom_call.1} parent=1 // pred_region
      _
    $region25: #{tpu_custom_call.1} parent=1 // pred_fallthru
      _
    // Predicated region
    $region26: #{tpu_custom_call.1} parent=1 // pred_check
      _
    $region27: #{tpu_custom_call.1} parent=1 // pred_check_branch
      %47 = sbr.rel (0) target = $region29
    $region28: #{tpu_custom_call.1} parent=1 // pred_region
      _
    $region29: #{tpu_custom_call.1} parent=1 // pred_fallthru
      _
    // Predicated region
    $region30: #{tpu_custom_call.1} parent=1 // pred_check
      _
    $region31: #{tpu_custom_call.1} parent=1 // pred_check_branch
      %49 = sbr.rel (0) target = $region33
    $region32: #{tpu_custom_call.1} parent=1 // pred_region
      %s51 = ssub.s32 512, 512
      %52 = vsyncadd [#allocation6], %s51
      %s53 = sshll.u32 [#allocation5], 4
      %s54 = int_to_ptr.vmem [resolvable:$true] %s53
      %59 = dma.hbm_to_vmem [thread:$0]  %s7, 512, %s54, [#allocation6], 64, 64, 4
    $region33: #{tpu_custom_call.1} parent=1 // pred_fallthru
      _
    // Predicated region
    $region34: #{tpu_custom_call.1} parent=1 // pred_check
      _
    $region35: #{tpu_custom_call.1} parent=1 // pred_check_branch
      %61 = sbr.rel (0) target = $region37
    $region36: #{tpu_custom_call.1} parent=1 // pred_region
      _
    $region37: #{tpu_custom_call.1} parent=1 // pred_fallthru
      _
    // Predicated region
    $region38: #{tpu_custom_call.1} parent=1 // pred_check
      _
    $region39: #{tpu_custom_call.1} parent=1 // pred_check_branch
      %63 = sbr.rel (0) target = $region41
    $region40: #{tpu_custom_call.1} parent=1 // pred_region
      _
    $region41: #{tpu_custom_call.1} parent=1 // pred_fallthru
      _
    // Predicated region
    $region42: #{tpu_custom_call.1} parent=1 // pred_check
      _
    $region43: #{tpu_custom_call.1} parent=1 // pred_check_branch
      %65 = sbr.rel (0) target = $region45
    $region44: #{tpu_custom_call.1} parent=1 // pred_region
      _
    $region45: #{tpu_custom_call.1} parent=1 // pred_fallthru
      _
    // Predicated region
    $region46: #{tpu_custom_call.1} parent=1 // pred_check
      _
    $region47: #{tpu_custom_call.1} parent=1 // pred_check_branch
      %67 = sbr.rel (0) target = $region49
    $region48: #{tpu_custom_call.1} parent=1 // pred_region
      _
    $region49: #{tpu_custom_call.1} parent=1 // pred_fallthru
      _
    // Predicated region
    $region50: #{tpu_custom_call.1} parent=1 // pred_check
      _
    $region51: #{tpu_custom_call.1} parent=1 // pred_check_branch
      %69 = sbr.rel (0) target = $region53
    $region52: #{tpu_custom_call.1} parent=1 // pred_region
      _
    $region53: #{tpu_custom_call.1} parent=1 // pred_fallthru
      _
    // Predicated region
    $region54: #{tpu_custom_call.1} parent=1 // pred_check
      _
    $region55: #{tpu_custom_call.1} parent=1 // pred_check_branch
      %71 = sbr.rel (0) target = $region57
    $region56: #{tpu_custom_call.1} parent=1 // pred_region
      %72 = dma.done [#allocation4], 256
    $region57: #{tpu_custom_call.1} parent=1 // pred_fallthru
      _
    // Predicated region
    $region58: #{tpu_custom_call.1} parent=1 // pred_check
      _
    $region59: #{tpu_custom_call.1} parent=1 // pred_check_branch
      %74 = sbr.rel (0) target = $region61
    $region60: #{tpu_custom_call.1} parent=1 // pred_region
      %75 = dma.done [#allocation6], 512
    $region61: #{tpu_custom_call.1} parent=1 // pred_fallthru
      _
    %v77 = vld [vmem:[#allocation3] sm:$0xff]
    %v78 = vld [vmem:[#allocation3 + $0x8] sm:$0xff]
    %v79 = vld [vmem:[%s2] sm:$0xff]
    %v80 = vld [vmem:[%s2 + $0x8] sm:$0xff]
    %v81 = vld [vmem:[%s2 + $0x10] sm:$0xff]
    %v82 = vld [vmem:[%s2 + $0x18] sm:$0xff]
    %v83 = vld [vmem:[%s1] sm:$0x3]
    %v86 = vunpack.c.l.s4 1966171168
    %v87 = vunpack.c.0.s8 %v86
    %v88 = vlaneseq
    %v89 = vshrl.u32 %v88, 7
    %v90 = vsub.s32 %v87, %v89
    %v91 = vrot.slane %v83, %v90
    %v92 = vcombine.high %v91, %v91
    %v94 = vunpack.c.l.s4 1966171168
    %v95 = vunpack.c.0.s8 %v94
    %v96 = vlaneseq
    %v97 = vshrl.u32 %v96, 7
    %v98 = vsub.s32 %v95, %v97
    %v99 = vrot.slane %v91, %v98
    %v101 = vunpack.c.l.s4 1966171168
    %v102 = vunpack.c.0.s8 %v101
    %v103 = vlaneseq
    %v104 = vshrl.u32 %v103, 7
    %v105 = vsub.s32 %v102, %v104
    %v106 = vrot.slane %v92, %v105
    %v107 = vlaneseq
    %v108 = vshrl.u32 %v107, 7
    %v109 = vsub.s32 0, %v108
    %v110 = vrot.slane %v99, %v109
    %v111 = vlaneseq
    %v112 = vshrl.u32 %v111, 7
    %v113 = vsub.s32 0, %v112
    %v114 = vrot.slane %v106, %v113
    %v117 = vadd.f32 %v79, %v110
    %v118 = vadd.f32 %v79, %v114
    %v119 = vadd.f32 %v80, %v110
    %v120 = vadd.f32 %v80, %v114
    %v121 = vadd.f32 %v81, %v110
    %v122 = vadd.f32 %v81, %v114
    %v123 = vadd.f32 %v82, %v110
    %v124 = vadd.f32 %v82, %v114
    %v125 = vld [vmem:[%s3] sm:$0x1]
    %v126 = vmul.f32 %v77, %v77
    %v127 = vmul.f32 %v78, %v78
    %vm128 = vcmask 261120
    %v129 = vsel %vm128, %v126, 0.0
    %130 = vadd.xlane.f32.xlu0 %v129
    %v131 = vpop.xlane.xlu0 %130
    %v132 = vsel %vm128, %v127, 0.0
    %133 = vadd.xlane.f32.xlu0 %v132
    %v134 = vpop.xlane.xlu0 %133
    %v135 = vrcp.pop 32.0
    %v136 = vmul.f32 %v131, %v135
    %v137 = vmul.f32 %v134, %v135
    %v138 = vadd.f32 %v136, 1e-06
    %v139 = vadd.f32 %v137, 1e-06
    %v140 = vrsqrt.pop %v138
    %v141 = vrsqrt.pop %v139
    %v142 = vmul.f32 %v77, %v140
    %v143 = vmul.f32 %v78, %v141
    %v145 = vlaneseq
    %v146 = vshrl.u32 %v145, 7
    %v147 = vsub.s32 0, %v146
    %v148 = vrot.slane %v125, %v147
    %v150 = vmul.f32 %v142, %v148
    %v151 = vmul.f32 %v143, %v148
    %v152 = vpack.c.bf16 %v151, %v150
    %v153 = vld [vmem:[%s4] sm:$0xf]
    %v154 = vld [vmem:[%s4 + $0x4] sm:$0xf]
    %v155 = vld [vmem:[%s4 + $0x8] sm:$0xf]
    %v156 = vld [vmem:[%s4 + $0xc] sm:$0xf]
    %v161 = vunpack.c.l.b16 %v153
    %v162 = vunpack.c.l.b16 %v154
    %v163 = vunpack.c.l.b16 %v155
    %v164 = vunpack.c.l.b16 %v156
    %v165 = vpack.c.b16 %v162, %v161
    %v166 = vpack.c.b16 %v164, %v163
    %v170 = vsel %vm128, %v152, 0
    %172 = vmatprep.subr.bf16.mxu0 0
    %173 = vmatpush1.bf16.msra.mxu0 0
    %174 = vmatprep.subr.bf16.mxu0 0
    %175 = vmatpush1.bf16.msra.mxu0 0
    %176 = vmatprep.subr.bf16.mxu0 0
    %177 = vmatpush1.bf16.msra.mxu0 0
    %178 = vmatprep.subr.bf16.mxu0 0
    %179 = vmatpush1.bf16.msra.mxu0 0
    %180 = vmatprep.subr.bf16.mxu0 0
    %181 = vmatpush1.bf16.msra.mxu0 0
    %182 = vmatprep.subr.bf16.mxu0 0
    %183 = vmatpush1.bf16.msra.mxu0 0
    %184 = vmatprep.subr.bf16.mxu0 0
    %185 = vmatpush1.bf16.msra.mxu0 %v166
    %186 = vmatprep.subr.bf16.mxu0 0
    %187 = vmatpush1.bf16.msra.mxu0 %v165
    %188 = vmatprep.subr.bf16.mxu0 0
    %189 = vmatpush2.bf16.msra.mxu0 0
    %190 = vmatprep.subr.bf16.mxu0 0
    %191 = vmatpush2.bf16.msra.mxu0 0
    %192 = vmatprep.subr.bf16.mxu0 0
    %193 = vmatpush2.bf16.msra.mxu0 0
    %194 = vmatprep.subr.bf16.mxu0 0
    %195 = vmatpush2.bf16.msra.mxu0 0
    %196 = vmatprep.subr.bf16.mxu0 0
    %197 = vmatpush2.bf16.msra.mxu0 0
    %198 = vmatprep.subr.bf16.mxu0 0
    %199 = vmatpush2.bf16.msra.mxu0 0
    %200 = vmatprep.subr.bf16.mxu0 0
    %201 = vmatpush2.bf16.msra.mxu0 0
    %202 = vmatprep.subr.bf16.mxu0 0
    %203 = vmatpush2.bf16.msra.mxu0 0
    %204 = vmatprep.mubr.bf16.mxu0 0
    %205 = vmatmul.mubr.bf16.gmra.mxu0 %v170
    %v206 = vpop.f32.mrf.mxu0
    %v207 = vadd.f32 0.0, %v206
    %v208 = vpop.f32.mrf.mxu0
    %v209 = vpop.f32.mrf.mxu0
    %v210 = vadd.f32 0.0, %v209
    %v211 = vpop.f32.mrf.mxu0
    %212 = vdwg.mxu0
    %215 = vrot.lane.b32.xlu0 %v207, 120
    %v216 = vpop.permute.xlu0 %215
    %217 = vrot.lane.b32.xlu0 %v210, 120
    %v218 = vpop.permute.xlu0 %217
    %221 = vrot.lane.b32.xlu0 %v207, 112
    %v222 = vpop.permute.xlu0 %221
    %223 = vrot.lane.b32.xlu0 %v210, 112
    %v224 = vpop.permute.xlu0 %223
    %227 = vrot.lane.b32.xlu0 %v207, 104
    %v228 = vpop.permute.xlu0 %227
    %229 = vrot.lane.b32.xlu0 %v210, 104
    %v230 = vpop.permute.xlu0 %229
    %v233 = vpack.c.bf16 %v207, %v207
    %v234 = vpack.c.bf16 %v210, %v210
    %v235 = vpack.c.bf16 %v216, %v216
    %v236 = vpack.c.bf16 %v218, %v218
    %v237 = vpack.c.bf16 %v222, %v222
    %v238 = vpack.c.bf16 %v224, %v224
    %v239 = vpack.c.bf16 %v228, %v228
    %v240 = vpack.c.bf16 %v230, %v230
    %242 = vrot.lane.b32.xlu0 %v233, 96
    %v243 = vpop.permute.xlu0 %242
    %vm244 = vcmask 64512
    %v246 = vsel %vm244, %v233, 0
    %v249 = vsel %vm244, %v243, 0
    %251 = vmatprep.subr.bf16.mxu0 0
    %252 = vmatpush1.bf16.xpose.msra.mxu0 0
    %253 = vmatprep.subr.bf16.mxu0 0
    %254 = vmatpush1.bf16.xpose.msra.mxu0 0
    %255 = vmatprep.subr.bf16.mxu0 0
    %256 = vmatpush1.bf16.xpose.msra.mxu0 0
    %257 = vmatprep.subr.bf16.mxu0 0
    %258 = vmatpush1.bf16.xpose.msra.mxu0 0
    %259 = vmatprep.subr.bf16.mxu0 0
    %260 = vmatpush1.bf16.xpose.msra.mxu0 0
    %261 = vmatprep.subr.bf16.mxu0 0
    %262 = vmatpush1.bf16.xpose.msra.mxu0 0
    %263 = vmatprep.subr.bf16.mxu0 0
    %264 = vmatpush1.bf16.xpose.msra.mxu0 0
    %265 = vmatprep.subr.bf16.mxu0 0
    %266 = vmatpush1.bf16.xpose.msra.mxu0 %v249
    %267 = vmatprep.subr.bf16.mxu0 0
    %268 = vmatpush2.bf16.xpose.msra.mxu0 0
    %269 = vmatprep.subr.bf16.mxu0 0
    %270 = vmatpush2.bf16.xpose.msra.mxu0 0
    %271 = vmatprep.subr.bf16.mxu0 0
    %272 = vmatpush2.bf16.xpose.msra.mxu0 0
    %273 = vmatprep.subr.bf16.mxu0 0
    %274 = vmatpush2.bf16.xpose.msra.mxu0 0
    %275 = vmatprep.subr.bf16.mxu0 0
    %276 = vmatpush2.bf16.xpose.msra.mxu0 0
    %277 = vmatprep.subr.bf16.mxu0 0
    %278 = vmatpush2.bf16.xpose.msra.mxu0 0
    %279 = vmatprep.subr.bf16.mxu0 0
    %280 = vmatpush2.bf16.xpose.msra.mxu0 0
    %281 = vmatprep.subr.bf16.mxu0 0
    %282 = vmatpush2.bf16.xpose.msra.mxu0 0
    %283 = vmatprep.mubr.bf16.mxu0 0
    %284 = vmatmul.mubr.bf16.gmra.mxu0 %v246
    %v285 = vpop.f32.mrf.mxu0
    %v286 = vadd.f32 %v117, %v285
    %v287 = vpop.f32.mrf.mxu0
    %v288 = vpop.f32.mrf.mxu0
    %v289 = vpop.f32.mrf.mxu0
    %290 = vdwg.mxu0
    %292 = vrot.lane.b32.xlu0 %v234, 96
    %v293 = vpop.permute.xlu0 %292
    %v295 = vsel %vm244, %v234, 0
    %v298 = vsel %vm244, %v293, 0
    %300 = vmatprep.subr.bf16.mxu0 0
    %301 = vmatpush1.bf16.xpose.msra.mxu0 0
    %302 = vmatprep.subr.bf16.mxu0 0
    %303 = vmatpush1.bf16.xpose.msra.mxu0 0
    %304 = vmatprep.subr.bf16.mxu0 0
    %305 = vmatpush1.bf16.xpose.msra.mxu0 0
    %306 = vmatprep.subr.bf16.mxu0 0
    %307 = vmatpush1.bf16.xpose.msra.mxu0 0
    %308 = vmatprep.subr.bf16.mxu0 0
    %309 = vmatpush1.bf16.xpose.msra.mxu0 0
    %310 = vmatprep.subr.bf16.mxu0 0
    %311 = vmatpush1.bf16.xpose.msra.mxu0 0
    %312 = vmatprep.subr.bf16.mxu0 0
    %313 = vmatpush1.bf16.xpose.msra.mxu0 0
    %314 = vmatprep.subr.bf16.mxu0 0
    %315 = vmatpush1.bf16.xpose.msra.mxu0 %v298
    %316 = vmatprep.subr.bf16.mxu0 0
    %317 = vmatpush2.bf16.xpose.msra.mxu0 0
    %318 = vmatprep.subr.bf16.mxu0 0
    %319 = vmatpush2.bf16.xpose.msra.mxu0 0
    %320 = vmatprep.subr.bf16.mxu0 0
    %321 = vmatpush2.bf16.xpose.msra.mxu0 0
    %322 = vmatprep.subr.bf16.mxu0 0
    %323 = vmatpush2.bf16.xpose.msra.mxu0 0
    %324 = vmatprep.subr.bf16.mxu0 0
    %325 = vmatpush2.bf16.xpose.msra.mxu0 0
    %326 = vmatprep.subr.bf16.mxu0 0
    %327 = vmatpush2.bf16.xpose.msra.mxu0 0
    %328 = vmatprep.subr.bf16.mxu0 0
    %329 = vmatpush2.bf16.xpose.msra.mxu0 0
    %330 = vmatprep.subr.bf16.mxu0 0
    %331 = vmatpush2.bf16.xpose.msra.mxu0 0
    %332 = vmatprep.mubr.bf16.mxu0 0
    %333 = vmatmul.mubr.bf16.gmra.mxu0 %v295
    %v334 = vpop.f32.mrf.mxu0
    %v335 = vadd.f32 %v118, %v334
    %v336 = vpop.f32.mrf.mxu0
    %v337 = vpop.f32.mrf.mxu0
    %v338 = vpop.f32.mrf.mxu0
    %339 = vdwg.mxu0
    %341 = vrot.lane.b32.xlu0 %v235, 96
    %v342 = vpop.permute.xlu0 %341
    %v344 = vsel %vm244, %v235, 0
    %v347 = vsel %vm244, %v342, 0
    %349 = vmatprep.subr.bf16.mxu0 0
    %350 = vmatpush1.bf16.xpose.msra.mxu0 0
    %351 = vmatprep.subr.bf16.mxu0 0
    %352 = vmatpush1.bf16.xpose.msra.mxu0 0
    %353 = vmatprep.subr.bf16.mxu0 0
    %354 = vmatpush1.bf16.xpose.msra.mxu0 0
    %355 = vmatprep.subr.bf16.mxu0 0
    %356 = vmatpush1.bf16.xpose.msra.mxu0 0
    %357 = vmatprep.subr.bf16.mxu0 0
    %358 = vmatpush1.bf16.xpose.msra.mxu0 0
    %359 = vmatprep.subr.bf16.mxu0 0
    %360 = vmatpush1.bf16.xpose.msra.mxu0 0
    %361 = vmatprep.subr.bf16.mxu0 0
    %362 = vmatpush1.bf16.xpose.msra.mxu0 0
    %363 = vmatprep.subr.bf16.mxu0 0
    %364 = vmatpush1.bf16.xpose.msra.mxu0 %v347
    %365 = vmatprep.subr.bf16.mxu0 0
    %366 = vmatpush2.bf16.xpose.msra.mxu0 0
    %367 = vmatprep.subr.bf16.mxu0 0
    %368 = vmatpush2.bf16.xpose.msra.mxu0 0
    %369 = vmatprep.subr.bf16.mxu0 0
    %370 = vmatpush2.bf16.xpose.msra.mxu0 0
    %371 = vmatprep.subr.bf16.mxu0 0
    %372 = vmatpush2.bf16.xpose.msra.mxu0 0
    %373 = vmatprep.subr.bf16.mxu0 0
    %374 = vmatpush2.bf16.xpose.msra.mxu0 0
    %375 = vmatprep.subr.bf16.mxu0 0
    %376 = vmatpush2.bf16.xpose.msra.mxu0 0
    %377 = vmatprep.subr.bf16.mxu0 0
    %378 = vmatpush2.bf16.xpose.msra.mxu0 0
    %379 = vmatprep.subr.bf16.mxu0 0
    %380 = vmatpush2.bf16.xpose.msra.mxu0 0
    %381 = vmatprep.mubr.bf16.mxu0 0
    %382 = vmatmul.mubr.bf16.gmra.mxu0 %v344
    %v383 = vpop.f32.mrf.mxu0
    %v384 = vadd.f32 %v119, %v383
    %v385 = vpop.f32.mrf.mxu0
    %v386 = vpop.f32.mrf.mxu0
    %v387 = vpop.f32.mrf.mxu0
    %388 = vdwg.mxu0
    %390 = vrot.lane.b32.xlu0 %v236, 96
    %v391 = vpop.permute.xlu0 %390
    %v393 = vsel %vm244, %v236, 0
    %v396 = vsel %vm244, %v391, 0
    %398 = vmatprep.subr.bf16.mxu0 0
    %399 = vmatpush1.bf16.xpose.msra.mxu0 0
    %400 = vmatprep.subr.bf16.mxu0 0
    %401 = vmatpush1.bf16.xpose.msra.mxu0 0
    %402 = vmatprep.subr.bf16.mxu0 0
    %403 = vmatpush1.bf16.xpose.msra.mxu0 0
    %404 = vmatprep.subr.bf16.mxu0 0
    %405 = vmatpush1.bf16.xpose.msra.mxu0 0
    %406 = vmatprep.subr.bf16.mxu0 0
    %407 = vmatpush1.bf16.xpose.msra.mxu0 0
    %408 = vmatprep.subr.bf16.mxu0 0
    %409 = vmatpush1.bf16.xpose.msra.mxu0 0
    %410 = vmatprep.subr.bf16.mxu0 0
    %411 = vmatpush1.bf16.xpose.msra.mxu0 0
    %412 = vmatprep.subr.bf16.mxu0 0
    %413 = vmatpush1.bf16.xpose.msra.mxu0 %v396
    %414 = vmatprep.subr.bf16.mxu0 0
    %415 = vmatpush2.bf16.xpose.msra.mxu0 0
    %416 = vmatprep.subr.bf16.mxu0 0
    %417 = vmatpush2.bf16.xpose.msra.mxu0 0
    %418 = vmatprep.subr.bf16.mxu0 0
    %419 = vmatpush2.bf16.xpose.msra.mxu0 0
    %420 = vmatprep.subr.bf16.mxu0 0
    %421 = vmatpush2.bf16.xpose.msra.mxu0 0
    %422 = vmatprep.subr.bf16.mxu0 0
    %423 = vmatpush2.bf16.xpose.msra.mxu0 0
    %424 = vmatprep.subr.bf16.mxu0 0
    %425 = vmatpush2.bf16.xpose.msra.mxu0 0
    %426 = vmatprep.subr.bf16.mxu0 0
    %427 = vmatpush2.bf16.xpose.msra.mxu0 0
    %428 = vmatprep.subr.bf16.mxu0 0
    %429 = vmatpush2.bf16.xpose.msra.mxu0 0
    %430 = vmatprep.mubr.bf16.mxu0 0
    %431 = vmatmul.mubr.bf16.gmra.mxu0 %v393
    %v432 = vpop.f32.mrf.mxu0
    %v433 = vadd.f32 %v120, %v432
    %v434 = vpop.f32.mrf.mxu0
    %v435 = vpop.f32.mrf.mxu0
    %v436 = vpop.f32.mrf.mxu0
    %437 = vdwg.mxu0
    %439 = vrot.lane.b32.xlu0 %v237, 96
    %v440 = vpop.permute.xlu0 %439
    %v442 = vsel %vm244, %v237, 0
    %v445 = vsel %vm244, %v440, 0
    %447 = vmatprep.subr.bf16.mxu0 0
    %448 = vmatpush1.bf16.xpose.msra.mxu0 0
    %449 = vmatprep.subr.bf16.mxu0 0
    %450 = vmatpush1.bf16.xpose.msra.mxu0 0
    %451 = vmatprep.subr.bf16.mxu0 0
    %452 = vmatpush1.bf16.xpose.msra.mxu0 0
    %453 = vmatprep.subr.bf16.mxu0 0
    %454 = vmatpush1.bf16.xpose.msra.mxu0 0
    %455 = vmatprep.subr.bf16.mxu0 0
    %456 = vmatpush1.bf16.xpose.msra.mxu0 0
    %457 = vmatprep.subr.bf16.mxu0 0
    %458 = vmatpush1.bf16.xpose.msra.mxu0 0
    %459 = vmatprep.subr.bf16.mxu0 0
    %460 = vmatpush1.bf16.xpose.msra.mxu0 0
    %461 = vmatprep.subr.bf16.mxu0 0
    %462 = vmatpush1.bf16.xpose.msra.mxu0 %v445
    %463 = vmatprep.subr.bf16.mxu0 0
    %464 = vmatpush2.bf16.xpose.msra.mxu0 0
    %465 = vmatprep.subr.bf16.mxu0 0
    %466 = vmatpush2.bf16.xpose.msra.mxu0 0
    %467 = vmatprep.subr.bf16.mxu0 0
    %468 = vmatpush2.bf16.xpose.msra.mxu0 0
    %469 = vmatprep.subr.bf16.mxu0 0
    %470 = vmatpush2.bf16.xpose.msra.mxu0 0
    %471 = vmatprep.subr.bf16.mxu0 0
    %472 = vmatpush2.bf16.xpose.msra.mxu0 0
    %473 = vmatprep.subr.bf16.mxu0 0
    %474 = vmatpush2.bf16.xpose.msra.mxu0 0
    %475 = vmatprep.subr.bf16.mxu0 0
    %476 = vmatpush2.bf16.xpose.msra.mxu0 0
    %477 = vmatprep.subr.bf16.mxu0 0
    %478 = vmatpush2.bf16.xpose.msra.mxu0 0
    %479 = vmatprep.mubr.bf16.mxu0 0
    %480 = vmatmul.mubr.bf16.gmra.mxu0 %v442
    %v481 = vpop.f32.mrf.mxu0
    %v482 = vadd.f32 %v121, %v481
    %v483 = vpop.f32.mrf.mxu0
    %v484 = vpop.f32.mrf.mxu0
    %v485 = vpop.f32.mrf.mxu0
    %486 = vdwg.mxu0
    %488 = vrot.lane.b32.xlu0 %v238, 96
    %v489 = vpop.permute.xlu0 %488
    %v491 = vsel %vm244, %v238, 0
    %v494 = vsel %vm244, %v489, 0
    %496 = vmatprep.subr.bf16.mxu0 0
    %497 = vmatpush1.bf16.xpose.msra.mxu0 0
    %498 = vmatprep.subr.bf16.mxu0 0
    %499 = vmatpush1.bf16.xpose.msra.mxu0 0
    %500 = vmatprep.subr.bf16.mxu0 0
    %501 = vmatpush1.bf16.xpose.msra.mxu0 0
    %502 = vmatprep.subr.bf16.mxu0 0
    %503 = vmatpush1.bf16.xpose.msra.mxu0 0
    %504 = vmatprep.subr.bf16.mxu0 0
    %505 = vmatpush1.bf16.xpose.msra.mxu0 0
    %506 = vmatprep.subr.bf16.mxu0 0
    %507 = vmatpush1.bf16.xpose.msra.mxu0 0
    %508 = vmatprep.subr.bf16.mxu0 0
    %509 = vmatpush1.bf16.xpose.msra.mxu0 0
    %510 = vmatprep.subr.bf16.mxu0 0
    %511 = vmatpush1.bf16.xpose.msra.mxu0 %v494
    %512 = vmatprep.subr.bf16.mxu0 0
    %513 = vmatpush2.bf16.xpose.msra.mxu0 0
    %514 = vmatprep.subr.bf16.mxu0 0
    %515 = vmatpush2.bf16.xpose.msra.mxu0 0
    %516 = vmatprep.subr.bf16.mxu0 0
    %517 = vmatpush2.bf16.xpose.msra.mxu0 0
    %518 = vmatprep.subr.bf16.mxu0 0
    %519 = vmatpush2.bf16.xpose.msra.mxu0 0
    %520 = vmatprep.subr.bf16.mxu0 0
    %521 = vmatpush2.bf16.xpose.msra.mxu0 0
    %522 = vmatprep.subr.bf16.mxu0 0
    %523 = vmatpush2.bf16.xpose.msra.mxu0 0
    %524 = vmatprep.subr.bf16.mxu0 0
    %525 = vmatpush2.bf16.xpose.msra.mxu0 0
    %526 = vmatprep.subr.bf16.mxu0 0
    %527 = vmatpush2.bf16.xpose.msra.mxu0 0
    %528 = vmatprep.mubr.bf16.mxu0 0
    %529 = vmatmul.mubr.bf16.gmra.mxu0 %v491
    %v530 = vpop.f32.mrf.mxu0
    %v531 = vadd.f32 %v122, %v530
    %v532 = vpop.f32.mrf.mxu0
    %v533 = vpop.f32.mrf.mxu0
    %v534 = vpop.f32.mrf.mxu0
    %535 = vdwg.mxu0
    %537 = vrot.lane.b32.xlu0 %v239, 96
    %v538 = vpop.permute.xlu0 %537
    %v540 = vsel %vm244, %v239, 0
    %v543 = vsel %vm244, %v538, 0
    %545 = vmatprep.subr.bf16.mxu0 0
    %546 = vmatpush1.bf16.xpose.msra.mxu0 0
    %547 = vmatprep.subr.bf16.mxu0 0
    %548 = vmatpush1.bf16.xpose.msra.mxu0 0
    %549 = vmatprep.subr.bf16.mxu0 0
    %550 = vmatpush1.bf16.xpose.msra.mxu0 0
    %551 = vmatprep.subr.bf16.mxu0 0
    %552 = vmatpush1.bf16.xpose.msra.mxu0 0
    %553 = vmatprep.subr.bf16.mxu0 0
    %554 = vmatpush1.bf16.xpose.msra.mxu0 0
    %555 = vmatprep.subr.bf16.mxu0 0
    %556 = vmatpush1.bf16.xpose.msra.mxu0 0
    %557 = vmatprep.subr.bf16.mxu0 0
    %558 = vmatpush1.bf16.xpose.msra.mxu0 0
    %559 = vmatprep.subr.bf16.mxu0 0
    %560 = vmatpush1.bf16.xpose.msra.mxu0 %v543
    %561 = vmatprep.subr.bf16.mxu0 0
    %562 = vmatpush2.bf16.xpose.msra.mxu0 0
    %563 = vmatprep.subr.bf16.mxu0 0
    %564 = vmatpush2.bf16.xpose.msra.mxu0 0
    %565 = vmatprep.subr.bf16.mxu0 0
    %566 = vmatpush2.bf16.xpose.msra.mxu0 0
    %567 = vmatprep.subr.bf16.mxu0 0
    %568 = vmatpush2.bf16.xpose.msra.mxu0 0
    %569 = vmatprep.subr.bf16.mxu0 0
    %570 = vmatpush2.bf16.xpose.msra.mxu0 0
    %571 = vmatprep.subr.bf16.mxu0 0
    %572 = vmatpush2.bf16.xpose.msra.mxu0 0
    %573 = vmatprep.subr.bf16.mxu0 0
    %574 = vmatpush2.bf16.xpose.msra.mxu0 0
    %575 = vmatprep.subr.bf16.mxu0 0
    %576 = vmatpush2.bf16.xpose.msra.mxu0 0
    %577 = vmatprep.mubr.bf16.mxu0 0
    %578 = vmatmul.mubr.bf16.gmra.mxu0 %v540
    %v579 = vpop.f32.mrf.mxu0
    %v580 = vadd.f32 %v123, %v579
    %v581 = vpop.f32.mrf.mxu0
    %v582 = vpop.f32.mrf.mxu0
    %v583 = vpop.f32.mrf.mxu0
    %584 = vdwg.mxu0
    %586 = vrot.lane.b32.xlu0 %v240, 96
    %v587 = vpop.permute.xlu0 %586
    %v589 = vsel %vm244, %v240, 0
    %v592 = vsel %vm244, %v587, 0
    %594 = vmatprep.subr.bf16.mxu0 0
    %595 = vmatpush1.bf16.xpose.msra.mxu0 0
    %596 = vmatprep.subr.bf16.mxu0 0
    %597 = vmatpush1.bf16.xpose.msra.mxu0 0
    %598 = vmatprep.subr.bf16.mxu0 0
    %599 = vmatpush1.bf16.xpose.msra.mxu0 0
    %600 = vmatprep.subr.bf16.mxu0 0
    %601 = vmatpush1.bf16.xpose.msra.mxu0 0
    %602 = vmatprep.subr.bf16.mxu0 0
    %603 = vmatpush1.bf16.xpose.msra.mxu0 0
    %604 = vmatprep.subr.bf16.mxu0 0
    %605 = vmatpush1.bf16.xpose.msra.mxu0 0
    %606 = vmatprep.subr.bf16.mxu0 0
    %607 = vmatpush1.bf16.xpose.msra.mxu0 0
    %608 = vmatprep.subr.bf16.mxu0 0
    %609 = vmatpush1.bf16.xpose.msra.mxu0 %v592
    %610 = vmatprep.subr.bf16.mxu0 0
    %611 = vmatpush2.bf16.xpose.msra.mxu0 0
    %612 = vmatprep.subr.bf16.mxu0 0
    %613 = vmatpush2.bf16.xpose.msra.mxu0 0
    %614 = vmatprep.subr.bf16.mxu0 0
    %615 = vmatpush2.bf16.xpose.msra.mxu0 0
    %616 = vmatprep.subr.bf16.mxu0 0
    %617 = vmatpush2.bf16.xpose.msra.mxu0 0
    %618 = vmatprep.subr.bf16.mxu0 0
    %619 = vmatpush2.bf16.xpose.msra.mxu0 0
    %620 = vmatprep.subr.bf16.mxu0 0
    %621 = vmatpush2.bf16.xpose.msra.mxu0 0
    %622 = vmatprep.subr.bf16.mxu0 0
    %623 = vmatpush2.bf16.xpose.msra.mxu0 0
    %624 = vmatprep.subr.bf16.mxu0 0
    %625 = vmatpush2.bf16.xpose.msra.mxu0 0
    %626 = vmatprep.mubr.bf16.mxu0 0
    %627 = vmatmul.mubr.bf16.gmra.mxu0 %v589
    %v628 = vpop.f32.mrf.mxu0
    %v629 = vadd.f32 %v124, %v628
    %v630 = vpop.f32.mrf.mxu0
    %v631 = vpop.f32.mrf.mxu0
    %v632 = vpop.f32.mrf.mxu0
    %633 = vdwg.mxu0
    %v634 = vsel %vm244, %v286, -inf
    %635 = vmax.xlane.f32.xlu0 %v634
    %v636 = vpop.xlane.xlu0 %635
    %v637 = vsel %vm244, %v335, -inf
    %638 = vmax.xlane.f32.xlu0 %v637
    %v639 = vpop.xlane.xlu0 %638
    %v640 = vsel %vm244, %v384, -inf
    %641 = vmax.xlane.f32.xlu0 %v640
    %v642 = vpop.xlane.xlu0 %641
    %v643 = vsel %vm244, %v433, -inf
    %644 = vmax.xlane.f32.xlu0 %v643
    %v645 = vpop.xlane.xlu0 %644
    %v646 = vsel %vm244, %v482, -inf
    %647 = vmax.xlane.f32.xlu0 %v646
    %v648 = vpop.xlane.xlu0 %647
    %v649 = vsel %vm244, %v531, -inf
    %650 = vmax.xlane.f32.xlu0 %v649
    %v651 = vpop.xlane.xlu0 %650
    %v652 = vsel %vm244, %v580, -inf
    %653 = vmax.xlane.f32.xlu0 %v652
    %v654 = vpop.xlane.xlu0 %653
    %v655 = vsel %vm244, %v629, -inf
    %656 = vmax.xlane.f32.xlu0 %v655
    %v657 = vpop.xlane.xlu0 %656
    %v658 = vsub.f32 %v286, %v636
    %v659 = vsub.f32 %v335, %v639
    %v660 = vsub.f32 %v384, %v642
    %v661 = vsub.f32 %v433, %v645
    %v662 = vsub.f32 %v482, %v648
    %v663 = vsub.f32 %v531, %v651
    %v664 = vsub.f32 %v580, %v654
    %v665 = vsub.f32 %v629, %v657
    %v666 = vmul.f32 %v658, 1.442695
    %v667 = vpow.pop %v666
    %v668 = vmul.f32 %v659, 1.442695
    %v669 = vpow.pop %v668
    %v670 = vmul.f32 %v660, 1.442695
    %v671 = vpow.pop %v670
    %v672 = vmul.f32 %v661, 1.442695
    %v673 = vpow.pop %v672
    %v674 = vmul.f32 %v662, 1.442695
    %v675 = vpow.pop %v674
    %v676 = vmul.f32 %v663, 1.442695
    %v677 = vpow.pop %v676
    %v678 = vmul.f32 %v664, 1.442695
    %v679 = vpow.pop %v678
    %v680 = vmul.f32 %v665, 1.442695
    %v681 = vpow.pop %v680
    %v682 = vsel %vm244, %v667, 0.0
    %683 = vadd.xlane.f32.xlu0 %v682
    %v684 = vpop.xlane.xlu0 %683
    %v685 = vsel %vm244, %v669, 0.0
    %686 = vadd.xlane.f32.xlu0 %v685
    %v687 = vpop.xlane.xlu0 %686
    %v688 = vsel %vm244, %v671, 0.0
    %689 = vadd.xlane.f32.xlu0 %v688
    %v690 = vpop.xlane.xlu0 %689
    %v691 = vsel %vm244, %v673, 0.0
    %692 = vadd.xlane.f32.xlu0 %v691
    %v693 = vpop.xlane.xlu0 %692
    %v694 = vsel %vm244, %v675, 0.0
    %695 = vadd.xlane.f32.xlu0 %v694
    %v696 = vpop.xlane.xlu0 %695
    %v697 = vsel %vm244, %v677, 0.0
    %698 = vadd.xlane.f32.xlu0 %v697
    %v699 = vpop.xlane.xlu0 %698
    %v700 = vsel %vm244, %v679, 0.0
    %701 = vadd.xlane.f32.xlu0 %v700
    %v702 = vpop.xlane.xlu0 %701
    %v703 = vsel %vm244, %v681, 0.0
    %704 = vadd.xlane.f32.xlu0 %v703
    %v705 = vpop.xlane.xlu0 %704
    %v706 = vrcp.pop %v684
    %v707 = vrcp.pop %v687
    %v708 = vrcp.pop %v690
    %v709 = vrcp.pop %v693
    %v710 = vrcp.pop %v696
    %v711 = vrcp.pop %v699
    %v712 = vrcp.pop %v702
    %v713 = vrcp.pop %v705
    %v714 = vmul.f32 %v667, %v706
    %v715 = vmul.f32 %v669, %v707
    %v716 = vmul.f32 %v671, %v708
    %v717 = vmul.f32 %v673, %v709
    %v718 = vmul.f32 %v675, %v710
    %v719 = vmul.f32 %v677, %v711
    %v720 = vmul.f32 %v679, %v712
    %v721 = vmul.f32 %v681, %v713
    %v722 = vpack.c.bf16 %v714, %v714
    %v723 = vpack.c.bf16 %v715, %v715
    %v724 = vpack.c.bf16 %v716, %v716
    %v725 = vpack.c.bf16 %v717, %v717
    %v726 = vpack.c.bf16 %v718, %v718
    %v727 = vpack.c.bf16 %v719, %v719
    %v728 = vpack.c.bf16 %v720, %v720
    %v729 = vpack.c.bf16 %v721, %v721
    %730 = vrot.lane.b32.xlu0 %v233, 64
    %v731 = vpop.permute.xlu0 %730
    %v733 = vsel %vm244, %v722, 0
    %vm735 = vcmask 1043456
    %v737 = vsel %vm735, %v731, 0
    %739 = vmatprep.subr.bf16.mxu0 0
    %740 = vmatpush1.bf16.msra.mxu0 0
    %741 = vmatprep.subr.bf16.mxu0 0
    %742 = vmatpush1.bf16.msra.mxu0 0
    %743 = vmatprep.subr.bf16.mxu0 0
    %744 = vmatpush1.bf16.msra.mxu0 0
    %745 = vmatprep.subr.bf16.mxu0 0
    %746 = vmatpush1.bf16.msra.mxu0 0
    %747 = vmatprep.subr.bf16.mxu0 0
    %748 = vmatpush1.bf16.msra.mxu0 0
    %749 = vmatprep.subr.bf16.mxu0 0
    %750 = vmatpush1.bf16.msra.mxu0 0
    %751 = vmatprep.subr.bf16.mxu0 0
    %752 = vmatpush1.bf16.msra.mxu0 0
    %753 = vmatprep.subr.bf16.mxu0 0
    %754 = vmatpush1.bf16.msra.mxu0 %v737
    %755 = vmatprep.subr.bf16.mxu0 0
    %756 = vmatpush2.bf16.msra.mxu0 0
    %757 = vmatprep.subr.bf16.mxu0 0
    %758 = vmatpush2.bf16.msra.mxu0 0
    %759 = vmatprep.subr.bf16.mxu0 0
    %760 = vmatpush2.bf16.msra.mxu0 0
    %761 = vmatprep.subr.bf16.mxu0 0
    %762 = vmatpush2.bf16.msra.mxu0 0
    %763 = vmatprep.subr.bf16.mxu0 0
    %764 = vmatpush2.bf16.msra.mxu0 0
    %765 = vmatprep.subr.bf16.mxu0 0
    %766 = vmatpush2.bf16.msra.mxu0 0
    %767 = vmatprep.subr.bf16.mxu0 0
    %768 = vmatpush2.bf16.msra.mxu0 0
    %769 = vmatprep.subr.bf16.mxu0 0
    %770 = vmatpush2.bf16.msra.mxu0 0
    %771 = vmatprep.mubr.bf16.mxu0 0
    %772 = vmatmul.mubr.bf16.gmra.mxu0 %v733
    %v773 = vpop.f32.mrf.mxu0
    %v774 = vadd.f32 0.0, %v773
    %v775 = vpop.f32.mrf.mxu0
    %v776 = vpop.f32.mrf.mxu0
    %v777 = vpop.f32.mrf.mxu0
    %778 = vdwg.mxu0
    %779 = vrot.lane.b32.xlu0 %v234, 64
    %v780 = vpop.permute.xlu0 %779
    %v782 = vsel %vm244, %v723, 0
    %v785 = vsel %vm735, %v780, 0
    %787 = vmatprep.subr.bf16.mxu0 0
    %788 = vmatpush1.bf16.msra.mxu0 0
    %789 = vmatprep.subr.bf16.mxu0 0
    %790 = vmatpush1.bf16.msra.mxu0 0
    %791 = vmatprep.subr.bf16.mxu0 0
    %792 = vmatpush1.bf16.msra.mxu0 0
    %793 = vmatprep.subr.bf16.mxu0 0
    %794 = vmatpush1.bf16.msra.mxu0 0
    %795 = vmatprep.subr.bf16.mxu0 0
    %796 = vmatpush1.bf16.msra.mxu0 0
    %797 = vmatprep.subr.bf16.mxu0 0
    %798 = vmatpush1.bf16.msra.mxu0 0
    %799 = vmatprep.subr.bf16.mxu0 0
    %800 = vmatpush1.bf16.msra.mxu0 0
    %801 = vmatprep.subr.bf16.mxu0 0
    %802 = vmatpush1.bf16.msra.mxu0 %v785
    %803 = vmatprep.subr.bf16.mxu0 0
    %804 = vmatpush2.bf16.msra.mxu0 0
    %805 = vmatprep.subr.bf16.mxu0 0
    %806 = vmatpush2.bf16.msra.mxu0 0
    %807 = vmatprep.subr.bf16.mxu0 0
    %808 = vmatpush2.bf16.msra.mxu0 0
    %809 = vmatprep.subr.bf16.mxu0 0
    %810 = vmatpush2.bf16.msra.mxu0 0
    %811 = vmatprep.subr.bf16.mxu0 0
    %812 = vmatpush2.bf16.msra.mxu0 0
    %813 = vmatprep.subr.bf16.mxu0 0
    %814 = vmatpush2.bf16.msra.mxu0 0
    %815 = vmatprep.subr.bf16.mxu0 0
    %816 = vmatpush2.bf16.msra.mxu0 0
    %817 = vmatprep.subr.bf16.mxu0 0
    %818 = vmatpush2.bf16.msra.mxu0 0
    %819 = vmatprep.mubr.bf16.mxu0 0
    %820 = vmatmul.mubr.bf16.gmra.mxu0 %v782
    %v821 = vpop.f32.mrf.mxu0
    %v822 = vadd.f32 0.0, %v821
    %v823 = vpop.f32.mrf.mxu0
    %v824 = vpop.f32.mrf.mxu0
    %v825 = vpop.f32.mrf.mxu0
    %826 = vdwg.mxu0
    %827 = vrot.lane.b32.xlu0 %v235, 64
    %v828 = vpop.permute.xlu0 %827
    %v830 = vsel %vm244, %v724, 0
    %v833 = vsel %vm735, %v828, 0
    %835 = vmatprep.subr.bf16.mxu0 0
    %836 = vmatpush1.bf16.msra.mxu0 0
    %837 = vmatprep.subr.bf16.mxu0 0
    %838 = vmatpush1.bf16.msra.mxu0 0
    %839 = vmatprep.subr.bf16.mxu0 0
    %840 = vmatpush1.bf16.msra.mxu0 0
    %841 = vmatprep.subr.bf16.mxu0 0
    %842 = vmatpush1.bf16.msra.mxu0 0
    %843 = vmatprep.subr.bf16.mxu0 0
    %844 = vmatpush1.bf16.msra.mxu0 0
    %845 = vmatprep.subr.bf16.mxu0 0
    %846 = vmatpush1.bf16.msra.mxu0 0
    %847 = vmatprep.subr.bf16.mxu0 0
    %848 = vmatpush1.bf16.msra.mxu0 0
    %849 = vmatprep.subr.bf16.mxu0 0
    %850 = vmatpush1.bf16.msra.mxu0 %v833
    %851 = vmatprep.subr.bf16.mxu0 0
    %852 = vmatpush2.bf16.msra.mxu0 0
    %853 = vmatprep.subr.bf16.mxu0 0
    %854 = vmatpush2.bf16.msra.mxu0 0
    %855 = vmatprep.subr.bf16.mxu0 0
    %856 = vmatpush2.bf16.msra.mxu0 0
    %857 = vmatprep.subr.bf16.mxu0 0
    %858 = vmatpush2.bf16.msra.mxu0 0
    %859 = vmatprep.subr.bf16.mxu0 0
    %860 = vmatpush2.bf16.msra.mxu0 0
    %861 = vmatprep.subr.bf16.mxu0 0
    %862 = vmatpush2.bf16.msra.mxu0 0
    %863 = vmatprep.subr.bf16.mxu0 0
    %864 = vmatpush2.bf16.msra.mxu0 0
    %865 = vmatprep.subr.bf16.mxu0 0
    %866 = vmatpush2.bf16.msra.mxu0 0
    %867 = vmatprep.mubr.bf16.mxu0 0
    %868 = vmatmul.mubr.bf16.gmra.mxu0 %v830
    %v869 = vpop.f32.mrf.mxu0
    %v870 = vadd.f32 0.0, %v869
    %v871 = vpop.f32.mrf.mxu0
    %v872 = vpop.f32.mrf.mxu0
    %v873 = vpop.f32.mrf.mxu0
    %874 = vdwg.mxu0
    %875 = vrot.lane.b32.xlu0 %v236, 64
    %v876 = vpop.permute.xlu0 %875
    %v878 = vsel %vm244, %v725, 0
    %v881 = vsel %vm735, %v876, 0
    %883 = vmatprep.subr.bf16.mxu0 0
    %884 = vmatpush1.bf16.msra.mxu0 0
    %885 = vmatprep.subr.bf16.mxu0 0
    %886 = vmatpush1.bf16.msra.mxu0 0
    %887 = vmatprep.subr.bf16.mxu0 0
    %888 = vmatpush1.bf16.msra.mxu0 0
    %889 = vmatprep.subr.bf16.mxu0 0
    %890 = vmatpush1.bf16.msra.mxu0 0
    %891 = vmatprep.subr.bf16.mxu0 0
    %892 = vmatpush1.bf16.msra.mxu0 0
    %893 = vmatprep.subr.bf16.mxu0 0
    %894 = vmatpush1.bf16.msra.mxu0 0
    %895 = vmatprep.subr.bf16.mxu0 0
    %896 = vmatpush1.bf16.msra.mxu0 0
    %897 = vmatprep.subr.bf16.mxu0 0
    %898 = vmatpush1.bf16.msra.mxu0 %v881
    %899 = vmatprep.subr.bf16.mxu0 0
    %900 = vmatpush2.bf16.msra.mxu0 0
    %901 = vmatprep.subr.bf16.mxu0 0
    %902 = vmatpush2.bf16.msra.mxu0 0
    %903 = vmatprep.subr.bf16.mxu0 0
    %904 = vmatpush2.bf16.msra.mxu0 0
    %905 = vmatprep.subr.bf16.mxu0 0
    %906 = vmatpush2.bf16.msra.mxu0 0
    %907 = vmatprep.subr.bf16.mxu0 0
    %908 = vmatpush2.bf16.msra.mxu0 0
    %909 = vmatprep.subr.bf16.mxu0 0
    %910 = vmatpush2.bf16.msra.mxu0 0
    %911 = vmatprep.subr.bf16.mxu0 0
    %912 = vmatpush2.bf16.msra.mxu0 0
    %913 = vmatprep.subr.bf16.mxu0 0
    %914 = vmatpush2.bf16.msra.mxu0 0
    %915 = vmatprep.mubr.bf16.mxu0 0
    %916 = vmatmul.mubr.bf16.gmra.mxu0 %v878
    %v917 = vpop.f32.mrf.mxu0
    %v918 = vadd.f32 0.0, %v917
    %v919 = vpop.f32.mrf.mxu0
    %v920 = vpop.f32.mrf.mxu0
    %v921 = vpop.f32.mrf.mxu0
    %922 = vdwg.mxu0
    %923 = vrot.lane.b32.xlu0 %v237, 64
    %v924 = vpop.permute.xlu0 %923
    %v926 = vsel %vm244, %v726, 0
    %v929 = vsel %vm735, %v924, 0
    %931 = vmatprep.subr.bf16.mxu0 0
    %932 = vmatpush1.bf16.msra.mxu0 0
    %933 = vmatprep.subr.bf16.mxu0 0
    %934 = vmatpush1.bf16.msra.mxu0 0
    %935 = vmatprep.subr.bf16.mxu0 0
    %936 = vmatpush1.bf16.msra.mxu0 0
    %937 = vmatprep.subr.bf16.mxu0 0
    %938 = vmatpush1.bf16.msra.mxu0 0
    %939 = vmatprep.subr.bf16.mxu0 0
    %940 = vmatpush1.bf16.msra.mxu0 0
    %941 = vmatprep.subr.bf16.mxu0 0
    %942 = vmatpush1.bf16.msra.mxu0 0
    %943 = vmatprep.subr.bf16.mxu0 0
    %944 = vmatpush1.bf16.msra.mxu0 0
    %945 = vmatprep.subr.bf16.mxu0 0
    %946 = vmatpush1.bf16.msra.mxu0 %v929
    %947 = vmatprep.subr.bf16.mxu0 0
    %948 = vmatpush2.bf16.msra.mxu0 0
    %949 = vmatprep.subr.bf16.mxu0 0
    %950 = vmatpush2.bf16.msra.mxu0 0
    %951 = vmatprep.subr.bf16.mxu0 0
    %952 = vmatpush2.bf16.msra.mxu0 0
    %953 = vmatprep.subr.bf16.mxu0 0
    %954 = vmatpush2.bf16.msra.mxu0 0
    %955 = vmatprep.subr.bf16.mxu0 0
    %956 = vmatpush2.bf16.msra.mxu0 0
    %957 = vmatprep.subr.bf16.mxu0 0
    %958 = vmatpush2.bf16.msra.mxu0 0
    %959 = vmatprep.subr.bf16.mxu0 0
    %960 = vmatpush2.bf16.msra.mxu0 0
    %961 = vmatprep.subr.bf16.mxu0 0
    %962 = vmatpush2.bf16.msra.mxu0 0
    %963 = vmatprep.mubr.bf16.mxu0 0
    %964 = vmatmul.mubr.bf16.gmra.mxu0 %v926
    %v965 = vpop.f32.mrf.mxu0
    %v966 = vadd.f32 0.0, %v965
    %v967 = vpop.f32.mrf.mxu0
    %v968 = vpop.f32.mrf.mxu0
    %v969 = vpop.f32.mrf.mxu0
    %970 = vdwg.mxu0
    %971 = vrot.lane.b32.xlu0 %v238, 64
    %v972 = vpop.permute.xlu0 %971
    %v974 = vsel %vm244, %v727, 0
    %v977 = vsel %vm735, %v972, 0
    %979 = vmatprep.subr.bf16.mxu0 0
    %980 = vmatpush1.bf16.msra.mxu0 0
    %981 = vmatprep.subr.bf16.mxu0 0
    %982 = vmatpush1.bf16.msra.mxu0 0
    %983 = vmatprep.subr.bf16.mxu0 0
    %984 = vmatpush1.bf16.msra.mxu0 0
    %985 = vmatprep.subr.bf16.mxu0 0
    %986 = vmatpush1.bf16.msra.mxu0 0
    %987 = vmatprep.subr.bf16.mxu0 0
    %988 = vmatpush1.bf16.msra.mxu0 0
    %989 = vmatprep.subr.bf16.mxu0 0
    %990 = vmatpush1.bf16.msra.mxu0 0
    %991 = vmatprep.subr.bf16.mxu0 0
    %992 = vmatpush1.bf16.msra.mxu0 0
    %993 = vmatprep.subr.bf16.mxu0 0
    %994 = vmatpush1.bf16.msra.mxu0 %v977
    %995 = vmatprep.subr.bf16.mxu0 0
    %996 = vmatpush2.bf16.msra.mxu0 0
    %997 = vmatprep.subr.bf16.mxu0 0
    %998 = vmatpush2.bf16.msra.mxu0 0
    %999 = vmatprep.subr.bf16.mxu0 0
    %1000 = vmatpush2.bf16.msra.mxu0 0
    %1001 = vmatprep.subr.bf16.mxu0 0
    %1002 = vmatpush2.bf16.msra.mxu0 0
    %1003 = vmatprep.subr.bf16.mxu0 0
    %1004 = vmatpush2.bf16.msra.mxu0 0
    %1005 = vmatprep.subr.bf16.mxu0 0
    %1006 = vmatpush2.bf16.msra.mxu0 0
    %1007 = vmatprep.subr.bf16.mxu0 0
    %1008 = vmatpush2.bf16.msra.mxu0 0
    %1009 = vmatprep.subr.bf16.mxu0 0
    %1010 = vmatpush2.bf16.msra.mxu0 0
    %1011 = vmatprep.mubr.bf16.mxu0 0
    %1012 = vmatmul.mubr.bf16.gmra.mxu0 %v974
    %v1013 = vpop.f32.mrf.mxu0
    %v1014 = vadd.f32 0.0, %v1013
    %v1015 = vpop.f32.mrf.mxu0
    %v1016 = vpop.f32.mrf.mxu0
    %v1017 = vpop.f32.mrf.mxu0
    %1018 = vdwg.mxu0
    %1019 = vrot.lane.b32.xlu0 %v239, 64
    %v1020 = vpop.permute.xlu0 %1019
    %v1022 = vsel %vm244, %v728, 0
    %v1025 = vsel %vm735, %v1020, 0
    %1027 = vmatprep.subr.bf16.mxu0 0
    %1028 = vmatpush1.bf16.msra.mxu0 0
    %1029 = vmatprep.subr.bf16.mxu0 0
    %1030 = vmatpush1.bf16.msra.mxu0 0
    %1031 = vmatprep.subr.bf16.mxu0 0
    %1032 = vmatpush1.bf16.msra.mxu0 0
    %1033 = vmatprep.subr.bf16.mxu0 0
    %1034 = vmatpush1.bf16.msra.mxu0 0
    %1035 = vmatprep.subr.bf16.mxu0 0
    %1036 = vmatpush1.bf16.msra.mxu0 0
    %1037 = vmatprep.subr.bf16.mxu0 0
    %1038 = vmatpush1.bf16.msra.mxu0 0
    %1039 = vmatprep.subr.bf16.mxu0 0
    %1040 = vmatpush1.bf16.msra.mxu0 0
    %1041 = vmatprep.subr.bf16.mxu0 0
    %1042 = vmatpush1.bf16.msra.mxu0 %v1025
    %1043 = vmatprep.subr.bf16.mxu0 0
    %1044 = vmatpush2.bf16.msra.mxu0 0
    %1045 = vmatprep.subr.bf16.mxu0 0
    %1046 = vmatpush2.bf16.msra.mxu0 0
    %1047 = vmatprep.subr.bf16.mxu0 0
    %1048 = vmatpush2.bf16.msra.mxu0 0
    %1049 = vmatprep.subr.bf16.mxu0 0
    %1050 = vmatpush2.bf16.msra.mxu0 0
    %1051 = vmatprep.subr.bf16.mxu0 0
    %1052 = vmatpush2.bf16.msra.mxu0 0
    %1053 = vmatprep.subr.bf16.mxu0 0
    %1054 = vmatpush2.bf16.msra.mxu0 0
    %1055 = vmatprep.subr.bf16.mxu0 0
    %1056 = vmatpush2.bf16.msra.mxu0 0
    %1057 = vmatprep.subr.bf16.mxu0 0
    %1058 = vmatpush2.bf16.msra.mxu0 0
    %1059 = vmatprep.mubr.bf16.mxu0 0
    %1060 = vmatmul.mubr.bf16.gmra.mxu0 %v1022
    %v1061 = vpop.f32.mrf.mxu0
    %v1062 = vadd.f32 0.0, %v1061
    %v1063 = vpop.f32.mrf.mxu0
    %v1064 = vpop.f32.mrf.mxu0
    %v1065 = vpop.f32.mrf.mxu0
    %1066 = vdwg.mxu0
    %1067 = vrot.lane.b32.xlu0 %v240, 64
    %v1068 = vpop.permute.xlu0 %1067
    %v1070 = vsel %vm244, %v729, 0
    %v1073 = vsel %vm735, %v1068, 0
    %1075 = vmatprep.subr.bf16.mxu0 0
    %1076 = vmatpush1.bf16.msra.mxu0 0
    %1077 = vmatprep.subr.bf16.mxu0 0
    %1078 = vmatpush1.bf16.msra.mxu0 0
    %1079 = vmatprep.subr.bf16.mxu0 0
    %1080 = vmatpush1.bf16.msra.mxu0 0
    %1081 = vmatprep.subr.bf16.mxu0 0
    %1082 = vmatpush1.bf16.msra.mxu0 0
    %1083 = vmatprep.subr.bf16.mxu0 0
    %1084 = vmatpush1.bf16.msra.mxu0 0
    %1085 = vmatprep.subr.bf16.mxu0 0
    %1086 = vmatpush1.bf16.msra.mxu0 0
    %1087 = vmatprep.subr.bf16.mxu0 0
    %1088 = vmatpush1.bf16.msra.mxu0 0
    %1089 = vmatprep.subr.bf16.mxu0 0
    %1090 = vmatpush1.bf16.msra.mxu0 %v1073
    %1091 = vmatprep.subr.bf16.mxu0 0
    %1092 = vmatpush2.bf16.msra.mxu0 0
    %1093 = vmatprep.subr.bf16.mxu0 0
    %1094 = vmatpush2.bf16.msra.mxu0 0
    %1095 = vmatprep.subr.bf16.mxu0 0
    %1096 = vmatpush2.bf16.msra.mxu0 0
    %1097 = vmatprep.subr.bf16.mxu0 0
    %1098 = vmatpush2.bf16.msra.mxu0 0
    %1099 = vmatprep.subr.bf16.mxu0 0
    %1100 = vmatpush2.bf16.msra.mxu0 0
    %1101 = vmatprep.subr.bf16.mxu0 0
    %1102 = vmatpush2.bf16.msra.mxu0 0
    %1103 = vmatprep.subr.bf16.mxu0 0
    %1104 = vmatpush2.bf16.msra.mxu0 0
    %1105 = vmatprep.subr.bf16.mxu0 0
    %1106 = vmatpush2.bf16.msra.mxu0 0
    %1107 = vmatprep.mubr.bf16.mxu0 0
    %1108 = vmatmul.mubr.bf16.gmra.mxu0 %v1070
    %v1109 = vpop.f32.mrf.mxu0
    %v1110 = vadd.f32 0.0, %v1109
    %v1111 = vpop.f32.mrf.mxu0
    %v1112 = vpop.f32.mrf.mxu0
    %v1113 = vpop.f32.mrf.mxu0
    %1114 = vdwg.mxu0
    %1117 = vrot.lane.b32.xlu0 %v870, 8
    %v1118 = vpop.permute.xlu0 %1117
    %1119 = vrot.lane.b32.xlu0 %v918, 8
    %v1120 = vpop.permute.xlu0 %1119
    %1125 = vrot.lane.b32.xlu0 %v966, 16
    %v1126 = vpop.permute.xlu0 %1125
    %1127 = vrot.lane.b32.xlu0 %v1014, 16
    %v1128 = vpop.permute.xlu0 %1127
    %1133 = vrot.lane.b32.xlu0 %v1062, 24
    %v1134 = vpop.permute.xlu0 %1133
    %1135 = vrot.lane.b32.xlu0 %v1110, 24
    %v1136 = vpop.permute.xlu0 %1135
    %v1139 = vsel %vm244, %v774, %v1118
    %v1140 = vsel %vm244, %v822, %v1120
    %vm1141 = vcmask 130048
    %v1142 = vsel %vm1141, %v1139, %v1126
    %v1143 = vsel %vm1141, %v1140, %v1128
    %vm1144 = vcmask 195584
    %v1145 = vsel %vm1144, %v1142, %v1134
    %v1146 = vsel %vm1144, %v1143, %v1136
    %v1147 = vpack.c.bf16 %v1146, %v1145
    %v1148 = vld [vmem:[%s5] sm:$0xf]
    %v1149 = vld [vmem:[%s5 + $0x4] sm:$0xf]
    %v1150 = vld [vmem:[%s5 + $0x8] sm:$0xf]
    %v1151 = vld [vmem:[%s5 + $0xc] sm:$0xf]
    %v1156 = vunpack.c.l.b16 %v1148
    %v1157 = vunpack.c.l.b16 %v1149
    %v1158 = vunpack.c.l.b16 %v1150
    %v1159 = vunpack.c.l.b16 %v1151
    %v1160 = vpack.c.b16 %v1157, %v1156
    %v1161 = vpack.c.b16 %v1159, %v1158
    %v1165 = vsel %vm128, %v1147, 0
    %1167 = vmatprep.subr.bf16.mxu0 0
    %1168 = vmatpush1.bf16.msra.mxu0 0
    %1169 = vmatprep.subr.bf16.mxu0 0
    %1170 = vmatpush1.bf16.msra.mxu0 0
    %1171 = vmatprep.subr.bf16.mxu0 0
    %1172 = vmatpush1.bf16.msra.mxu0 0
    %1173 = vmatprep.subr.bf16.mxu0 0
    %1174 = vmatpush1.bf16.msra.mxu0 0
    %1175 = vmatprep.subr.bf16.mxu0 0
    %1176 = vmatpush1.bf16.msra.mxu0 0
    %1177 = vmatprep.subr.bf16.mxu0 0
    %1178 = vmatpush1.bf16.msra.mxu0 0
    %1179 = vmatprep.subr.bf16.mxu0 0
    %1180 = vmatpush1.bf16.msra.mxu0 %v1161
    %1181 = vmatprep.subr.bf16.mxu0 0
    %1182 = vmatpush1.bf16.msra.mxu0 %v1160
    %1183 = vmatprep.subr.bf16.mxu0 0
    %1184 = vmatpush2.bf16.msra.mxu0 0
    %1185 = vmatprep.subr.bf16.mxu0 0
    %1186 = vmatpush2.bf16.msra.mxu0 0
    %1187 = vmatprep.subr.bf16.mxu0 0
    %1188 = vmatpush2.bf16.msra.mxu0 0
    %1189 = vmatprep.subr.bf16.mxu0 0
    %1190 = vmatpush2.bf16.msra.mxu0 0
    %1191 = vmatprep.subr.bf16.mxu0 0
    %1192 = vmatpush2.bf16.msra.mxu0 0
    %1193 = vmatprep.subr.bf16.mxu0 0
    %1194 = vmatpush2.bf16.msra.mxu0 0
    %1195 = vmatprep.subr.bf16.mxu0 0
    %1196 = vmatpush2.bf16.msra.mxu0 0
    %1197 = vmatprep.subr.bf16.mxu0 0
    %1198 = vmatpush2.bf16.msra.mxu0 0
    %1199 = vmatprep.mubr.bf16.mxu0 0
    %1200 = vmatmul.mubr.bf16.gmra.mxu0 %v1165
    %v1201 = vpop.f32.mrf.mxu0
    %v1202 = vadd.f32 0.0, %v1201
    %v1203 = vpop.f32.mrf.mxu0
    %v1204 = vpop.f32.mrf.mxu0
    %v1205 = vadd.f32 0.0, %v1204
    %v1206 = vpop.f32.mrf.mxu0
    %1207 = vdwg.mxu0
    %v1208 = vadd.f32 %v77, %v1202
    %v1209 = vadd.f32 %v78, %v1205
    %v1210 = vld [vmem:[%s6] sm:$0x1]
    %v1211 = vmul.f32 %v1208, %v1208
    %v1212 = vmul.f32 %v1209, %v1209
    %v1213 = vsel %vm128, %v1211, 0.0
    %1214 = vadd.xlane.f32.xlu0 %v1213
    %v1215 = vpop.xlane.xlu0 %1214
    %v1216 = vsel %vm128, %v1212, 0.0
    %1217 = vadd.xlane.f32.xlu0 %v1216
    %v1218 = vpop.xlane.xlu0 %1217
    %v1219 = vmul.f32 %v1215, %v135
    %v1220 = vmul.f32 %v1218, %v135
    %v1221 = vadd.f32 %v1219, 1e-06
    %v1222 = vadd.f32 %v1220, 1e-06
    %v1223 = vrsqrt.pop %v1221
    %v1224 = vrsqrt.pop %v1222
    %v1225 = vmul.f32 %v1208, %v1223
    %v1226 = vmul.f32 %v1209, %v1224
    %v1228 = vlaneseq
    %v1229 = vshrl.u32 %v1228, 7
    %v1230 = vsub.s32 0, %v1229
    %v1231 = vrot.slane %v1210, %v1230
    %v1233 = vmul.f32 %v1225, %v1231
    %v1234 = vmul.f32 %v1226, %v1231
    %v1235 = vpack.c.bf16 %v1234, %v1233
    %v1236 = vld [vmem:[#allocation5] sm:$0xf]
    %v1237 = vld [vmem:[#allocation5 + $0x4] sm:$0xf]
    %v1238 = vld [vmem:[#allocation5 + $0x8] sm:$0xf]
    %v1239 = vld [vmem:[#allocation5 + $0xc] sm:$0xf]
    %v1244 = vunpack.c.l.b16 %v1236
    %v1245 = vunpack.c.l.b16 %v1237
    %v1246 = vunpack.c.l.b16 %v1238
    %v1247 = vunpack.c.l.b16 %v1239
    %v1248 = vpack.c.b16 %v1245, %v1244
    %v1249 = vpack.c.b16 %v1247, %v1246
    %v1253 = vsel %vm128, %v1235, 0
    %1255 = vmatprep.subr.bf16.mxu0 0
    %1256 = vmatpush1.bf16.msra.mxu0 0
    %1257 = vmatprep.subr.bf16.mxu0 0
    %1258 = vmatpush1.bf16.msra.mxu0 0
    %1259 = vmatprep.subr.bf16.mxu0 0
    %1260 = vmatpush1.bf16.msra.mxu0 0
    %1261 = vmatprep.subr.bf16.mxu0 0
    %1262 = vmatpush1.bf16.msra.mxu0 0
    %1263 = vmatprep.subr.bf16.mxu0 0
    %1264 = vmatpush1.bf16.msra.mxu0 0
    %1265 = vmatprep.subr.bf16.mxu0 0
    %1266 = vmatpush1.bf16.msra.mxu0 0
    %1267 = vmatprep.subr.bf16.mxu0 0
    %1268 = vmatpush1.bf16.msra.mxu0 %v1249
    %1269 = vmatprep.subr.bf16.mxu0 0
    %1270 = vmatpush1.bf16.msra.mxu0 %v1248
    %1271 = vmatprep.subr.bf16.mxu0 0
    %1272 = vmatpush2.bf16.msra.mxu0 0
    %1273 = vmatprep.subr.bf16.mxu0 0
    %1274 = vmatpush2.bf16.msra.mxu0 0
    %1275 = vmatprep.subr.bf16.mxu0 0
    %1276 = vmatpush2.bf16.msra.mxu0 0
    %1277 = vmatprep.subr.bf16.mxu0 0
    %1278 = vmatpush2.bf16.msra.mxu0 0
    %1279 = vmatprep.subr.bf16.mxu0 0
    %1280 = vmatpush2.bf16.msra.mxu0 0
    %1281 = vmatprep.subr.bf16.mxu0 0
    %1282 = vmatpush2.bf16.msra.mxu0 0
    %1283 = vmatprep.subr.bf16.mxu0 0
    %1284 = vmatpush2.bf16.msra.mxu0 0
    %1285 = vmatprep.subr.bf16.mxu0 0
    %1286 = vmatpush2.bf16.msra.mxu0 0
    %1287 = vmatprep.mubr.bf16.mxu0 0
    %1288 = vmatmul.mubr.bf16.gmra.mxu0 %v1253
    %v1289 = vpop.f32.mrf.mxu0
    %v1290 = vadd.f32 0.0, %v1289
    %v1291 = vpop.f32.mrf.mxu0
    %v1292 = vpop.f32.mrf.mxu0
    %v1293 = vadd.f32 0.0, %v1292
    %v1294 = vpop.f32.mrf.mxu0
    %1295 = vdwg.mxu0
    %v1296 = vmax.f32 %v1290, 0.0
    %v1297 = vmax.f32 %v1293, 0.0
    %v1298 = vpack.c.bf16 %v1297, %v1296
    %v1299 = vld [vmem:[%s8] sm:$0xf]
    %v1300 = vld [vmem:[%s8 + $0x4] sm:$0xf]
    %v1301 = vld [vmem:[%s8 + $0x8] sm:$0xf]
    %v1302 = vld [vmem:[%s8 + $0xc] sm:$0xf]
    %v1303 = vld [vmem:[%s8 + $0x10] sm:$0xf]
    %v1304 = vld [vmem:[%s8 + $0x14] sm:$0xf]
    %v1305 = vld [vmem:[%s8 + $0x18] sm:$0xf]
    %v1306 = vld [vmem:[%s8 + $0x1c] sm:$0xf]
    %v1315 = vunpack.c.l.b16 %v1299
    %v1316 = vunpack.c.l.b16 %v1300
    %v1317 = vunpack.c.l.b16 %v1301
    %v1318 = vunpack.c.l.b16 %v1302
    %v1319 = vunpack.c.l.b16 %v1303
    %v1320 = vunpack.c.l.b16 %v1304
    %v1321 = vunpack.c.l.b16 %v1305
    %v1322 = vunpack.c.l.b16 %v1306
    %v1323 = vpack.c.b16 %v1316, %v1315
    %v1324 = vpack.c.b16 %v1318, %v1317
    %v1325 = vpack.c.b16 %v1320, %v1319
    %v1326 = vpack.c.b16 %v1322, %v1321
    %vm1331 = vcmask 523264
    %v1333 = vsel %vm1331, %v1298, 0
    %1335 = vmatprep.subr.bf16.mxu0 0
    %1336 = vmatpush1.bf16.msra.mxu0 0
    %1337 = vmatprep.subr.bf16.mxu0 0
    %1338 = vmatpush1.bf16.msra.mxu0 0
    %1339 = vmatprep.subr.bf16.mxu0 0
    %1340 = vmatpush1.bf16.msra.mxu0 0
    %1341 = vmatprep.subr.bf16.mxu0 0
    %1342 = vmatpush1.bf16.msra.mxu0 0
    %1343 = vmatprep.subr.bf16.mxu0 0
    %1344 = vmatpush1.bf16.msra.mxu0 %v1326
    %1345 = vmatprep.subr.bf16.mxu0 0
    %1346 = vmatpush1.bf16.msra.mxu0 %v1325
    %1347 = vmatprep.subr.bf16.mxu0 0
    %1348 = vmatpush1.bf16.msra.mxu0 %v1324
    %1349 = vmatprep.subr.bf16.mxu0 0
    %1350 = vmatpush1.bf16.msra.mxu0 %v1323
    %1351 = vmatprep.subr.bf16.mxu0 0
    %1352 = vmatpush2.bf16.msra.mxu0 0
    %1353 = vmatprep.subr.bf16.mxu0 0
    %1354 = vmatpush2.bf16.msra.mxu0 0
    %1355 = vmatprep.subr.bf16.mxu0 0
    %1356 = vmatpush2.bf16.msra.mxu0 0
    %1357 = vmatprep.subr.bf16.mxu0 0
    %1358 = vmatpush2.bf16.msra.mxu0 0
    %1359 = vmatprep.subr.bf16.mxu0 0
    %1360 = vmatpush2.bf16.msra.mxu0 0
    %1361 = vmatprep.subr.bf16.mxu0 0
    %1362 = vmatpush2.bf16.msra.mxu0 0
    %1363 = vmatprep.subr.bf16.mxu0 0
    %1364 = vmatpush2.bf16.msra.mxu0 0
    %1365 = vmatprep.subr.bf16.mxu0 0
    %1366 = vmatpush2.bf16.msra.mxu0 0
    %1367 = vmatprep.mubr.bf16.mxu0 0
    %1368 = vmatmul.mubr.bf16.gmra.mxu0 %v1333
    %v1369 = vpop.f32.mrf.mxu0
    %v1370 = vadd.f32 0.0, %v1369
    %v1371 = vpop.f32.mrf.mxu0
    %v1372 = vpop.f32.mrf.mxu0
    %v1373 = vadd.f32 0.0, %v1372
    %v1374 = vpop.f32.mrf.mxu0
    %1375 = vdwg.mxu0
    %v1376 = vadd.f32 %v1208, %v1370
    %v1377 = vadd.f32 %v1209, %v1373
    %s1378 = scalar_lea.vmem %s3, 1
    %v1379 = vld [vmem:[%s1378] sm:$0x1]
    %v1380 = vmul.f32 %v1376, %v1376
    %v1381 = vmul.f32 %v1377, %v1377
    %v1382 = vsel %vm128, %v1380, 0.0
    %1383 = vadd.xlane.f32.xlu0 %v1382
    %v1384 = vpop.xlane.xlu0 %1383
    %v1385 = vsel %vm128, %v1381, 0.0
    %1386 = vadd.xlane.f32.xlu0 %v1385
    %v1387 = vpop.xlane.xlu0 %1386
    %v1388 = vmul.f32 %v1384, %v135
    %v1389 = vmul.f32 %v1387, %v135
    %v1390 = vadd.f32 %v1388, 1e-06
    %v1391 = vadd.f32 %v1389, 1e-06
    %v1392 = vrsqrt.pop %v1390
    %v1393 = vrsqrt.pop %v1391
    %v1394 = vmul.f32 %v1376, %v1392
    %v1395 = vmul.f32 %v1377, %v1393
    %v1397 = vlaneseq
    %v1398 = vshrl.u32 %v1397, 7
    %v1399 = vsub.s32 0, %v1398
    %v1400 = vrot.slane %v1379, %v1399
    %v1402 = vmul.f32 %v1394, %v1400
    %v1403 = vmul.f32 %v1395, %v1400
    %v1404 = vpack.c.bf16 %v1403, %v1402
    %s1405 = scalar_lea.vmem %s4, 16
    %v1406 = vld [vmem:[%s1405] sm:$0xf]
    %v1407 = vld [vmem:[%s1405 + $0x4] sm:$0xf]
    %v1408 = vld [vmem:[%s1405 + $0x8] sm:$0xf]
    %v1409 = vld [vmem:[%s1405 + $0xc] sm:$0xf]
    %v1414 = vunpack.c.l.b16 %v1406
    %v1415 = vunpack.c.l.b16 %v1407
    %v1416 = vunpack.c.l.b16 %v1408
    %v1417 = vunpack.c.l.b16 %v1409
    %v1418 = vpack.c.b16 %v1415, %v1414
    %v1419 = vpack.c.b16 %v1417, %v1416
    %v1423 = vsel %vm128, %v1404, 0
    %1425 = vmatprep.subr.bf16.mxu0 0
    %1426 = vmatpush1.bf16.msra.mxu0 0
    %1427 = vmatprep.subr.bf16.mxu0 0
    %1428 = vmatpush1.bf16.msra.mxu0 0
    %1429 = vmatprep.subr.bf16.mxu0 0
    %1430 = vmatpush1.bf16.msra.mxu0 0
    %1431 = vmatprep.subr.bf16.mxu0 0
    %1432 = vmatpush1.bf16.msra.mxu0 0
    %1433 = vmatprep.subr.bf16.mxu0 0
    %1434 = vmatpush1.bf16.msra.mxu0 0
    %1435 = vmatprep.subr.bf16.mxu0 0
    %1436 = vmatpush1.bf16.msra.mxu0 0
    %1437 = vmatprep.subr.bf16.mxu0 0
    %1438 = vmatpush1.bf16.msra.mxu0 %v1419
    %1439 = vmatprep.subr.bf16.mxu0 0
    %1440 = vmatpush1.bf16.msra.mxu0 %v1418
    %1441 = vmatprep.subr.bf16.mxu0 0
    %1442 = vmatpush2.bf16.msra.mxu0 0
    %1443 = vmatprep.subr.bf16.mxu0 0
    %1444 = vmatpush2.bf16.msra.mxu0 0
    %1445 = vmatprep.subr.bf16.mxu0 0
    %1446 = vmatpush2.bf16.msra.mxu0 0
    %1447 = vmatprep.subr.bf16.mxu0 0
    %1448 = vmatpush2.bf16.msra.mxu0 0
    %1449 = vmatprep.subr.bf16.mxu0 0
    %1450 = vmatpush2.bf16.msra.mxu0 0
    %1451 = vmatprep.subr.bf16.mxu0 0
    %1452 = vmatpush2.bf16.msra.mxu0 0
    %1453 = vmatprep.subr.bf16.mxu0 0
    %1454 = vmatpush2.bf16.msra.mxu0 0
    %1455 = vmatprep.subr.bf16.mxu0 0
    %1456 = vmatpush2.bf16.msra.mxu0 0
    %1457 = vmatprep.mubr.bf16.mxu0 0
    %1458 = vmatmul.mubr.bf16.gmra.mxu0 %v1423
    %v1459 = vpop.f32.mrf.mxu0
    %v1460 = vadd.f32 0.0, %v1459
    %v1461 = vpop.f32.mrf.mxu0
    %v1462 = vpop.f32.mrf.mxu0
    %v1463 = vadd.f32 0.0, %v1462
    %v1464 = vpop.f32.mrf.mxu0
    %1465 = vdwg.mxu0
    %1468 = vrot.lane.b32.xlu0 %v1460, 120
    %v1469 = vpop.permute.xlu0 %1468
    %1470 = vrot.lane.b32.xlu0 %v1463, 120
    %v1471 = vpop.permute.xlu0 %1470
    %1474 = vrot.lane.b32.xlu0 %v1460, 112
    %v1475 = vpop.permute.xlu0 %1474
    %1476 = vrot.lane.b32.xlu0 %v1463, 112
    %v1477 = vpop.permute.xlu0 %1476
    %1480 = vrot.lane.b32.xlu0 %v1460, 104
    %v1481 = vpop.permute.xlu0 %1480
    %1482 = vrot.lane.b32.xlu0 %v1463, 104
    %v1483 = vpop.permute.xlu0 %1482
    %v1486 = vpack.c.bf16 %v1460, %v1460
    %v1487 = vpack.c.bf16 %v1463, %v1463
    %v1488 = vpack.c.bf16 %v1469, %v1469
    %v1489 = vpack.c.bf16 %v1471, %v1471
    %v1490 = vpack.c.bf16 %v1475, %v1475
    %v1491 = vpack.c.bf16 %v1477, %v1477
    %v1492 = vpack.c.bf16 %v1481, %v1481
    %v1493 = vpack.c.bf16 %v1483, %v1483
    %1495 = vrot.lane.b32.xlu0 %v1486, 96
    %v1496 = vpop.permute.xlu0 %1495
    %v1498 = vsel %vm244, %v1486, 0
    %v1501 = vsel %vm244, %v1496, 0
    %1503 = vmatprep.subr.bf16.mxu0 0
    %1504 = vmatpush1.bf16.xpose.msra.mxu0 0
    %1505 = vmatprep.subr.bf16.mxu0 0
    %1506 = vmatpush1.bf16.xpose.msra.mxu0 0
    %1507 = vmatprep.subr.bf16.mxu0 0
    %1508 = vmatpush1.bf16.xpose.msra.mxu0 0
    %1509 = vmatprep.subr.bf16.mxu0 0
    %1510 = vmatpush1.bf16.xpose.msra.mxu0 0
    %1511 = vmatprep.subr.bf16.mxu0 0
    %1512 = vmatpush1.bf16.xpose.msra.mxu0 0
    %1513 = vmatprep.subr.bf16.mxu0 0
    %1514 = vmatpush1.bf16.xpose.msra.mxu0 0
    %1515 = vmatprep.subr.bf16.mxu0 0
    %1516 = vmatpush1.bf16.xpose.msra.mxu0 0
    %1517 = vmatprep.subr.bf16.mxu0 0
    %1518 = vmatpush1.bf16.xpose.msra.mxu0 %v1501
    %1519 = vmatprep.subr.bf16.mxu0 0
    %1520 = vmatpush2.bf16.xpose.msra.mxu0 0
    %1521 = vmatprep.subr.bf16.mxu0 0
    %1522 = vmatpush2.bf16.xpose.msra.mxu0 0
    %1523 = vmatprep.subr.bf16.mxu0 0
    %1524 = vmatpush2.bf16.xpose.msra.mxu0 0
    %1525 = vmatprep.subr.bf16.mxu0 0
    %1526 = vmatpush2.bf16.xpose.msra.mxu0 0
    %1527 = vmatprep.subr.bf16.mxu0 0
    %1528 = vmatpush2.bf16.xpose.msra.mxu0 0
    %1529 = vmatprep.subr.bf16.mxu0 0
    %1530 = vmatpush2.bf16.xpose.msra.mxu0 0
    %1531 = vmatprep.subr.bf16.mxu0 0
    %1532 = vmatpush2.bf16.xpose.msra.mxu0 0
    %1533 = vmatprep.subr.bf16.mxu0 0
    %1534 = vmatpush2.bf16.xpose.msra.mxu0 0
    %1535 = vmatprep.mubr.bf16.mxu0 0
    %1536 = vmatmul.mubr.bf16.gmra.mxu0 %v1498
    %v1537 = vpop.f32.mrf.mxu0
    %v1538 = vadd.f32 %v117, %v1537
    %v1539 = vpop.f32.mrf.mxu0
    %v1540 = vpop.f32.mrf.mxu0
    %v1541 = vpop.f32.mrf.mxu0
    %1542 = vdwg.mxu0
    %1544 = vrot.lane.b32.xlu0 %v1487, 96
    %v1545 = vpop.permute.xlu0 %1544
    %v1547 = vsel %vm244, %v1487, 0
    %v1550 = vsel %vm244, %v1545, 0
    %1552 = vmatprep.subr.bf16.mxu0 0
    %1553 = vmatpush1.bf16.xpose.msra.mxu0 0
    %1554 = vmatprep.subr.bf16.mxu0 0
    %1555 = vmatpush1.bf16.xpose.msra.mxu0 0
    %1556 = vmatprep.subr.bf16.mxu0 0
    %1557 = vmatpush1.bf16.xpose.msra.mxu0 0
    %1558 = vmatprep.subr.bf16.mxu0 0
    %1559 = vmatpush1.bf16.xpose.msra.mxu0 0
    %1560 = vmatprep.subr.bf16.mxu0 0
    %1561 = vmatpush1.bf16.xpose.msra.mxu0 0
    %1562 = vmatprep.subr.bf16.mxu0 0
    %1563 = vmatpush1.bf16.xpose.msra.mxu0 0
    %1564 = vmatprep.subr.bf16.mxu0 0
    %1565 = vmatpush1.bf16.xpose.msra.mxu0 0
    %1566 = vmatprep.subr.bf16.mxu0 0
    %1567 = vmatpush1.bf16.xpose.msra.mxu0 %v1550
    %1568 = vmatprep.subr.bf16.mxu0 0
    %1569 = vmatpush2.bf16.xpose.msra.mxu0 0
    %1570 = vmatprep.subr.bf16.mxu0 0
    %1571 = vmatpush2.bf16.xpose.msra.mxu0 0
    %1572 = vmatprep.subr.bf16.mxu0 0
    %1573 = vmatpush2.bf16.xpose.msra.mxu0 0
    %1574 = vmatprep.subr.bf16.mxu0 0
    %1575 = vmatpush2.bf16.xpose.msra.mxu0 0
    %1576 = vmatprep.subr.bf16.mxu0 0
    %1577 = vmatpush2.bf16.xpose.msra.mxu0 0
    %1578 = vmatprep.subr.bf16.mxu0 0
    %1579 = vmatpush2.bf16.xpose.msra.mxu0 0
    %1580 = vmatprep.subr.bf16.mxu0 0
    %1581 = vmatpush2.bf16.xpose.msra.mxu0 0
    %1582 = vmatprep.subr.bf16.mxu0 0
    %1583 = vmatpush2.bf16.xpose.msra.mxu0 0
    %1584 = vmatprep.mubr.bf16.mxu0 0
    %1585 = vmatmul.mubr.bf16.gmra.mxu0 %v1547
    %v1586 = vpop.f32.mrf.mxu0
    %v1587 = vadd.f32 %v118, %v1586
    %v1588 = vpop.f32.mrf.mxu0
    %v1589 = vpop.f32.mrf.mxu0
    %v1590 = vpop.f32.mrf.mxu0
    %1591 = vdwg.mxu0
    %1593 = vrot.lane.b32.xlu0 %v1488, 96
    %v1594 = vpop.permute.xlu0 %1593
    %v1596 = vsel %vm244, %v1488, 0
    %v1599 = vsel %vm244, %v1594, 0
    %1601 = vmatprep.subr.bf16.mxu0 0
    %1602 = vmatpush1.bf16.xpose.msra.mxu0 0
    %1603 = vmatprep.subr.bf16.mxu0 0
    %1604 = vmatpush1.bf16.xpose.msra.mxu0 0
    %1605 = vmatprep.subr.bf16.mxu0 0
    %1606 = vmatpush1.bf16.xpose.msra.mxu0 0
    %1607 = vmatprep.subr.bf16.mxu0 0
    %1608 = vmatpush1.bf16.xpose.msra.mxu0 0
    %1609 = vmatprep.subr.bf16.mxu0 0
    %1610 = vmatpush1.bf16.xpose.msra.mxu0 0
    %1611 = vmatprep.subr.bf16.mxu0 0
    %1612 = vmatpush1.bf16.xpose.msra.mxu0 0
    %1613 = vmatprep.subr.bf16.mxu0 0
    %1614 = vmatpush1.bf16.xpose.msra.mxu0 0
    %1615 = vmatprep.subr.bf16.mxu0 0
    %1616 = vmatpush1.bf16.xpose.msra.mxu0 %v1599
    %1617 = vmatprep.subr.bf16.mxu0 0
    %1618 = vmatpush2.bf16.xpose.msra.mxu0 0
    %1619 = vmatprep.subr.bf16.mxu0 0
    %1620 = vmatpush2.bf16.xpose.msra.mxu0 0
    %1621 = vmatprep.subr.bf16.mxu0 0
    %1622 = vmatpush2.bf16.xpose.msra.mxu0 0
    %1623 = vmatprep.subr.bf16.mxu0 0
    %1624 = vmatpush2.bf16.xpose.msra.mxu0 0
    %1625 = vmatprep.subr.bf16.mxu0 0
    %1626 = vmatpush2.bf16.xpose.msra.mxu0 0
    %1627 = vmatprep.subr.bf16.mxu0 0
    %1628 = vmatpush2.bf16.xpose.msra.mxu0 0
    %1629 = vmatprep.subr.bf16.mxu0 0
    %1630 = vmatpush2.bf16.xpose.msra.mxu0 0
    %1631 = vmatprep.subr.bf16.mxu0 0
    %1632 = vmatpush2.bf16.xpose.msra.mxu0 0
    %1633 = vmatprep.mubr.bf16.mxu0 0
    %1634 = vmatmul.mubr.bf16.gmra.mxu0 %v1596
    %v1635 = vpop.f32.mrf.mxu0
    %v1636 = vadd.f32 %v119, %v1635
    %v1637 = vpop.f32.mrf.mxu0
    %v1638 = vpop.f32.mrf.mxu0
    %v1639 = vpop.f32.mrf.mxu0
    %1640 = vdwg.mxu0
    %1642 = vrot.lane.b32.xlu0 %v1489, 96
    %v1643 = vpop.permute.xlu0 %1642
    %v1645 = vsel %vm244, %v1489, 0
    %v1648 = vsel %vm244, %v1643, 0
    %1650 = vmatprep.subr.bf16.mxu0 0
    %1651 = vmatpush1.bf16.xpose.msra.mxu0 0
    %1652 = vmatprep.subr.bf16.mxu0 0
    %1653 = vmatpush1.bf16.xpose.msra.mxu0 0
    %1654 = vmatprep.subr.bf16.mxu0 0
    %1655 = vmatpush1.bf16.xpose.msra.mxu0 0
    %1656 = vmatprep.subr.bf16.mxu0 0
    %1657 = vmatpush1.bf16.xpose.msra.mxu0 0
    %1658 = vmatprep.subr.bf16.mxu0 0
    %1659 = vmatpush1.bf16.xpose.msra.mxu0 0
    %1660 = vmatprep.subr.bf16.mxu0 0
    %1661 = vmatpush1.bf16.xpose.msra.mxu0 0
    %1662 = vmatprep.subr.bf16.mxu0 0
    %1663 = vmatpush1.bf16.xpose.msra.mxu0 0
    %1664 = vmatprep.subr.bf16.mxu0 0
    %1665 = vmatpush1.bf16.xpose.msra.mxu0 %v1648
    %1666 = vmatprep.subr.bf16.mxu0 0
    %1667 = vmatpush2.bf16.xpose.msra.mxu0 0
    %1668 = vmatprep.subr.bf16.mxu0 0
    %1669 = vmatpush2.bf16.xpose.msra.mxu0 0
    %1670 = vmatprep.subr.bf16.mxu0 0
    %1671 = vmatpush2.bf16.xpose.msra.mxu0 0
    %1672 = vmatprep.subr.bf16.mxu0 0
    %1673 = vmatpush2.bf16.xpose.msra.mxu0 0
    %1674 = vmatprep.subr.bf16.mxu0 0
    %1675 = vmatpush2.bf16.xpose.msra.mxu0 0
    %1676 = vmatprep.subr.bf16.mxu0 0
    %1677 = vmatpush2.bf16.xpose.msra.mxu0 0
    %1678 = vmatprep.subr.bf16.mxu0 0
    %1679 = vmatpush2.bf16.xpose.msra.mxu0 0
    %1680 = vmatprep.subr.bf16.mxu0 0
    %1681 = vmatpush2.bf16.xpose.msra.mxu0 0
    %1682 = vmatprep.mubr.bf16.mxu0 0
    %1683 = vmatmul.mubr.bf16.gmra.mxu0 %v1645
    %v1684 = vpop.f32.mrf.mxu0
    %v1685 = vadd.f32 %v120, %v1684
    %v1686 = vpop.f32.mrf.mxu0
    %v1687 = vpop.f32.mrf.mxu0
    %v1688 = vpop.f32.mrf.mxu0
    %1689 = vdwg.mxu0
    %1691 = vrot.lane.b32.xlu0 %v1490, 96
    %v1692 = vpop.permute.xlu0 %1691
    %v1694 = vsel %vm244, %v1490, 0
    %v1697 = vsel %vm244, %v1692, 0
    %1699 = vmatprep.subr.bf16.mxu0 0
    %1700 = vmatpush1.bf16.xpose.msra.mxu0 0
    %1701 = vmatprep.subr.bf16.mxu0 0
    %1702 = vmatpush1.bf16.xpose.msra.mxu0 0
    %1703 = vmatprep.subr.bf16.mxu0 0
    %1704 = vmatpush1.bf16.xpose.msra.mxu0 0
    %1705 = vmatprep.subr.bf16.mxu0 0
    %1706 = vmatpush1.bf16.xpose.msra.mxu0 0
    %1707 = vmatprep.subr.bf16.mxu0 0
    %1708 = vmatpush1.bf16.xpose.msra.mxu0 0
    %1709 = vmatprep.subr.bf16.mxu0 0
    %1710 = vmatpush1.bf16.xpose.msra.mxu0 0
    %1711 = vmatprep.subr.bf16.mxu0 0
    %1712 = vmatpush1.bf16.xpose.msra.mxu0 0
    %1713 = vmatprep.subr.bf16.mxu0 0
    %1714 = vmatpush1.bf16.xpose.msra.mxu0 %v1697
    %1715 = vmatprep.subr.bf16.mxu0 0
    %1716 = vmatpush2.bf16.xpose.msra.mxu0 0
    %1717 = vmatprep.subr.bf16.mxu0 0
    %1718 = vmatpush2.bf16.xpose.msra.mxu0 0
    %1719 = vmatprep.subr.bf16.mxu0 0
    %1720 = vmatpush2.bf16.xpose.msra.mxu0 0
    %1721 = vmatprep.subr.bf16.mxu0 0
    %1722 = vmatpush2.bf16.xpose.msra.mxu0 0
    %1723 = vmatprep.subr.bf16.mxu0 0
    %1724 = vmatpush2.bf16.xpose.msra.mxu0 0
    %1725 = vmatprep.subr.bf16.mxu0 0
    %1726 = vmatpush2.bf16.xpose.msra.mxu0 0
    %1727 = vmatprep.subr.bf16.mxu0 0
    %1728 = vmatpush2.bf16.xpose.msra.mxu0 0
    %1729 = vmatprep.subr.bf16.mxu0 0
    %1730 = vmatpush2.bf16.xpose.msra.mxu0 0
    %1731 = vmatprep.mubr.bf16.mxu0 0
    %1732 = vmatmul.mubr.bf16.gmra.mxu0 %v1694
    %v1733 = vpop.f32.mrf.mxu0
    %v1734 = vadd.f32 %v121, %v1733
    %v1735 = vpop.f32.mrf.mxu0
    %v1736 = vpop.f32.mrf.mxu0
    %v1737 = vpop.f32.mrf.mxu0
    %1738 = vdwg.mxu0
    %1740 = vrot.lane.b32.xlu0 %v1491, 96
    %v1741 = vpop.permute.xlu0 %1740
    %v1743 = vsel %vm244, %v1491, 0
    %v1746 = vsel %vm244, %v1741, 0
    %1748 = vmatprep.subr.bf16.mxu0 0
    %1749 = vmatpush1.bf16.xpose.msra.mxu0 0
    %1750 = vmatprep.subr.bf16.mxu0 0
    %1751 = vmatpush1.bf16.xpose.msra.mxu0 0
    %1752 = vmatprep.subr.bf16.mxu0 0
    %1753 = vmatpush1.bf16.xpose.msra.mxu0 0
    %1754 = vmatprep.subr.bf16.mxu0 0
    %1755 = vmatpush1.bf16.xpose.msra.mxu0 0
    %1756 = vmatprep.subr.bf16.mxu0 0
    %1757 = vmatpush1.bf16.xpose.msra.mxu0 0
    %1758 = vmatprep.subr.bf16.mxu0 0
    %1759 = vmatpush1.bf16.xpose.msra.mxu0 0
    %1760 = vmatprep.subr.bf16.mxu0 0
    %1761 = vmatpush1.bf16.xpose.msra.mxu0 0
    %1762 = vmatprep.subr.bf16.mxu0 0
    %1763 = vmatpush1.bf16.xpose.msra.mxu0 %v1746
    %1764 = vmatprep.subr.bf16.mxu0 0
    %1765 = vmatpush2.bf16.xpose.msra.mxu0 0
    %1766 = vmatprep.subr.bf16.mxu0 0
    %1767 = vmatpush2.bf16.xpose.msra.mxu0 0
    %1768 = vmatprep.subr.bf16.mxu0 0
    %1769 = vmatpush2.bf16.xpose.msra.mxu0 0
    %1770 = vmatprep.subr.bf16.mxu0 0
    %1771 = vmatpush2.bf16.xpose.msra.mxu0 0
    %1772 = vmatprep.subr.bf16.mxu0 0
    %1773 = vmatpush2.bf16.xpose.msra.mxu0 0
    %1774 = vmatprep.subr.bf16.mxu0 0
    %1775 = vmatpush2.bf16.xpose.msra.mxu0 0
    %1776 = vmatprep.subr.bf16.mxu0 0
    %1777 = vmatpush2.bf16.xpose.msra.mxu0 0
    %1778 = vmatprep.subr.bf16.mxu0 0
    %1779 = vmatpush2.bf16.xpose.msra.mxu0 0
    %1780 = vmatprep.mubr.bf16.mxu0 0
    %1781 = vmatmul.mubr.bf16.gmra.mxu0 %v1743
    %v1782 = vpop.f32.mrf.mxu0
    %v1783 = vadd.f32 %v122, %v1782
    %v1784 = vpop.f32.mrf.mxu0
    %v1785 = vpop.f32.mrf.mxu0
    %v1786 = vpop.f32.mrf.mxu0
    %1787 = vdwg.mxu0
    %1789 = vrot.lane.b32.xlu0 %v1492, 96
    %v1790 = vpop.permute.xlu0 %1789
    %v1792 = vsel %vm244, %v1492, 0
    %v1795 = vsel %vm244, %v1790, 0
    %1797 = vmatprep.subr.bf16.mxu0 0
    %1798 = vmatpush1.bf16.xpose.msra.mxu0 0
    %1799 = vmatprep.subr.bf16.mxu0 0
    %1800 = vmatpush1.bf16.xpose.msra.mxu0 0
    %1801 = vmatprep.subr.bf16.mxu0 0
    %1802 = vmatpush1.bf16.xpose.msra.mxu0 0
    %1803 = vmatprep.subr.bf16.mxu0 0
    %1804 = vmatpush1.bf16.xpose.msra.mxu0 0
    %1805 = vmatprep.subr.bf16.mxu0 0
    %1806 = vmatpush1.bf16.xpose.msra.mxu0 0
    %1807 = vmatprep.subr.bf16.mxu0 0
    %1808 = vmatpush1.bf16.xpose.msra.mxu0 0
    %1809 = vmatprep.subr.bf16.mxu0 0
    %1810 = vmatpush1.bf16.xpose.msra.mxu0 0
    %1811 = vmatprep.subr.bf16.mxu0 0
    %1812 = vmatpush1.bf16.xpose.msra.mxu0 %v1795
    %1813 = vmatprep.subr.bf16.mxu0 0
    %1814 = vmatpush2.bf16.xpose.msra.mxu0 0
    %1815 = vmatprep.subr.bf16.mxu0 0
    %1816 = vmatpush2.bf16.xpose.msra.mxu0 0
    %1817 = vmatprep.subr.bf16.mxu0 0
    %1818 = vmatpush2.bf16.xpose.msra.mxu0 0
    %1819 = vmatprep.subr.bf16.mxu0 0
    %1820 = vmatpush2.bf16.xpose.msra.mxu0 0
    %1821 = vmatprep.subr.bf16.mxu0 0
    %1822 = vmatpush2.bf16.xpose.msra.mxu0 0
    %1823 = vmatprep.subr.bf16.mxu0 0
    %1824 = vmatpush2.bf16.xpose.msra.mxu0 0
    %1825 = vmatprep.subr.bf16.mxu0 0
    %1826 = vmatpush2.bf16.xpose.msra.mxu0 0
    %1827 = vmatprep.subr.bf16.mxu0 0
    %1828 = vmatpush2.bf16.xpose.msra.mxu0 0
    %1829 = vmatprep.mubr.bf16.mxu0 0
    %1830 = vmatmul.mubr.bf16.gmra.mxu0 %v1792
    %v1831 = vpop.f32.mrf.mxu0
    %v1832 = vadd.f32 %v123, %v1831
    %v1833 = vpop.f32.mrf.mxu0
    %v1834 = vpop.f32.mrf.mxu0
    %v1835 = vpop.f32.mrf.mxu0
    %1836 = vdwg.mxu0
    %1838 = vrot.lane.b32.xlu0 %v1493, 96
    %v1839 = vpop.permute.xlu0 %1838
    %v1841 = vsel %vm244, %v1493, 0
    %v1844 = vsel %vm244, %v1839, 0
    %1846 = vmatprep.subr.bf16.mxu0 0
    %1847 = vmatpush1.bf16.xpose.msra.mxu0 0
    %1848 = vmatprep.subr.bf16.mxu0 0
    %1849 = vmatpush1.bf16.xpose.msra.mxu0 0
    %1850 = vmatprep.subr.bf16.mxu0 0
    %1851 = vmatpush1.bf16.xpose.msra.mxu0 0
    %1852 = vmatprep.subr.bf16.mxu0 0
    %1853 = vmatpush1.bf16.xpose.msra.mxu0 0
    %1854 = vmatprep.subr.bf16.mxu0 0
    %1855 = vmatpush1.bf16.xpose.msra.mxu0 0
    %1856 = vmatprep.subr.bf16.mxu0 0
    %1857 = vmatpush1.bf16.xpose.msra.mxu0 0
    %1858 = vmatprep.subr.bf16.mxu0 0
    %1859 = vmatpush1.bf16.xpose.msra.mxu0 0
    %1860 = vmatprep.subr.bf16.mxu0 0
    %1861 = vmatpush1.bf16.xpose.msra.mxu0 %v1844
    %1862 = vmatprep.subr.bf16.mxu0 0
    %1863 = vmatpush2.bf16.xpose.msra.mxu0 0
    %1864 = vmatprep.subr.bf16.mxu0 0
    %1865 = vmatpush2.bf16.xpose.msra.mxu0 0
    %1866 = vmatprep.subr.bf16.mxu0 0
    %1867 = vmatpush2.bf16.xpose.msra.mxu0 0
    %1868 = vmatprep.subr.bf16.mxu0 0
    %1869 = vmatpush2.bf16.xpose.msra.mxu0 0
    %1870 = vmatprep.subr.bf16.mxu0 0
    %1871 = vmatpush2.bf16.xpose.msra.mxu0 0
    %1872 = vmatprep.subr.bf16.mxu0 0
    %1873 = vmatpush2.bf16.xpose.msra.mxu0 0
    %1874 = vmatprep.subr.bf16.mxu0 0
    %1875 = vmatpush2.bf16.xpose.msra.mxu0 0
    %1876 = vmatprep.subr.bf16.mxu0 0
    %1877 = vmatpush2.bf16.xpose.msra.mxu0 0
    %1878 = vmatprep.mubr.bf16.mxu0 0
    %1879 = vmatmul.mubr.bf16.gmra.mxu0 %v1841
    %v1880 = vpop.f32.mrf.mxu0
    %v1881 = vadd.f32 %v124, %v1880
    %v1882 = vpop.f32.mrf.mxu0
    %v1883 = vpop.f32.mrf.mxu0
    %v1884 = vpop.f32.mrf.mxu0
    %1885 = vdwg.mxu0
    %v1886 = vsel %vm244, %v1538, -inf
    %1887 = vmax.xlane.f32.xlu0 %v1886
    %v1888 = vpop.xlane.xlu0 %1887
    %v1889 = vsel %vm244, %v1587, -inf
    %1890 = vmax.xlane.f32.xlu0 %v1889
    %v1891 = vpop.xlane.xlu0 %1890
    %v1892 = vsel %vm244, %v1636, -inf
    %1893 = vmax.xlane.f32.xlu0 %v1892
    %v1894 = vpop.xlane.xlu0 %1893
    %v1895 = vsel %vm244, %v1685, -inf
    %1896 = vmax.xlane.f32.xlu0 %v1895
    %v1897 = vpop.xlane.xlu0 %1896
    %v1898 = vsel %vm244, %v1734, -inf
    %1899 = vmax.xlane.f32.xlu0 %v1898
    %v1900 = vpop.xlane.xlu0 %1899
    %v1901 = vsel %vm244, %v1783, -inf
    %1902 = vmax.xlane.f32.xlu0 %v1901
    %v1903 = vpop.xlane.xlu0 %1902
    %v1904 = vsel %vm244, %v1832, -inf
    %1905 = vmax.xlane.f32.xlu0 %v1904
    %v1906 = vpop.xlane.xlu0 %1905
    %v1907 = vsel %vm244, %v1881, -inf
    %1908 = vmax.xlane.f32.xlu0 %v1907
    %v1909 = vpop.xlane.xlu0 %1908
    %v1910 = vsub.f32 %v1538, %v1888
    %v1911 = vsub.f32 %v1587, %v1891
    %v1912 = vsub.f32 %v1636, %v1894
    %v1913 = vsub.f32 %v1685, %v1897
    %v1914 = vsub.f32 %v1734, %v1900
    %v1915 = vsub.f32 %v1783, %v1903
    %v1916 = vsub.f32 %v1832, %v1906
    %v1917 = vsub.f32 %v1881, %v1909
    %v1918 = vmul.f32 %v1910, 1.442695
    %v1919 = vpow.pop %v1918
    %v1920 = vmul.f32 %v1911, 1.442695
    %v1921 = vpow.pop %v1920
    %v1922 = vmul.f32 %v1912, 1.442695
    %v1923 = vpow.pop %v1922
    %v1924 = vmul.f32 %v1913, 1.442695
    %v1925 = vpow.pop %v1924
    %v1926 = vmul.f32 %v1914, 1.442695
    %v1927 = vpow.pop %v1926
    %v1928 = vmul.f32 %v1915, 1.442695
    %v1929 = vpow.pop %v1928
    %v1930 = vmul.f32 %v1916, 1.442695
    %v1931 = vpow.pop %v1930
    %v1932 = vmul.f32 %v1917, 1.442695
    %v1933 = vpow.pop %v1932
    %v1934 = vsel %vm244, %v1919, 0.0
    %1935 = vadd.xlane.f32.xlu0 %v1934
    %v1936 = vpop.xlane.xlu0 %1935
    %v1937 = vsel %vm244, %v1921, 0.0
    %1938 = vadd.xlane.f32.xlu0 %v1937
    %v1939 = vpop.xlane.xlu0 %1938
    %v1940 = vsel %vm244, %v1923, 0.0
    %1941 = vadd.xlane.f32.xlu0 %v1940
    %v1942 = vpop.xlane.xlu0 %1941
    %v1943 = vsel %vm244, %v1925, 0.0
    %1944 = vadd.xlane.f32.xlu0 %v1943
    %v1945 = vpop.xlane.xlu0 %1944
    %v1946 = vsel %vm244, %v1927, 0.0
    %1947 = vadd.xlane.f32.xlu0 %v1946
    %v1948 = vpop.xlane.xlu0 %1947
    %v1949 = vsel %vm244, %v1929, 0.0
    %1950 = vadd.xlane.f32.xlu0 %v1949
    %v1951 = vpop.xlane.xlu0 %1950
    %v1952 = vsel %vm244, %v1931, 0.0
    %1953 = vadd.xlane.f32.xlu0 %v1952
    %v1954 = vpop.xlane.xlu0 %1953
    %v1955 = vsel %vm244, %v1933, 0.0
    %1956 = vadd.xlane.f32.xlu0 %v1955
    %v1957 = vpop.xlane.xlu0 %1956
    %v1958 = vrcp.pop %v1936
    %v1959 = vrcp.pop %v1939
    %v1960 = vrcp.pop %v1942
    %v1961 = vrcp.pop %v1945
    %v1962 = vrcp.pop %v1948
    %v1963 = vrcp.pop %v1951
    %v1964 = vrcp.pop %v1954
    %v1965 = vrcp.pop %v1957
    %v1966 = vmul.f32 %v1919, %v1958
    %v1967 = vmul.f32 %v1921, %v1959
    %v1968 = vmul.f32 %v1923, %v1960
    %v1969 = vmul.f32 %v1925, %v1961
    %v1970 = vmul.f32 %v1927, %v1962
    %v1971 = vmul.f32 %v1929, %v1963
    %v1972 = vmul.f32 %v1931, %v1964
    %v1973 = vmul.f32 %v1933, %v1965
    %v1974 = vpack.c.bf16 %v1966, %v1966
    %v1975 = vpack.c.bf16 %v1967, %v1967
    %v1976 = vpack.c.bf16 %v1968, %v1968
    %v1977 = vpack.c.bf16 %v1969, %v1969
    %v1978 = vpack.c.bf16 %v1970, %v1970
    %v1979 = vpack.c.bf16 %v1971, %v1971
    %v1980 = vpack.c.bf16 %v1972, %v1972
    %v1981 = vpack.c.bf16 %v1973, %v1973
    %1982 = vrot.lane.b32.xlu0 %v1486, 64
    %v1983 = vpop.permute.xlu0 %1982
    %v1985 = vsel %vm244, %v1974, 0
    %v1988 = vsel %vm735, %v1983, 0
    %1990 = vmatprep.subr.bf16.mxu0 0
    %1991 = vmatpush1.bf16.msra.mxu0 0
    %1992 = vmatprep.subr.bf16.mxu0 0
    %1993 = vmatpush1.bf16.msra.mxu0 0
    %1994 = vmatprep.subr.bf16.mxu0 0
    %1995 = vmatpush1.bf16.msra.mxu0 0
    %1996 = vmatprep.subr.bf16.mxu0 0
    %1997 = vmatpush1.bf16.msra.mxu0 0
    %1998 = vmatprep.subr.bf16.mxu0 0
    %1999 = vmatpush1.bf16.msra.mxu0 0
    %2000 = vmatprep.subr.bf16.mxu0 0
    %2001 = vmatpush1.bf16.msra.mxu0 0
    %2002 = vmatprep.subr.bf16.mxu0 0
    %2003 = vmatpush1.bf16.msra.mxu0 0
    %2004 = vmatprep.subr.bf16.mxu0 0
    %2005 = vmatpush1.bf16.msra.mxu0 %v1988
    %2006 = vmatprep.subr.bf16.mxu0 0
    %2007 = vmatpush2.bf16.msra.mxu0 0
    %2008 = vmatprep.subr.bf16.mxu0 0
    %2009 = vmatpush2.bf16.msra.mxu0 0
    %2010 = vmatprep.subr.bf16.mxu0 0
    %2011 = vmatpush2.bf16.msra.mxu0 0
    %2012 = vmatprep.subr.bf16.mxu0 0
    %2013 = vmatpush2.bf16.msra.mxu0 0
    %2014 = vmatprep.subr.bf16.mxu0 0
    %2015 = vmatpush2.bf16.msra.mxu0 0
    %2016 = vmatprep.subr.bf16.mxu0 0
    %2017 = vmatpush2.bf16.msra.mxu0 0
    %2018 = vmatprep.subr.bf16.mxu0 0
    %2019 = vmatpush2.bf16.msra.mxu0 0
    %2020 = vmatprep.subr.bf16.mxu0 0
    %2021 = vmatpush2.bf16.msra.mxu0 0
    %2022 = vmatprep.mubr.bf16.mxu0 0
    %2023 = vmatmul.mubr.bf16.gmra.mxu0 %v1985
    %v2024 = vpop.f32.mrf.mxu0
    %v2025 = vadd.f32 0.0, %v2024
    %v2026 = vpop.f32.mrf.mxu0
    %v2027 = vpop.f32.mrf.mxu0
    %v2028 = vpop.f32.mrf.mxu0
    %2029 = vdwg.mxu0
    %2030 = vrot.lane.b32.xlu0 %v1487, 64
    %v2031 = vpop.permute.xlu0 %2030
    %v2033 = vsel %vm244, %v1975, 0
    %v2036 = vsel %vm735, %v2031, 0
    %2038 = vmatprep.subr.bf16.mxu0 0
    %2039 = vmatpush1.bf16.msra.mxu0 0
    %2040 = vmatprep.subr.bf16.mxu0 0
    %2041 = vmatpush1.bf16.msra.mxu0 0
    %2042 = vmatprep.subr.bf16.mxu0 0
    %2043 = vmatpush1.bf16.msra.mxu0 0
    %2044 = vmatprep.subr.bf16.mxu0 0
    %2045 = vmatpush1.bf16.msra.mxu0 0
    %2046 = vmatprep.subr.bf16.mxu0 0
    %2047 = vmatpush1.bf16.msra.mxu0 0
    %2048 = vmatprep.subr.bf16.mxu0 0
    %2049 = vmatpush1.bf16.msra.mxu0 0
    %2050 = vmatprep.subr.bf16.mxu0 0
    %2051 = vmatpush1.bf16.msra.mxu0 0
    %2052 = vmatprep.subr.bf16.mxu0 0
    %2053 = vmatpush1.bf16.msra.mxu0 %v2036
    %2054 = vmatprep.subr.bf16.mxu0 0
    %2055 = vmatpush2.bf16.msra.mxu0 0
    %2056 = vmatprep.subr.bf16.mxu0 0
    %2057 = vmatpush2.bf16.msra.mxu0 0
    %2058 = vmatprep.subr.bf16.mxu0 0
    %2059 = vmatpush2.bf16.msra.mxu0 0
    %2060 = vmatprep.subr.bf16.mxu0 0
    %2061 = vmatpush2.bf16.msra.mxu0 0
    %2062 = vmatprep.subr.bf16.mxu0 0
    %2063 = vmatpush2.bf16.msra.mxu0 0
    %2064 = vmatprep.subr.bf16.mxu0 0
    %2065 = vmatpush2.bf16.msra.mxu0 0
    %2066 = vmatprep.subr.bf16.mxu0 0
    %2067 = vmatpush2.bf16.msra.mxu0 0
    %2068 = vmatprep.subr.bf16.mxu0 0
    %2069 = vmatpush2.bf16.msra.mxu0 0
    %2070 = vmatprep.mubr.bf16.mxu0 0
    %2071 = vmatmul.mubr.bf16.gmra.mxu0 %v2033
    %v2072 = vpop.f32.mrf.mxu0
    %v2073 = vadd.f32 0.0, %v2072
    %v2074 = vpop.f32.mrf.mxu0
    %v2075 = vpop.f32.mrf.mxu0
    %v2076 = vpop.f32.mrf.mxu0
    %2077 = vdwg.mxu0
    %2078 = vrot.lane.b32.xlu0 %v1488, 64
    %v2079 = vpop.permute.xlu0 %2078
    %v2081 = vsel %vm244, %v1976, 0
    %v2084 = vsel %vm735, %v2079, 0
    %2086 = vmatprep.subr.bf16.mxu0 0
    %2087 = vmatpush1.bf16.msra.mxu0 0
    %2088 = vmatprep.subr.bf16.mxu0 0
    %2089 = vmatpush1.bf16.msra.mxu0 0
    %2090 = vmatprep.subr.bf16.mxu0 0
    %2091 = vmatpush1.bf16.msra.mxu0 0
    %2092 = vmatprep.subr.bf16.mxu0 0
    %2093 = vmatpush1.bf16.msra.mxu0 0
    %2094 = vmatprep.subr.bf16.mxu0 0
    %2095 = vmatpush1.bf16.msra.mxu0 0
    %2096 = vmatprep.subr.bf16.mxu0 0
    %2097 = vmatpush1.bf16.msra.mxu0 0
    %2098 = vmatprep.subr.bf16.mxu0 0
    %2099 = vmatpush1.bf16.msra.mxu0 0
    %2100 = vmatprep.subr.bf16.mxu0 0
    %2101 = vmatpush1.bf16.msra.mxu0 %v2084
    %2102 = vmatprep.subr.bf16.mxu0 0
    %2103 = vmatpush2.bf16.msra.mxu0 0
    %2104 = vmatprep.subr.bf16.mxu0 0
    %2105 = vmatpush2.bf16.msra.mxu0 0
    %2106 = vmatprep.subr.bf16.mxu0 0
    %2107 = vmatpush2.bf16.msra.mxu0 0
    %2108 = vmatprep.subr.bf16.mxu0 0
    %2109 = vmatpush2.bf16.msra.mxu0 0
    %2110 = vmatprep.subr.bf16.mxu0 0
    %2111 = vmatpush2.bf16.msra.mxu0 0
    %2112 = vmatprep.subr.bf16.mxu0 0
    %2113 = vmatpush2.bf16.msra.mxu0 0
    %2114 = vmatprep.subr.bf16.mxu0 0
    %2115 = vmatpush2.bf16.msra.mxu0 0
    %2116 = vmatprep.subr.bf16.mxu0 0
    %2117 = vmatpush2.bf16.msra.mxu0 0
    %2118 = vmatprep.mubr.bf16.mxu0 0
    %2119 = vmatmul.mubr.bf16.gmra.mxu0 %v2081
    %v2120 = vpop.f32.mrf.mxu0
    %v2121 = vadd.f32 0.0, %v2120
    %v2122 = vpop.f32.mrf.mxu0
    %v2123 = vpop.f32.mrf.mxu0
    %v2124 = vpop.f32.mrf.mxu0
    %2125 = vdwg.mxu0
    %2126 = vrot.lane.b32.xlu0 %v1489, 64
    %v2127 = vpop.permute.xlu0 %2126
    %v2129 = vsel %vm244, %v1977, 0
    %v2132 = vsel %vm735, %v2127, 0
    %2134 = vmatprep.subr.bf16.mxu0 0
    %2135 = vmatpush1.bf16.msra.mxu0 0
    %2136 = vmatprep.subr.bf16.mxu0 0
    %2137 = vmatpush1.bf16.msra.mxu0 0
    %2138 = vmatprep.subr.bf16.mxu0 0
    %2139 = vmatpush1.bf16.msra.mxu0 0
    %2140 = vmatprep.subr.bf16.mxu0 0
    %2141 = vmatpush1.bf16.msra.mxu0 0
    %2142 = vmatprep.subr.bf16.mxu0 0
    %2143 = vmatpush1.bf16.msra.mxu0 0
    %2144 = vmatprep.subr.bf16.mxu0 0
    %2145 = vmatpush1.bf16.msra.mxu0 0
    %2146 = vmatprep.subr.bf16.mxu0 0
    %2147 = vmatpush1.bf16.msra.mxu0 0
    %2148 = vmatprep.subr.bf16.mxu0 0
    %2149 = vmatpush1.bf16.msra.mxu0 %v2132
    %2150 = vmatprep.subr.bf16.mxu0 0
    %2151 = vmatpush2.bf16.msra.mxu0 0
    %2152 = vmatprep.subr.bf16.mxu0 0
    %2153 = vmatpush2.bf16.msra.mxu0 0
    %2154 = vmatprep.subr.bf16.mxu0 0
    %2155 = vmatpush2.bf16.msra.mxu0 0
    %2156 = vmatprep.subr.bf16.mxu0 0
    %2157 = vmatpush2.bf16.msra.mxu0 0
    %2158 = vmatprep.subr.bf16.mxu0 0
    %2159 = vmatpush2.bf16.msra.mxu0 0
    %2160 = vmatprep.subr.bf16.mxu0 0
    %2161 = vmatpush2.bf16.msra.mxu0 0
    %2162 = vmatprep.subr.bf16.mxu0 0
    %2163 = vmatpush2.bf16.msra.mxu0 0
    %2164 = vmatprep.subr.bf16.mxu0 0
    %2165 = vmatpush2.bf16.msra.mxu0 0
    %2166 = vmatprep.mubr.bf16.mxu0 0
    %2167 = vmatmul.mubr.bf16.gmra.mxu0 %v2129
    %v2168 = vpop.f32.mrf.mxu0
    %v2169 = vadd.f32 0.0, %v2168
    %v2170 = vpop.f32.mrf.mxu0
    %v2171 = vpop.f32.mrf.mxu0
    %v2172 = vpop.f32.mrf.mxu0
    %2173 = vdwg.mxu0
    %2174 = vrot.lane.b32.xlu0 %v1490, 64
    %v2175 = vpop.permute.xlu0 %2174
    %v2177 = vsel %vm244, %v1978, 0
    %v2180 = vsel %vm735, %v2175, 0
    %2182 = vmatprep.subr.bf16.mxu0 0
    %2183 = vmatpush1.bf16.msra.mxu0 0
    %2184 = vmatprep.subr.bf16.mxu0 0
    %2185 = vmatpush1.bf16.msra.mxu0 0
    %2186 = vmatprep.subr.bf16.mxu0 0
    %2187 = vmatpush1.bf16.msra.mxu0 0
    %2188 = vmatprep.subr.bf16.mxu0 0
    %2189 = vmatpush1.bf16.msra.mxu0 0
    %2190 = vmatprep.subr.bf16.mxu0 0
    %2191 = vmatpush1.bf16.msra.mxu0 0
    %2192 = vmatprep.subr.bf16.mxu0 0
    %2193 = vmatpush1.bf16.msra.mxu0 0
    %2194 = vmatprep.subr.bf16.mxu0 0
    %2195 = vmatpush1.bf16.msra.mxu0 0
    %2196 = vmatprep.subr.bf16.mxu0 0
    %2197 = vmatpush1.bf16.msra.mxu0 %v2180
    %2198 = vmatprep.subr.bf16.mxu0 0
    %2199 = vmatpush2.bf16.msra.mxu0 0
    %2200 = vmatprep.subr.bf16.mxu0 0
    %2201 = vmatpush2.bf16.msra.mxu0 0
    %2202 = vmatprep.subr.bf16.mxu0 0
    %2203 = vmatpush2.bf16.msra.mxu0 0
    %2204 = vmatprep.subr.bf16.mxu0 0
    %2205 = vmatpush2.bf16.msra.mxu0 0
    %2206 = vmatprep.subr.bf16.mxu0 0
    %2207 = vmatpush2.bf16.msra.mxu0 0
    %2208 = vmatprep.subr.bf16.mxu0 0
    %2209 = vmatpush2.bf16.msra.mxu0 0
    %2210 = vmatprep.subr.bf16.mxu0 0
    %2211 = vmatpush2.bf16.msra.mxu0 0
    %2212 = vmatprep.subr.bf16.mxu0 0
    %2213 = vmatpush2.bf16.msra.mxu0 0
    %2214 = vmatprep.mubr.bf16.mxu0 0
    %2215 = vmatmul.mubr.bf16.gmra.mxu0 %v2177
    %v2216 = vpop.f32.mrf.mxu0
    %v2217 = vadd.f32 0.0, %v2216
    %v2218 = vpop.f32.mrf.mxu0
    %v2219 = vpop.f32.mrf.mxu0
    %v2220 = vpop.f32.mrf.mxu0
    %2221 = vdwg.mxu0
    %2222 = vrot.lane.b32.xlu0 %v1491, 64
    %v2223 = vpop.permute.xlu0 %2222
    %v2225 = vsel %vm244, %v1979, 0
    %v2228 = vsel %vm735, %v2223, 0
    %2230 = vmatprep.subr.bf16.mxu0 0
    %2231 = vmatpush1.bf16.msra.mxu0 0
    %2232 = vmatprep.subr.bf16.mxu0 0
    %2233 = vmatpush1.bf16.msra.mxu0 0
    %2234 = vmatprep.subr.bf16.mxu0 0
    %2235 = vmatpush1.bf16.msra.mxu0 0
    %2236 = vmatprep.subr.bf16.mxu0 0
    %2237 = vmatpush1.bf16.msra.mxu0 0
    %2238 = vmatprep.subr.bf16.mxu0 0
    %2239 = vmatpush1.bf16.msra.mxu0 0
    %2240 = vmatprep.subr.bf16.mxu0 0
    %2241 = vmatpush1.bf16.msra.mxu0 0
    %2242 = vmatprep.subr.bf16.mxu0 0
    %2243 = vmatpush1.bf16.msra.mxu0 0
    %2244 = vmatprep.subr.bf16.mxu0 0
    %2245 = vmatpush1.bf16.msra.mxu0 %v2228
    %2246 = vmatprep.subr.bf16.mxu0 0
    %2247 = vmatpush2.bf16.msra.mxu0 0
    %2248 = vmatprep.subr.bf16.mxu0 0
    %2249 = vmatpush2.bf16.msra.mxu0 0
    %2250 = vmatprep.subr.bf16.mxu0 0
    %2251 = vmatpush2.bf16.msra.mxu0 0
    %2252 = vmatprep.subr.bf16.mxu0 0
    %2253 = vmatpush2.bf16.msra.mxu0 0
    %2254 = vmatprep.subr.bf16.mxu0 0
    %2255 = vmatpush2.bf16.msra.mxu0 0
    %2256 = vmatprep.subr.bf16.mxu0 0
    %2257 = vmatpush2.bf16.msra.mxu0 0
    %2258 = vmatprep.subr.bf16.mxu0 0
    %2259 = vmatpush2.bf16.msra.mxu0 0
    %2260 = vmatprep.subr.bf16.mxu0 0
    %2261 = vmatpush2.bf16.msra.mxu0 0
    %2262 = vmatprep.mubr.bf16.mxu0 0
    %2263 = vmatmul.mubr.bf16.gmra.mxu0 %v2225
    %v2264 = vpop.f32.mrf.mxu0
    %v2265 = vadd.f32 0.0, %v2264
    %v2266 = vpop.f32.mrf.mxu0
    %v2267 = vpop.f32.mrf.mxu0
    %v2268 = vpop.f32.mrf.mxu0
    %2269 = vdwg.mxu0
    %2270 = vrot.lane.b32.xlu0 %v1492, 64
    %v2271 = vpop.permute.xlu0 %2270
    %v2273 = vsel %vm244, %v1980, 0
    %v2276 = vsel %vm735, %v2271, 0
    %2278 = vmatprep.subr.bf16.mxu0 0
    %2279 = vmatpush1.bf16.msra.mxu0 0
    %2280 = vmatprep.subr.bf16.mxu0 0
    %2281 = vmatpush1.bf16.msra.mxu0 0
    %2282 = vmatprep.subr.bf16.mxu0 0
    %2283 = vmatpush1.bf16.msra.mxu0 0
    %2284 = vmatprep.subr.bf16.mxu0 0
    %2285 = vmatpush1.bf16.msra.mxu0 0
    %2286 = vmatprep.subr.bf16.mxu0 0
    %2287 = vmatpush1.bf16.msra.mxu0 0
    %2288 = vmatprep.subr.bf16.mxu0 0
    %2289 = vmatpush1.bf16.msra.mxu0 0
    %2290 = vmatprep.subr.bf16.mxu0 0
    %2291 = vmatpush1.bf16.msra.mxu0 0
    %2292 = vmatprep.subr.bf16.mxu0 0
    %2293 = vmatpush1.bf16.msra.mxu0 %v2276
    %2294 = vmatprep.subr.bf16.mxu0 0
    %2295 = vmatpush2.bf16.msra.mxu0 0
    %2296 = vmatprep.subr.bf16.mxu0 0
    %2297 = vmatpush2.bf16.msra.mxu0 0
    %2298 = vmatprep.subr.bf16.mxu0 0
    %2299 = vmatpush2.bf16.msra.mxu0 0
    %2300 = vmatprep.subr.bf16.mxu0 0
    %2301 = vmatpush2.bf16.msra.mxu0 0
    %2302 = vmatprep.subr.bf16.mxu0 0
    %2303 = vmatpush2.bf16.msra.mxu0 0
    %2304 = vmatprep.subr.bf16.mxu0 0
    %2305 = vmatpush2.bf16.msra.mxu0 0
    %2306 = vmatprep.subr.bf16.mxu0 0
    %2307 = vmatpush2.bf16.msra.mxu0 0
    %2308 = vmatprep.subr.bf16.mxu0 0
    %2309 = vmatpush2.bf16.msra.mxu0 0
    %2310 = vmatprep.mubr.bf16.mxu0 0
    %2311 = vmatmul.mubr.bf16.gmra.mxu0 %v2273
    %v2312 = vpop.f32.mrf.mxu0
    %v2313 = vadd.f32 0.0, %v2312
    %v2314 = vpop.f32.mrf.mxu0
    %v2315 = vpop.f32.mrf.mxu0
    %v2316 = vpop.f32.mrf.mxu0
    %2317 = vdwg.mxu0
    %2318 = vrot.lane.b32.xlu0 %v1493, 64
    %v2319 = vpop.permute.xlu0 %2318
    %v2321 = vsel %vm244, %v1981, 0
    %v2324 = vsel %vm735, %v2319, 0
    %2326 = vmatprep.subr.bf16.mxu0 0
    %2327 = vmatpush1.bf16.msra.mxu0 0
    %2328 = vmatprep.subr.bf16.mxu0 0
    %2329 = vmatpush1.bf16.msra.mxu0 0
    %2330 = vmatprep.subr.bf16.mxu0 0
    %2331 = vmatpush1.bf16.msra.mxu0 0
    %2332 = vmatprep.subr.bf16.mxu0 0
    %2333 = vmatpush1.bf16.msra.mxu0 0
    %2334 = vmatprep.subr.bf16.mxu0 0
    %2335 = vmatpush1.bf16.msra.mxu0 0
    %2336 = vmatprep.subr.bf16.mxu0 0
    %2337 = vmatpush1.bf16.msra.mxu0 0
    %2338 = vmatprep.subr.bf16.mxu0 0
    %2339 = vmatpush1.bf16.msra.mxu0 0
    %2340 = vmatprep.subr.bf16.mxu0 0
    %2341 = vmatpush1.bf16.msra.mxu0 %v2324
    %2342 = vmatprep.subr.bf16.mxu0 0
    %2343 = vmatpush2.bf16.msra.mxu0 0
    %2344 = vmatprep.subr.bf16.mxu0 0
    %2345 = vmatpush2.bf16.msra.mxu0 0
    %2346 = vmatprep.subr.bf16.mxu0 0
    %2347 = vmatpush2.bf16.msra.mxu0 0
    %2348 = vmatprep.subr.bf16.mxu0 0
    %2349 = vmatpush2.bf16.msra.mxu0 0
    %2350 = vmatprep.subr.bf16.mxu0 0
    %2351 = vmatpush2.bf16.msra.mxu0 0
    %2352 = vmatprep.subr.bf16.mxu0 0
    %2353 = vmatpush2.bf16.msra.mxu0 0
    %2354 = vmatprep.subr.bf16.mxu0 0
    %2355 = vmatpush2.bf16.msra.mxu0 0
    %2356 = vmatprep.subr.bf16.mxu0 0
    %2357 = vmatpush2.bf16.msra.mxu0 0
    %2358 = vmatprep.mubr.bf16.mxu0 0
    %2359 = vmatmul.mubr.bf16.gmra.mxu0 %v2321
    %v2360 = vpop.f32.mrf.mxu0
    %v2361 = vadd.f32 0.0, %v2360
    %v2362 = vpop.f32.mrf.mxu0
    %v2363 = vpop.f32.mrf.mxu0
    %v2364 = vpop.f32.mrf.mxu0
    %2365 = vdwg.mxu0
    %2368 = vrot.lane.b32.xlu0 %v2121, 8
    %v2369 = vpop.permute.xlu0 %2368
    %2370 = vrot.lane.b32.xlu0 %v2169, 8
    %v2371 = vpop.permute.xlu0 %2370
    %2376 = vrot.lane.b32.xlu0 %v2217, 16
    %v2377 = vpop.permute.xlu0 %2376
    %2378 = vrot.lane.b32.xlu0 %v2265, 16
    %v2379 = vpop.permute.xlu0 %2378
    %2384 = vrot.lane.b32.xlu0 %v2313, 24
    %v2385 = vpop.permute.xlu0 %2384
    %2386 = vrot.lane.b32.xlu0 %v2361, 24
    %v2387 = vpop.permute.xlu0 %2386
    %v2390 = vsel %vm244, %v2025, %v2369
    %v2391 = vsel %vm244, %v2073, %v2371
    %v2392 = vsel %vm1141, %v2390, %v2377
    %v2393 = vsel %vm1141, %v2391, %v2379
    %v2394 = vsel %vm1144, %v2392, %v2385
    %v2395 = vsel %vm1144, %v2393, %v2387
    %v2396 = vpack.c.bf16 %v2395, %v2394
    %s2397 = scalar_lea.vmem %s5, 16
    %v2398 = vld [vmem:[%s2397] sm:$0xf]
    %v2399 = vld [vmem:[%s2397 + $0x4] sm:$0xf]
    %v2400 = vld [vmem:[%s2397 + $0x8] sm:$0xf]
    %v2401 = vld [vmem:[%s2397 + $0xc] sm:$0xf]
    %v2406 = vunpack.c.l.b16 %v2398
    %v2407 = vunpack.c.l.b16 %v2399
    %v2408 = vunpack.c.l.b16 %v2400
    %v2409 = vunpack.c.l.b16 %v2401
    %v2410 = vpack.c.b16 %v2407, %v2406
    %v2411 = vpack.c.b16 %v2409, %v2408
    %v2415 = vsel %vm128, %v2396, 0
    %2417 = vmatprep.subr.bf16.mxu0 0
    %2418 = vmatpush1.bf16.msra.mxu0 0
    %2419 = vmatprep.subr.bf16.mxu0 0
    %2420 = vmatpush1.bf16.msra.mxu0 0
    %2421 = vmatprep.subr.bf16.mxu0 0
    %2422 = vmatpush1.bf16.msra.mxu0 0
    %2423 = vmatprep.subr.bf16.mxu0 0
    %2424 = vmatpush1.bf16.msra.mxu0 0
    %2425 = vmatprep.subr.bf16.mxu0 0
    %2426 = vmatpush1.bf16.msra.mxu0 0
    %2427 = vmatprep.subr.bf16.mxu0 0
    %2428 = vmatpush1.bf16.msra.mxu0 0
    %2429 = vmatprep.subr.bf16.mxu0 0
    %2430 = vmatpush1.bf16.msra.mxu0 %v2411
    %2431 = vmatprep.subr.bf16.mxu0 0
    %2432 = vmatpush1.bf16.msra.mxu0 %v2410
    %2433 = vmatprep.subr.bf16.mxu0 0
    %2434 = vmatpush2.bf16.msra.mxu0 0
    %2435 = vmatprep.subr.bf16.mxu0 0
    %2436 = vmatpush2.bf16.msra.mxu0 0
    %2437 = vmatprep.subr.bf16.mxu0 0
    %2438 = vmatpush2.bf16.msra.mxu0 0
    %2439 = vmatprep.subr.bf16.mxu0 0
    %2440 = vmatpush2.bf16.msra.mxu0 0
    %2441 = vmatprep.subr.bf16.mxu0 0
    %2442 = vmatpush2.bf16.msra.mxu0 0
    %2443 = vmatprep.subr.bf16.mxu0 0
    %2444 = vmatpush2.bf16.msra.mxu0 0
    %2445 = vmatprep.subr.bf16.mxu0 0
    %2446 = vmatpush2.bf16.msra.mxu0 0
    %2447 = vmatprep.subr.bf16.mxu0 0
    %2448 = vmatpush2.bf16.msra.mxu0 0
    %2449 = vmatprep.mubr.bf16.mxu0 0
    %2450 = vmatmul.mubr.bf16.gmra.mxu0 %v2415
    %v2451 = vpop.f32.mrf.mxu0
    %v2452 = vadd.f32 0.0, %v2451
    %v2453 = vpop.f32.mrf.mxu0
    %v2454 = vpop.f32.mrf.mxu0
    %v2455 = vadd.f32 0.0, %v2454
    %v2456 = vpop.f32.mrf.mxu0
    %2457 = vdwg.mxu0
    %v2458 = vadd.f32 %v1376, %v2452
    %v2459 = vadd.f32 %v1377, %v2455
    %s2460 = scalar_lea.vmem %s6, 1
    %v2461 = vld [vmem:[%s2460] sm:$0x1]
    %v2462 = vmul.f32 %v2458, %v2458
    %v2463 = vmul.f32 %v2459, %v2459
    %v2464 = vsel %vm128, %v2462, 0.0
    %2465 = vadd.xlane.f32.xlu0 %v2464
    %v2466 = vpop.xlane.xlu0 %2465
    %v2467 = vsel %vm128, %v2463, 0.0
    %2468 = vadd.xlane.f32.xlu0 %v2467
    %v2469 = vpop.xlane.xlu0 %2468
    %v2470 = vmul.f32 %v2466, %v135
    %v2471 = vmul.f32 %v2469, %v135
    %v2472 = vadd.f32 %v2470, 1e-06
    %v2473 = vadd.f32 %v2471, 1e-06
    %v2474 = vrsqrt.pop %v2472
    %v2475 = vrsqrt.pop %v2473
    %v2476 = vmul.f32 %v2458, %v2474
    %v2477 = vmul.f32 %v2459, %v2475
    %v2479 = vlaneseq
    %v2480 = vshrl.u32 %v2479, 7
    %v2481 = vsub.s32 0, %v2480
    %v2482 = vrot.slane %v2461, %v2481
    %v2484 = vmul.f32 %v2476, %v2482
    %v2485 = vmul.f32 %v2477, %v2482
    %v2486 = vpack.c.bf16 %v2485, %v2484
    %s2487 = scalar_lea.vmem [#allocation5], 16
    %v2488 = vld [vmem:[%s2487] sm:$0xf]
    %v2489 = vld [vmem:[%s2487 + $0x4] sm:$0xf]
    %v2490 = vld [vmem:[%s2487 + $0x8] sm:$0xf]
    %v2491 = vld [vmem:[%s2487 + $0xc] sm:$0xf]
    %v2496 = vunpack.c.l.b16 %v2488
    %v2497 = vunpack.c.l.b16 %v2489
    %v2498 = vunpack.c.l.b16 %v2490
    %v2499 = vunpack.c.l.b16 %v2491
    %v2500 = vpack.c.b16 %v2497, %v2496
    %v2501 = vpack.c.b16 %v2499, %v2498
    %v2505 = vsel %vm128, %v2486, 0
    %2507 = vmatprep.subr.bf16.mxu0 0
    %2508 = vmatpush1.bf16.msra.mxu0 0
    %2509 = vmatprep.subr.bf16.mxu0 0
    %2510 = vmatpush1.bf16.msra.mxu0 0
    %2511 = vmatprep.subr.bf16.mxu0 0
    %2512 = vmatpush1.bf16.msra.mxu0 0
    %2513 = vmatprep.subr.bf16.mxu0 0
    %2514 = vmatpush1.bf16.msra.mxu0 0
    %2515 = vmatprep.subr.bf16.mxu0 0
    %2516 = vmatpush1.bf16.msra.mxu0 0
    %2517 = vmatprep.subr.bf16.mxu0 0
    %2518 = vmatpush1.bf16.msra.mxu0 0
    %2519 = vmatprep.subr.bf16.mxu0 0
    %2520 = vmatpush1.bf16.msra.mxu0 %v2501
    %2521 = vmatprep.subr.bf16.mxu0 0
    %2522 = vmatpush1.bf16.msra.mxu0 %v2500
    %2523 = vmatprep.subr.bf16.mxu0 0
    %2524 = vmatpush2.bf16.msra.mxu0 0
    %2525 = vmatprep.subr.bf16.mxu0 0
    %2526 = vmatpush2.bf16.msra.mxu0 0
    %2527 = vmatprep.subr.bf16.mxu0 0
    %2528 = vmatpush2.bf16.msra.mxu0 0
    %2529 = vmatprep.subr.bf16.mxu0 0
    %2530 = vmatpush2.bf16.msra.mxu0 0
    %2531 = vmatprep.subr.bf16.mxu0 0
    %2532 = vmatpush2.bf16.msra.mxu0 0
    %2533 = vmatprep.subr.bf16.mxu0 0
    %2534 = vmatpush2.bf16.msra.mxu0 0
    %2535 = vmatprep.subr.bf16.mxu0 0
    %2536 = vmatpush2.bf16.msra.mxu0 0
    %2537 = vmatprep.subr.bf16.mxu0 0
    %2538 = vmatpush2.bf16.msra.mxu0 0
    %2539 = vmatprep.mubr.bf16.mxu0 0
    %2540 = vmatmul.mubr.bf16.gmra.mxu0 %v2505
    %v2541 = vpop.f32.mrf.mxu0
    %v2542 = vadd.f32 0.0, %v2541
    %v2543 = vpop.f32.mrf.mxu0
    %v2544 = vpop.f32.mrf.mxu0
    %v2545 = vadd.f32 0.0, %v2544
    %v2546 = vpop.f32.mrf.mxu0
    %2547 = vdwg.mxu0
    %v2548 = vmax.f32 %v2542, 0.0
    %v2549 = vmax.f32 %v2545, 0.0
    %v2550 = vpack.c.bf16 %v2549, %v2548
    %s2551 = scalar_lea.vmem %s8, 32
    %v2552 = vld [vmem:[%s2551] sm:$0xf]
    %v2553 = vld [vmem:[%s2551 + $0x4] sm:$0xf]
    %v2554 = vld [vmem:[%s2551 + $0x8] sm:$0xf]
    %v2555 = vld [vmem:[%s2551 + $0xc] sm:$0xf]
    %v2556 = vld [vmem:[%s2551 + $0x10] sm:$0xf]
    %v2557 = vld [vmem:[%s2551 + $0x14] sm:$0xf]
    %v2558 = vld [vmem:[%s2551 + $0x18] sm:$0xf]
    %v2559 = vld [vmem:[%s2551 + $0x1c] sm:$0xf]
    %v2568 = vunpack.c.l.b16 %v2552
    %v2569 = vunpack.c.l.b16 %v2553
    %v2570 = vunpack.c.l.b16 %v2554
    %v2571 = vunpack.c.l.b16 %v2555
    %v2572 = vunpack.c.l.b16 %v2556
    %v2573 = vunpack.c.l.b16 %v2557
    %v2574 = vunpack.c.l.b16 %v2558
    %v2575 = vunpack.c.l.b16 %v2559
    %v2576 = vpack.c.b16 %v2569, %v2568
    %v2577 = vpack.c.b16 %v2571, %v2570
    %v2578 = vpack.c.b16 %v2573, %v2572
    %v2579 = vpack.c.b16 %v2575, %v2574
    %v2585 = vsel %vm1331, %v2550, 0
    %2587 = vmatprep.subr.bf16.mxu0 0
    %2588 = vmatpush1.bf16.msra.mxu0 0
    %2589 = vmatprep.subr.bf16.mxu0 0
    %2590 = vmatpush1.bf16.msra.mxu0 0
    %2591 = vmatprep.subr.bf16.mxu0 0
    %2592 = vmatpush1.bf16.msra.mxu0 0
    %2593 = vmatprep.subr.bf16.mxu0 0
    %2594 = vmatpush1.bf16.msra.mxu0 0
    %2595 = vmatprep.subr.bf16.mxu0 0
    %2596 = vmatpush1.bf16.msra.mxu0 %v2579
    %2597 = vmatprep.subr.bf16.mxu0 0
    %2598 = vmatpush1.bf16.msra.mxu0 %v2578
    %2599 = vmatprep.subr.bf16.mxu0 0
    %2600 = vmatpush1.bf16.msra.mxu0 %v2577
    %2601 = vmatprep.subr.bf16.mxu0 0
    %2602 = vmatpush1.bf16.msra.mxu0 %v2576
    %2603 = vmatprep.subr.bf16.mxu0 0
    %2604 = vmatpush2.bf16.msra.mxu0 0
    %2605 = vmatprep.subr.bf16.mxu0 0
    %2606 = vmatpush2.bf16.msra.mxu0 0
    %2607 = vmatprep.subr.bf16.mxu0 0
    %2608 = vmatpush2.bf16.msra.mxu0 0
    %2609 = vmatprep.subr.bf16.mxu0 0
    %2610 = vmatpush2.bf16.msra.mxu0 0
    %2611 = vmatprep.subr.bf16.mxu0 0
    %2612 = vmatpush2.bf16.msra.mxu0 0
    %2613 = vmatprep.subr.bf16.mxu0 0
    %2614 = vmatpush2.bf16.msra.mxu0 0
    %2615 = vmatprep.subr.bf16.mxu0 0
    %2616 = vmatpush2.bf16.msra.mxu0 0
    %2617 = vmatprep.subr.bf16.mxu0 0
    %2618 = vmatpush2.bf16.msra.mxu0 0
    %2619 = vmatprep.mubr.bf16.mxu0 0
    %2620 = vmatmul.mubr.bf16.gmra.mxu0 %v2585
    %v2621 = vpop.f32.mrf.mxu0
    %v2622 = vadd.f32 0.0, %v2621
    %v2623 = vpop.f32.mrf.mxu0
    %v2624 = vpop.f32.mrf.mxu0
    %v2625 = vadd.f32 0.0, %v2624
    %v2626 = vpop.f32.mrf.mxu0
    %2627 = vdwg.mxu0
    %v2628 = vadd.f32 %v2458, %v2622
    %v2629 = vadd.f32 %v2459, %v2625
    %v2630 = vld [vmem:[%s9] sm:$0x1]
    %v2631 = vmul.f32 %v2628, %v2628
    %v2632 = vmul.f32 %v2629, %v2629
    %v2633 = vsel %vm128, %v2631, 0.0
    %2634 = vadd.xlane.f32.xlu0 %v2633
    %v2635 = vpop.xlane.xlu0 %2634
    %v2636 = vsel %vm128, %v2632, 0.0
    %2637 = vadd.xlane.f32.xlu0 %v2636
    %v2638 = vpop.xlane.xlu0 %2637
    %v2639 = vmul.f32 %v2635, %v135
    %v2640 = vmul.f32 %v2638, %v135
    %v2641 = vadd.f32 %v2639, 1e-06
    %v2642 = vadd.f32 %v2640, 1e-06
    %v2643 = vrsqrt.pop %v2641
    %v2644 = vrsqrt.pop %v2642
    %v2645 = vmul.f32 %v2628, %v2643
    %v2646 = vmul.f32 %v2629, %v2644
    %v2648 = vlaneseq
    %v2649 = vshrl.u32 %v2648, 7
    %v2650 = vsub.s32 0, %v2649
    %v2651 = vrot.slane %v2630, %v2650
    %v2653 = vmul.f32 %v2645, %v2651
    %v2654 = vmul.f32 %v2646, %v2651
    %v2655 = vld [vmem:[%s10] sm:$0x1]
    %v2657 = vlaneseq
    %v2658 = vshrl.u32 %v2657, 7
    %v2659 = vsub.s32 0, %v2658
    %v2660 = vrot.slane %v2655, %v2659
    %v2662 = vmul.f32 %v2653, %v2660
    %v2663 = vmul.f32 %v2654, %v2660
    %v2666 = vrot.slane %v2663, 7
    %vm2667 = vcmask 1041409
    %v2668 = vsel %vm2667, %v2666, %v2662
    %vm2670 = vcmask 254976
    %v2671 = vsel %vm2670, %v2668, 0.0
    %2672 = vadd.xlane.f32.xlu0 %v2671
    %v2673 = vpop.xlane.xlu0 %2672
    %v2674 = vld [vmem:[#allocation2] sm:$0x1]
    %v2676 = vlaneseq
    %v2677 = vshrl.u32 %v2676, 7
    %v2678 = vsub.s32 0, %v2677
    %v2679 = vrot.slane %v2674, %v2678
    %v2681 = vadd.f32 %v2673, %v2679
    %vm2682 = vcmask 1024
    %2683 = vst.msk [vmem:[%s13] sm:$0x3] %vm2682, %v2681
    %v2684 = vld [vmem:[%s12] sm:$0x3]
    %v2685 = vmax.f32 %v2681, 0.0
    %v2686 = vmul.f32 %v2681, %v2684
    %v2687 = vsub.f32 %v2685, %v2686
    %v2688 = vand.u32 2147483647, %v2681
    %v2689 = vsub.f32 0.0, %v2688
    %v2690 = vmul.f32 %v2689, 1.442695
    %v2691 = vpow.pop %v2690
    %v2692 = vadd.f32 %v2691, 1.0
    %v2693 = vlog2.pop %v2692
    %v2694 = vmul.f32 %v2693, 0.6931472
    %v2695 = vmul.f32 -0.5, %v2691
    %v2696 = vadd.f32 %v2695, 1.0
    %v2697 = vmul.f32 %v2696, %v2691
    %v2698 = vand.u32 2147483647, %v2691
    %vm2699 = vcmp.lt.f32.partialorder %v2698, 0.0004427343
    %v2700 = vsel %vm2699, %v2697, %v2694
    %v2701 = vadd.f32 %v2687, %v2700
    %v2702 = vmul.f32 %v2701, 0.5
    %2703 = vst.msk [vmem:[%s14] sm:$0x3] %vm2682, %v2702
    // Predicated region
    $region62: #{tpu_custom_call.1} parent=1 // pred_check
      _
    $region63: #{tpu_custom_call.1} parent=1 // pred_check_branch
      %2705 = sbr.rel (0) target = $region65
    $region64: #{tpu_custom_call.1} parent=1 // pred_region
      _
    $region65: #{tpu_custom_call.1} parent=1 // pred_fallthru
      _
    // Predicated region
    $region66: #{tpu_custom_call.1} parent=1 // pred_check
      _
    $region67: #{tpu_custom_call.1} parent=1 // pred_check_branch
      %2707 = sbr.rel (0) target = $region69
    $region68: #{tpu_custom_call.1} parent=1 // pred_region
      _
    $region69: #{tpu_custom_call.1} parent=1 // pred_fallthru
      _
    // Predicated region
    $region70: #{tpu_custom_call.1} parent=1 // pred_check
      _
    $region71: #{tpu_custom_call.1} parent=1 // pred_check_branch
      %2709 = sbr.rel (0) target = $region73
    $region72: #{tpu_custom_call.1} parent=1 // pred_region
      _
    $region73: #{tpu_custom_call.1} parent=1 // pred_fallthru
      _
    // Predicated region
    $region74: #{tpu_custom_call.1} parent=1 // pred_check
      _
    $region75: #{tpu_custom_call.1} parent=1 // pred_check_branch
      %2711 = sbr.rel (0) target = $region77
    $region76: #{tpu_custom_call.1} parent=1 // pred_region
      _
    $region77: #{tpu_custom_call.1} parent=1 // pred_fallthru
      _
    %2712 = vsyncpa [#allocation4], 1
    %2713 = vsyncpa [#allocation6], 1

</llo_original>
